<compile_context>
chip_gen: v6e
topology: v6e:2x2x1
jax: 0.10.0
libtpu: 0.0.40
codegen_flags: <defaults>
</compile_context>

<pallas_src>
import functools

import jax
import jax.numpy as jnp
from jax import lax
from jax.experimental import pallas as pl
from jax.experimental.pallas import tpu as pltpu


def _im2col_3x3_flat(xh_f32, not_first, not_last, H, W):
    """Build the 3x3 im2col slab from a flattened, H-halo'd image.

    xh_f32    : ((H+2)*W, C) f32 — NHWC image flattened over (H, W), with one
                zero row of W entries prepended and appended (the H halo).
    not_first : (H*W, C) bool — mask of positions with w != 0     (dw = -1 taps)
    not_last  : (H*W, C) bool — mask of positions with w != W - 1 (dw = +1 taps)
    returns   : (H*W, 9*C) bf16 slab; tap order (kh, kw) major, channel minor,
                matching the (9*C, Cout) weight slab layout.
    """
    HW = H * W
    pieces = []
    for dh in (-1, 0, 1):
        start = (1 + dh) * W                       # static, 8-aligned when W % 8 == 0
        base = xh_f32[start:start + HW, :]         # x[h+dh, w]   (aligned slice)
        # x[h+dh, w-1]: roll down by 1 along the flattened sublane axis, then
        # zero the wrapped w==0 column (matches conv zero padding).
        left = jnp.where(not_first, pltpu.roll(base, shift=1, axis=0), 0.0)
        # x[h+dh, w+1]: roll up by 1 (positive shift HW-1), mask w==W-1.
        right = jnp.where(not_last, pltpu.roll(base, shift=HW - 1, axis=0), 0.0)
        pieces += [left.astype(jnp.bfloat16),
                   base.astype(jnp.bfloat16),
                   right.astype(jnp.bfloat16)]
    return jnp.concatenate(pieces, axis=1)         # lane-aligned 128-wide pieces


def basic_block_kernel(xh_ref, w1_ref, w2_ref, sh_ref, out_ref, *, H, W):
    """One batch element per grid step.

    xh_ref : (1, (H+2)*W, Cp)  bf16  flattened input with 1-row H halo (zeros)
    w1_ref : (9*Cp, Cp)        bf16  conv1 weight slab (BN1 scale pre-folded)
    w2_ref : (9*Cp, Cp)        bf16  conv2 weight slab (BN2 scale pre-folded)
    sh_ref : (2, Cp)           f32   folded BN shifts [shift1; shift2]
    out_ref: (1, H*W, Cp)      f32
    """
    HW = H * W
    Cp = out_ref.shape[-1]

    # w-column masks for the +-1 taps; computed once, reused by both convs.
    wcol = lax.broadcasted_iota(jnp.int32, (HW, Cp), 0) % W
    not_first = wcol != 0
    not_last = wcol != (W - 1)

    # Input block, cast once to f32 (rolls / residual add in f32).
    xh = xh_ref[0].astype(jnp.float32)             # ((H+2)*W, Cp)

    # ---- conv1 (scale folded into w1): single im2col matmul, f32 accumulate ----
    acc1 = jnp.dot(_im2col_3x3_flat(xh, not_first, not_last, H, W), w1_ref[...],
                   preferred_element_type=jnp.float32)

    # ---- bn1 shift + relu, in f32 ----
    h1 = jnp.maximum(acc1 + sh_ref[0:1, :], 0.0)   # (HW, Cp)

    # ---- conv2: re-halo the intermediate along the untiled H axis only ----
    # (W / lane axes stay aligned; no scratch buffer and no per-step zero pass.)
    zrow = jnp.zeros((W, Cp), jnp.float32)
    mid = jnp.concatenate([zrow, h1, zrow], axis=0)                 # ((H+2)*W, Cp)
    acc2 = jnp.dot(_im2col_3x3_flat(mid, not_first, not_last, H, W), w2_ref[...],
                   preferred_element_type=jnp.float32)

    # ---- bn2 shift + residual (reuse resident input block) + relu ----
    res = xh[W:W + HW, :]                          # residual == input (no downsample)
    out_ref[0] = jnp.maximum(acc2 + sh_ref[1:2, :] + res, 0.0).astype(out_ref.dtype)


def _round_up(x, m):
    return (x + m - 1) // m * m


def _fold_bn(gamma, beta, mean, var, eps=1e-5):
    scale = gamma / jnp.sqrt(var + eps)
    shift = beta - mean * scale
    return scale, shift


def basic_block_forward(x_nchw, params, eps=1e-5):
    """BasicBlock forward (stride=1, downsample=None). Input/output are NCHW."""
    N, Cin, H, W = x_nchw.shape
    Cout, Cin_w = params["w1"].shape[:2]
    assert Cin_w == Cin
    assert Cin == Cout, "downsample=None requires inplanes == planes"

    Cp = max(128, _round_up(Cout, 128))            # lane-dense channel padding

    # Activations: NCHW -> NHWC, zero-pad channels to Cp, add 1-row H halo,
    # flatten (H, W) onto the sublane axis, cast to bf16 for HBM/VMEM savings.
    x = jnp.transpose(x_nchw, (0, 2, 3, 1))                         # (N, H, W, Cin)
    x = jnp.pad(x, ((0, 0), (1, 1), (0, 0), (0, Cp - Cin)))         # (N, H+2, W, Cp)
    xh = x.reshape(N, (H + 2) * W, Cp).astype(jnp.bfloat16)

    # Folded BN params (inference semantics).
    s1, b1 = _fold_bn(params["g1"], params["be1"], params["m1"], params["v1"], eps)
    s2, b2 = _fold_bn(params["g2"], params["be2"], params["m2"], params["v2"], eps)

    # Weights: (Cout, Cin, 3, 3) * per-cout BN scale -> single lane/sublane-
    # aligned (9*Cp, Cp) bf16 slab, rows in (kh, kw, cin) major order.
    def wslab(w, scale):
        w = w * scale[:, None, None, None].astype(w.dtype)          # fold BN scale
        w = jnp.pad(w, ((0, Cp - w.shape[0]), (0, Cp - w.shape[1]), (0, 0), (0, 0)))
        return jnp.transpose(w, (2, 3, 1, 0)).reshape(9 * Cp, Cp).astype(jnp.bfloat16)

    w1 = wslab(params["w1"], s1)
    w2 = wslab(params["w2"], s2)

    # Folded BN shifts, stacked as (2, Cp) f32: [shift1; shift2].
    sh = jnp.stack([b1, b2]).astype(jnp.float32)
    sh = jnp.pad(sh, ((0, 0), (0, Cp - Cout)))

    kernel = functools.partial(basic_block_kernel, H=H, W=W)
    out = pl.pallas_call(
        kernel,
        out_shape=jax.ShapeDtypeStruct((N, H * W, Cp), x_nchw.dtype),
        grid_spec=pltpu.PrefetchScalarGridSpec(
            num_scalar_prefetch=0,
            grid=(N,),
            in_specs=[
                pl.BlockSpec((1, (H + 2) * W, Cp), lambda n: (n, 0, 0)),
                pl.BlockSpec((9 * Cp, Cp), lambda n: (0, 0)),
                pl.BlockSpec((9 * Cp, Cp), lambda n: (0, 0)),
                pl.BlockSpec((2, Cp), lambda n: (0, 0)),
            ],
            out_specs=pl.BlockSpec((1, H * W, Cp), lambda n: (n, 0, 0)),
        ),
        compiler_params=pltpu.CompilerParams(
            dimension_semantics=("parallel",)),    # independent batch elems (v7x 2 TCs)
    )(xh, w1, w2, sh)

    out = out.reshape(N, H, W, Cp)[:, :, :, :Cout]                  # drop channel pad
    return jnp.transpose(out, (0, 3, 1, 2))                         # back to NCHW


# ------------------------- pure-JAX reference (NCHW) -------------------------
def _conv3x3_ref(x, w):
    return lax.conv_general_dilated(
        x, w, window_strides=(1, 1), padding=((1, 1), (1, 1)),
        dimension_numbers=("NCHW", "OIHW", "NCHW"),
        precision=lax.Precision.HIGHEST)


def basic_block_ref(x, params, eps=1e-5):
    def bn(h, g, be, m, v):
        g = g.reshape(1, -1, 1, 1)
        be = be.reshape(1, -1, 1, 1)
        m = m.reshape(1, -1, 1, 1)
        v = v.reshape(1, -1, 1, 1)
        return (h - m) / jnp.sqrt(v + eps) * g + be

    out = _conv3x3_ref(x, params["w1"])
    out = bn(out, params["g1"], params["be1"], params["m1"], params["v1"])
    out = jnp.maximum(out, 0.0)
    out = _conv3x3_ref(out, params["w2"])
    out = bn(out, params["g2"], params["be2"], params["m2"], params["v2"])
    out = out + x                      # downsample is None
    return jnp.maximum(out, 0.0)


# ------------------------------------ main ------------------------------------
if __name__ == "__main__":
    N, C, H, W = 2, 4, 16, 16          # inplanes == planes == 4, stride == 1
    key = jax.random.PRNGKey(0)
    ks = jax.random.split(key, 12)

    x = jax.random.normal(ks[0], (N, C, H, W), dtype=jnp.float32)

    params = {
        "w1": 0.1 * jax.random.normal(ks[1], (C, C, 3, 3), dtype=jnp.float32),
        "w2": 0.1 * jax.random.normal(ks[2], (C, C, 3, 3), dtype=jnp.float32),
        "g1": jax.random.uniform(ks[3], (C,), minval=0.5, maxval=1.5),
        "be1": 0.1 * jax.random.normal(ks[4], (C,)),
        "m1": 0.1 * jax.random.normal(ks[5], (C,)),
        "v1": jax.random.uniform(ks[6], (C,), minval=0.5, maxval=1.5),
        "g2": jax.random.uniform(ks[7], (C,), minval=0.5, maxval=1.5),
        "be2": 0.1 * jax.random.normal(ks[8], (C,)),
        "m2": 0.1 * jax.random.normal(ks[9], (C,)),
        "v2": jax.random.uniform(ks[10], (C,), minval=0.5, maxval=1.5),
    }

    fwd = jax.jit(basic_block_forward)
    out = fwd(x, params)
    out = jax.block_until_ready(out)

    ref = basic_block_ref(x, params)
    assert out.shape == ref.shape == (N, C, H, W)
    max_err = float(jnp.max(jnp.abs(out - ref)))
    # bf16 conv inputs / weights with f32 accumulation; BN shift, residual, ReLU in f32.
    assert jnp.allclose(out, ref, atol=2e-2, rtol=2e-2), (
        "mismatch: max abs err = %s" % max_err)

    print("KERNEL_OK")
</pallas_src>

<mosaic_0001>
module attributes {stable_mosaic.version = 11 : i64} {
  func.func @basic_block_kernel(%arg0: i32, %arg1: memref<1x288x128xbf16, #tpu.memory_space<vmem>>, %arg2: memref<1152x128xbf16, #tpu.memory_space<vmem>>, %arg3: memref<1152x128xbf16, #tpu.memory_space<vmem>>, %arg4: memref<2x128xf32, #tpu.memory_space<vmem>>, %arg5: memref<1x256x128xf32, #tpu.memory_space<vmem>>) attributes {dimension_semantics = [#tpu.dimension_semantics<parallel>], iteration_bounds = array<i64: 2>, scalar_prefetch = 0 : i64, scratch_operands = 0 : i64, tpu.core_type = #tpu.core_type<tc>, window_params = [{transform_indices = @transform_0, window_bounds = array<i64: 1, 288, 128>}, {pipeline_mode = #tpu.pipeline_mode<synchronous>, transform_indices = @transform_1, window_bounds = array<i64: 1152, 128>}, {pipeline_mode = #tpu.pipeline_mode<synchronous>, transform_indices = @transform_2, window_bounds = array<i64: 1152, 128>}, {pipeline_mode = #tpu.pipeline_mode<synchronous>, transform_indices = @transform_3, window_bounds = array<i64: 2, 128>}, {transform_indices = @transform_4, window_bounds = array<i64: 1, 256, 128>}]} {
    %0 = tpu.iota {dimensions = array<i32: 0>} : vector<256x128xi32>
    %c16_i32 = arith.constant 16 : i32
    %c0_i32 = arith.constant 0 : i32
    %1 = arith.cmpi eq, %c16_i32, %c0_i32 : i32
    %c1_i32 = arith.constant 1 : i32
    %2 = arith.select %1, %c1_i32, %c16_i32 : i32
    %3 = vector.broadcast %2 : i32 to vector<256x128xi32>
    %4 = arith.remsi %0, %3 : vector<256x128xi32>
    %c0_i32_0 = arith.constant 0 : i32
    %5 = vector.broadcast %c0_i32_0 : i32 to vector<256x128xi32>
    %6 = arith.cmpi ne, %4, %5 : vector<256x128xi32>
    %c0_i32_1 = arith.constant 0 : i32
    %7 = vector.broadcast %c0_i32_1 : i32 to vector<256x128xi32>
    %8 = arith.cmpi slt, %4, %7 : vector<256x128xi32>
    %c0_i32_2 = arith.constant 0 : i32
    %9 = arith.cmpi slt, %2, %c0_i32_2 : i32
    %10 = vector.broadcast %9 : i1 to vector<256x128xi1>
    %11 = vector.broadcast %10 : vector<256x128xi1> to vector<256x128xi1>
    %12 = arith.xori %8, %11 : vector<256x128xi1>
    %13 = arith.andi %12, %6 : vector<256x128xi1>
    %14 = vector.broadcast %2 : i32 to vector<256x128xi32>
    %15 = arith.addi %4, %14 : vector<256x128xi32>
    %16 = arith.select %13, %15, %4 : vector<256x128xi1>, vector<256x128xi32>
    %c0_i32_3 = arith.constant 0 : i32
    %17 = vector.broadcast %c0_i32_3 : i32 to vector<256x128xi32>
    %18 = arith.cmpi ne, %16, %17 : vector<256x128xi32>
    %c15_i32 = arith.constant 15 : i32
    %19 = vector.broadcast %c15_i32 : i32 to vector<256x128xi32>
    %20 = arith.cmpi ne, %16, %19 : vector<256x128xi32>
    %c0 = arith.constant 0 : index
    %c0_4 = arith.constant 0 : index
    %c0_5 = arith.constant 0 : index
    %21 = vector.load %arg1[%c0, %c0_4, %c0_5] : memref<1x288x128xbf16, #tpu.memory_space<vmem>>, vector<1x288x128xbf16>
    %22 = vector.shape_cast %21 : vector<1x288x128xbf16> to vector<288x128xbf16>
    %23 = arith.extf %22 : vector<288x128xbf16> to vector<288x128xf32>
    %24 = vector.extract_strided_slice %23 {offsets = [0, 0], sizes = [256, 128], strides = [1, 1]} : vector<288x128xf32> to vector<256x128xf32>
    %c1_i32_6 = arith.constant 1 : i32
    %25 = tpu.dynamic_rotate %24 by %c1_i32_6 dim 0 : vector<256x128xf32>, i32 -> vector<256x128xf32>
    %cst = arith.constant 0.000000e+00 : f32
    %26 = vector.broadcast %cst : f32 to vector<256x128xf32>
    %27 = arith.select %18, %25, %26 : vector<256x128xi1>, vector<256x128xf32>
    %c255_i32 = arith.constant 255 : i32
    %28 = tpu.dynamic_rotate %24 by %c255_i32 dim 0 : vector<256x128xf32>, i32 -> vector<256x128xf32>
    %cst_7 = arith.constant 0.000000e+00 : f32
    %29 = vector.broadcast %cst_7 : f32 to vector<256x128xf32>
    %30 = arith.select %20, %28, %29 : vector<256x128xi1>, vector<256x128xf32>
    %31 = arith.truncf %27 : vector<256x128xf32> to vector<256x128xbf16>
    %32 = arith.truncf %24 : vector<256x128xf32> to vector<256x128xbf16>
    %33 = arith.truncf %30 : vector<256x128xf32> to vector<256x128xbf16>
    %34 = vector.extract_strided_slice %23 {offsets = [16, 0], sizes = [256, 128], strides = [1, 1]} : vector<288x128xf32> to vector<256x128xf32>
    %c1_i32_8 = arith.constant 1 : i32
    %35 = tpu.dynamic_rotate %34 by %c1_i32_8 dim 0 : vector<256x128xf32>, i32 -> vector<256x128xf32>
    %cst_9 = arith.constant 0.000000e+00 : f32
    %36 = vector.broadcast %cst_9 : f32 to vector<256x128xf32>
    %37 = arith.select %18, %35, %36 : vector<256x128xi1>, vector<256x128xf32>
    %c255_i32_10 = arith.constant 255 : i32
    %38 = tpu.dynamic_rotate %34 by %c255_i32_10 dim 0 : vector<256x128xf32>, i32 -> vector<256x128xf32>
    %cst_11 = arith.constant 0.000000e+00 : f32
    %39 = vector.broadcast %cst_11 : f32 to vector<256x128xf32>
    %40 = arith.select %20, %38, %39 : vector<256x128xi1>, vector<256x128xf32>
    %41 = arith.truncf %37 : vector<256x128xf32> to vector<256x128xbf16>
    %42 = arith.truncf %34 : vector<256x128xf32> to vector<256x128xbf16>
    %43 = arith.truncf %40 : vector<256x128xf32> to vector<256x128xbf16>
    %44 = vector.extract_strided_slice %23 {offsets = [32, 0], sizes = [256, 128], strides = [1, 1]} : vector<288x128xf32> to vector<256x128xf32>
    %c1_i32_12 = arith.constant 1 : i32
    %45 = tpu.dynamic_rotate %44 by %c1_i32_12 dim 0 : vector<256x128xf32>, i32 -> vector<256x128xf32>
    %cst_13 = arith.constant 0.000000e+00 : f32
    %46 = vector.broadcast %cst_13 : f32 to vector<256x128xf32>
    %47 = arith.select %18, %45, %46 : vector<256x128xi1>, vector<256x128xf32>
    %c255_i32_14 = arith.constant 255 : i32
    %48 = tpu.dynamic_rotate %44 by %c255_i32_14 dim 0 : vector<256x128xf32>, i32 -> vector<256x128xf32>
    %cst_15 = arith.constant 0.000000e+00 : f32
    %49 = vector.broadcast %cst_15 : f32 to vector<256x128xf32>
    %50 = arith.select %20, %48, %49 : vector<256x128xi1>, vector<256x128xf32>
    %51 = arith.truncf %47 : vector<256x128xf32> to vector<256x128xbf16>
    %52 = arith.truncf %44 : vector<256x128xf32> to vector<256x128xbf16>
    %53 = arith.truncf %50 : vector<256x128xf32> to vector<256x128xbf16>
    %54 = tpu.concatenate %31, %32, %33, %41, %42, %43, %51, %52, %53 in 1 : vector<256x128xbf16>, vector<256x128xbf16>, vector<256x128xbf16>, vector<256x128xbf16>, vector<256x128xbf16>, vector<256x128xbf16>, vector<256x128xbf16>, vector<256x128xbf16>, vector<256x128xbf16> -> vector<256x1152xbf16>
    %c0_16 = arith.constant 0 : index
    %c0_17 = arith.constant 0 : index
    %55 = vector.load %arg2[%c0_16, %c0_17] : memref<1152x128xbf16, #tpu.memory_space<vmem>>, vector<1152x128xbf16>
    %cst_18 = arith.constant dense<0.000000e+00> : vector<256x128xf32>
    %56 = tpu.matmul %54, %55, %cst_18 {dimension_numbers = #tpu.dot_dimension_numbers<[1], [0], [0], [1], [0, 0, 1, 1], [], []>} : vector<256x1152xbf16>, vector<1152x128xbf16>, vector<256x128xf32> -> vector<256x128xf32>
    %c0_19 = arith.constant 0 : index
    %c0_20 = arith.constant 0 : index
    %57 = vector.load %arg4[%c0_19, %c0_20] : memref<2x128xf32, #tpu.memory_space<vmem>>, vector<1x128xf32>
    %58 = vector.broadcast %57 : vector<1x128xf32> to vector<256x128xf32>
    %59 = arith.addf %56, %58 : vector<256x128xf32>
    %cst_21 = arith.constant 0.000000e+00 : f32
    %60 = vector.broadcast %cst_21 : f32 to vector<256x128xf32>
    %61 = arith.maximumf %59, %60 : vector<256x128xf32>
    %cst_22 = arith.constant 0.000000e+00 : f32
    %62 = vector.broadcast %cst_22 : f32 to vector<16x128xf32>
    %63 = tpu.concatenate %62, %61, %62 in 0 : vector<16x128xf32>, vector<256x128xf32>, vector<16x128xf32> -> vector<288x128xf32>
    %64 = vector.extract_strided_slice %63 {offsets = [0, 0], sizes = [256, 128], strides = [1, 1]} : vector<288x128xf32> to vector<256x128xf32>
    %c1_i32_23 = arith.constant 1 : i32
    %65 = tpu.dynamic_rotate %64 by %c1_i32_23 dim 0 : vector<256x128xf32>, i32 -> vector<256x128xf32>
    %cst_24 = arith.constant 0.000000e+00 : f32
    %66 = vector.broadcast %cst_24 : f32 to vector<256x128xf32>
    %67 = arith.select %18, %65, %66 : vector<256x128xi1>, vector<256x128xf32>
    %c255_i32_25 = arith.constant 255 : i32
    %68 = tpu.dynamic_rotate %64 by %c255_i32_25 dim 0 : vector<256x128xf32>, i32 -> vector<256x128xf32>
    %cst_26 = arith.constant 0.000000e+00 : f32
    %69 = vector.broadcast %cst_26 : f32 to vector<256x128xf32>
    %70 = arith.select %20, %68, %69 : vector<256x128xi1>, vector<256x128xf32>
    %71 = arith.truncf %67 : vector<256x128xf32> to vector<256x128xbf16>
    %72 = arith.truncf %64 : vector<256x128xf32> to vector<256x128xbf16>
    %73 = arith.truncf %70 : vector<256x128xf32> to vector<256x128xbf16>
    %74 = vector.extract_strided_slice %63 {offsets = [16, 0], sizes = [256, 128], strides = [1, 1]} : vector<288x128xf32> to vector<256x128xf32>
    %c1_i32_27 = arith.constant 1 : i32
    %75 = tpu.dynamic_rotate %74 by %c1_i32_27 dim 0 : vector<256x128xf32>, i32 -> vector<256x128xf32>
    %cst_28 = arith.constant 0.000000e+00 : f32
    %76 = vector.broadcast %cst_28 : f32 to vector<256x128xf32>
    %77 = arith.select %18, %75, %76 : vector<256x128xi1>, vector<256x128xf32>
    %c255_i32_29 = arith.constant 255 : i32
    %78 = tpu.dynamic_rotate %74 by %c255_i32_29 dim 0 : vector<256x128xf32>, i32 -> vector<256x128xf32>
    %cst_30 = arith.constant 0.000000e+00 : f32
    %79 = vector.broadcast %cst_30 : f32 to vector<256x128xf32>
    %80 = arith.select %20, %78, %79 : vector<256x128xi1>, vector<256x128xf32>
    %81 = arith.truncf %77 : vector<256x128xf32> to vector<256x128xbf16>
    %82 = arith.truncf %74 : vector<256x128xf32> to vector<256x128xbf16>
    %83 = arith.truncf %80 : vector<256x128xf32> to vector<256x128xbf16>
    %84 = vector.extract_strided_slice %63 {offsets = [32, 0], sizes = [256, 128], strides = [1, 1]} : vector<288x128xf32> to vector<256x128xf32>
    %c1_i32_31 = arith.constant 1 : i32
    %85 = tpu.dynamic_rotate %84 by %c1_i32_31 dim 0 : vector<256x128xf32>, i32 -> vector<256x128xf32>
    %cst_32 = arith.constant 0.000000e+00 : f32
    %86 = vector.broadcast %cst_32 : f32 to vector<256x128xf32>
    %87 = arith.select %18, %85, %86 : vector<256x128xi1>, vector<256x128xf32>
    %c255_i32_33 = arith.constant 255 : i32
    %88 = tpu.dynamic_rotate %84 by %c255_i32_33 dim 0 : vector<256x128xf32>, i32 -> vector<256x128xf32>
    %cst_34 = arith.constant 0.000000e+00 : f32
    %89 = vector.broadcast %cst_34 : f32 to vector<256x128xf32>
    %90 = arith.select %20, %88, %89 : vector<256x128xi1>, vector<256x128xf32>
    %91 = arith.truncf %87 : vector<256x128xf32> to vector<256x128xbf16>
    %92 = arith.truncf %84 : vector<256x128xf32> to vector<256x128xbf16>
    %93 = arith.truncf %90 : vector<256x128xf32> to vector<256x128xbf16>
    %94 = tpu.concatenate %71, %72, %73, %81, %82, %83, %91, %92, %93 in 1 : vector<256x128xbf16>, vector<256x128xbf16>, vector<256x128xbf16>, vector<256x128xbf16>, vector<256x128xbf16>, vector<256x128xbf16>, vector<256x128xbf16>, vector<256x128xbf16>, vector<256x128xbf16> -> vector<256x1152xbf16>
    %c0_35 = arith.constant 0 : index
    %c0_36 = arith.constant 0 : index
    %95 = vector.load %arg3[%c0_35, %c0_36] : memref<1152x128xbf16, #tpu.memory_space<vmem>>, vector<1152x128xbf16>
    %cst_37 = arith.constant dense<0.000000e+00> : vector<256x128xf32>
    %96 = tpu.matmul %94, %95, %cst_37 {dimension_numbers = #tpu.dot_dimension_numbers<[1], [0], [0], [1], [0, 0, 1, 1], [], []>} : vector<256x1152xbf16>, vector<1152x128xbf16>, vector<256x128xf32> -> vector<256x128xf32>
    %97 = vector.extract_strided_slice %23 {offsets = [16, 0], sizes = [256, 128], strides = [1, 1]} : vector<288x128xf32> to vector<256x128xf32>
    %c1 = arith.constant 1 : index
    %c0_38 = arith.constant 0 : index
    %98 = vector.load %arg4[%c1, %c0_38] : memref<2x128xf32, #tpu.memory_space<vmem>>, vector<1x128xf32>
    %99 = vector.broadcast %98 : vector<1x128xf32> to vector<256x128xf32>
    %100 = arith.addf %96, %99 : vector<256x128xf32>
    %101 = arith.addf %100, %97 : vector<256x128xf32>
    %cst_39 = arith.constant 0.000000e+00 : f32
    %102 = vector.broadcast %cst_39 : f32 to vector<256x128xf32>
    %103 = arith.maximumf %101, %102 : vector<256x128xf32>
    %c0_40 = arith.constant 0 : index
    %c0_41 = arith.constant 0 : index
    %c0_42 = arith.constant 0 : index
    %104 = vector.load %arg5[%c0_40, %c0_41, %c0_42] : memref<1x256x128xf32, #tpu.memory_space<vmem>>, vector<1x256x128xf32>
    %105 = vector.shape_cast %104 : vector<1x256x128xf32> to vector<256x128xf32>
    %106 = vector.shape_cast %103 : vector<256x128xf32> to vector<1x256x128xf32>
    tpu.vector_store %arg5[%c0_40, %c0_41, %c0_42], %106 {strides = array<i32>} : memref<1x256x128xf32, #tpu.memory_space<vmem>>, vector<1x256x128xf32>,
    return
  }
  func.func @transform_0(%arg0: i32) -> (i32, i32, i32) {
    %c0_i32 = arith.constant 0 : i32
    %c0_i32_0 = arith.constant 0 : i32
    %c0_i32_1 = arith.constant 0 : i32
    return %arg0, %c0_i32, %c0_i32_0 : i32, i32, i32
  }
  func.func @transform_1(%arg0: i32) -> (i32, i32) {
    %c0_i32 = arith.constant 0 : i32
    %c0_i32_0 = arith.constant 0 : i32
    %c0_i32_1 = arith.constant 0 : i32
    return %c0_i32, %c0_i32_0 : i32, i32
  }
  func.func @transform_2(%arg0: i32) -> (i32, i32) {
    %c0_i32 = arith.constant 0 : i32
    %c0_i32_0 = arith.constant 0 : i32
    %c0_i32_1 = arith.constant 0 : i32
    return %c0_i32, %c0_i32_0 : i32, i32
  }
  func.func @transform_3(%arg0: i32) -> (i32, i32) {
    %c0_i32 = arith.constant 0 : i32
    %c0_i32_0 = arith.constant 0 : i32
    %c0_i32_1 = arith.constant 0 : i32
    return %c0_i32, %c0_i32_0 : i32, i32
  }
  func.func @transform_4(%arg0: i32) -> (i32, i32, i32) {
    %c0_i32 = arith.constant 0 : i32
    %c0_i32_0 = arith.constant 0 : i32
    %c0_i32_1 = arith.constant 0 : i32
    return %arg0, %c0_i32, %c0_i32_0 : i32, i32, i32
  }
}

</mosaic_0001>

<llo_original>
// kernel: basic_block_forward.1
$region0: #{basic_block_forward.1}
  #allocation0 [shape = 'u32[]', space=smem, size = 0x4, offset = 0x4, fixed_abs, tag = 'smem constant byte address 0x4 - core index']
  #allocation1 [shape = 'u32[144,128]{1,0:T(1,128)}', space=vmem, size = 0x12000, scoped, tag = 'internal scratch']
  %s0 = inlined_call_operand.vmem [shape: bf16[2,288,128], index: 0, kind: input, shape index: {}]
  %s1 = inlined_call_operand.vmem [shape: bf16[1152,128], index: 1, kind: input, shape index: {}]
  %s2 = inlined_call_operand.vmem [shape: bf16[1152,128], index: 2, kind: input, shape index: {}]
  %s3 = inlined_call_operand.vmem [shape: f32[2,128], index: 3, kind: input, shape index: {}]
  %s4 = inlined_call_operand.vmem [shape: f32[2,256,128], index: 4, kind: output, shape index: {}]
  %s5 = sld [smem:[#allocation0]]
  $region49: #{basic_block_forward.1} parent=0
    _
  %s7 = ssub.s32 1, %s5
  %s8 = scalar_select 0, %s7, %s5
  loop: start=0, step=1, limit=4
  $region2: #{basic_block_forward.1} parent=0 // loop_pre_header
    _
  $region3: #{basic_block_forward.1} parent=0 // loop_header
    %s10 = sphi 0, %s14
    %p11 = scmp.ge.s32.totalorder %s10, 4
    %s20 = sphi 0, %s22
    %s23 = sphi 0, %s20
    %s24 = sphi 0, %s23
    %s40 = sphi 0, %s24
    %s44 = sphi 0, %s44
    %s46 = sphi 0, %s44
    %s47 = sphi 0, %s46
    %s61 = sphi 0, %s47
    %s65 = sphi 0, %s65
    %s67 = sphi 0, %s65
    %s68 = sphi 0, %s67
    %s82 = sphi 0, %s68
    %s86 = sphi 0, %s86
    %s88 = sphi 0, %s86
    %s89 = sphi 0, %s88
    %s103 = sphi 0, %s89
    %s109 = sphi 0, %s111
    %s112 = sphi 0, %s109
    %s113 = sphi 0, %s112
    %s129 = sphi 0, %s113
  $region4: #{basic_block_forward.1} parent=0 // loop_header_branch
    %13 = sbr.rel (%p11) target = $region8
  $region5: #{basic_block_forward.1} parent=0 // loop_body
    %s15 = ssub.s32 %s10, 1
    %s16 = ssub.s32 %s10, 2
    %s17 = sadd.s32 %s10, 1
    %s18 = ssub.s32 %s10, %s17
    %p19 = scmp.eq.s32.totalorder %s18, 0
    %s21 = sadd.s32 %s20, 1
    %s22 = scalar_select %p19, %s20, %s21
    %p25 = pneg %p19
    %p26 = scmp.eq.s32.totalorder %s10, 1
    %p27 = por %p25, %p26
    %p28 = scmp.ne.s32.totalorder %s20, %s23
    %p29 = scmp.eq.s32.totalorder %s10, 0
    %p30 = por %p28, %p29
    %p31 = scmp.ne.s32.totalorder %s20, %s23
    %p32 = scmp.eq.s32.totalorder %s15, 1
    %p33 = por %p31, %p32
    %p34 = scmp.ne.s32.totalorder %s23, %s24
    %p35 = scmp.eq.s32.totalorder %s15, 0
    %p36 = por %p34, %p35
    %p37 = scmp.ne.s32.totalorder %s23, %s24
    %p38 = scmp.eq.s32.totalorder %s16, 1
    %p39 = por %p37, %p38
    %p41 = scmp.ne.s32.totalorder %s24, %s40
    %p42 = scmp.eq.s32.totalorder %s16, 0
    %p43 = por %p41, %p42
    %s45 = sadd.s32 %s44, 1
    %p48 = scmp.eq.s32.totalorder %s10, 1
    %p49 = scmp.ne.s32.totalorder %s44, %s46
    %p50 = scmp.eq.s32.totalorder %s10, 0
    %p51 = por %p49, %p50
    %p52 = scmp.ne.s32.totalorder %s44, %s46
    %p53 = scmp.eq.s32.totalorder %s15, 1
    %p54 = por %p52, %p53
    %p55 = scmp.ne.s32.totalorder %s46, %s47
    %p56 = scmp.eq.s32.totalorder %s15, 0
    %p57 = por %p55, %p56
    %p58 = scmp.ne.s32.totalorder %s46, %s47
    %p59 = scmp.eq.s32.totalorder %s16, 1
    %p60 = por %p58, %p59
    %p62 = scmp.ne.s32.totalorder %s47, %s61
    %p63 = scmp.eq.s32.totalorder %s16, 0
    %p64 = por %p62, %p63
    %s66 = sadd.s32 %s65, 1
    %p69 = scmp.eq.s32.totalorder %s10, 1
    %p70 = scmp.ne.s32.totalorder %s65, %s67
    %p71 = scmp.eq.s32.totalorder %s10, 0
    %p72 = por %p70, %p71
    %p73 = scmp.ne.s32.totalorder %s65, %s67
    %p74 = scmp.eq.s32.totalorder %s15, 1
    %p75 = por %p73, %p74
    %p76 = scmp.ne.s32.totalorder %s67, %s68
    %p77 = scmp.eq.s32.totalorder %s15, 0
    %p78 = por %p76, %p77
    %p79 = scmp.ne.s32.totalorder %s67, %s68
    %p80 = scmp.eq.s32.totalorder %s16, 1
    %p81 = por %p79, %p80
    %p83 = scmp.ne.s32.totalorder %s68, %s82
    %p84 = scmp.eq.s32.totalorder %s16, 0
    %p85 = por %p83, %p84
    %s87 = sadd.s32 %s86, 1
    %p90 = scmp.eq.s32.totalorder %s10, 1
    %p91 = scmp.ne.s32.totalorder %s86, %s88
    %p92 = scmp.eq.s32.totalorder %s10, 0
    %p93 = por %p91, %p92
    %p94 = scmp.ne.s32.totalorder %s86, %s88
    %p95 = scmp.eq.s32.totalorder %s15, 1
    %p96 = por %p94, %p95
    %p97 = scmp.ne.s32.totalorder %s88, %s89
    %p98 = scmp.eq.s32.totalorder %s15, 0
    %p99 = por %p97, %p98
    %p100 = scmp.ne.s32.totalorder %s88, %s89
    %p101 = scmp.eq.s32.totalorder %s16, 1
    %p102 = por %p100, %p101
    %p104 = scmp.ne.s32.totalorder %s89, %s103
    %p105 = scmp.eq.s32.totalorder %s16, 0
    %p106 = por %p104, %p105
    %s107 = ssub.s32 %s10, %s17
    %p108 = scmp.eq.s32.totalorder %s107, 0
    %s110 = sadd.s32 %s109, 1
    %s111 = scalar_select %p108, %s109, %s110
    %p114 = pneg %p108
    %p115 = scmp.eq.s32.totalorder %s10, 1
    %p116 = por %p114, %p115
    %p117 = scmp.ne.s32.totalorder %s109, %s112
    %p118 = scmp.eq.s32.totalorder %s10, 0
    %p119 = por %p117, %p118
    %p120 = scmp.ne.s32.totalorder %s109, %s112
    %p121 = scmp.eq.s32.totalorder %s15, 1
    %p122 = por %p120, %p121
    %p123 = scmp.ne.s32.totalorder %s112, %s113
    %p124 = scmp.eq.s32.totalorder %s15, 0
    %p125 = por %p123, %p124
    %p126 = scmp.ne.s32.totalorder %s112, %s113
    %p127 = scmp.eq.s32.totalorder %s16, 1
    %p128 = por %p126, %p127
    %p130 = scmp.ne.s32.totalorder %s113, %s129
    %p131 = scmp.eq.s32.totalorder %s16, 0
    %p132 = por %p130, %p131
    %p133 = scmp.le.s32.totalorder 1, %s10
    %p134 = scmp.lt.s32.totalorder %s10, 3
    %p135 = pnand %p133, %p134
    %p136 = pneg %p135
    // Predicated region
    $region9: #{basic_block_forward.1} parent=5 // pred_check
      _
    $region10: #{basic_block_forward.1} parent=5 // pred_check_branch
      %138 = sbr.rel (%p135) target = $region12
    $region11: #{basic_block_forward.1} parent=5 // pred_region
      %s139 = ssub.s32 %s10, 1
      // Predicated region
      $region13: #{basic_block_forward.1} parent=11 // pred_check
        %p140 = pneg %p57
      $region14: #{basic_block_forward.1} parent=11 // pred_check_branch
        %142 = sbr.rel (%p140) target = $region16
      $region15: #{basic_block_forward.1} parent=11 // pred_region
        _
      $region16: #{basic_block_forward.1} parent=11 // pred_fallthru
        _
      // Predicated region
      $region17: #{basic_block_forward.1} parent=11 // pred_check
        %p143 = pneg %p78
      $region18: #{basic_block_forward.1} parent=11 // pred_check_branch
        %145 = sbr.rel (%p143) target = $region20
      $region19: #{basic_block_forward.1} parent=11 // pred_region
        _
      $region20: #{basic_block_forward.1} parent=11 // pred_fallthru
        _
      // Predicated region
      $region21: #{basic_block_forward.1} parent=11 // pred_check
        %p146 = pneg %p99
      $region22: #{basic_block_forward.1} parent=11 // pred_check_branch
        %148 = sbr.rel (%p146) target = $region24
      $region23: #{basic_block_forward.1} parent=11 // pred_region
        _
      $region24: #{basic_block_forward.1} parent=11 // pred_fallthru
        _
    $region12: #{basic_block_forward.1} parent=5 // pred_fallthru
      _
    %p149 = scmp.lt.s32.totalorder %s10, 2
    // Predicated region
    $region25: #{basic_block_forward.1} parent=5 // pred_check
      %p150 = pneg %p149
    $region26: #{basic_block_forward.1} parent=5 // pred_check_branch
      %152 = sbr.rel (%p150) target = $region28
    $region27: #{basic_block_forward.1} parent=5 // pred_region
      // Predicated region
      $region29: #{basic_block_forward.1} parent=27 // pred_check
        %p153 = pneg %p30
      $region30: #{basic_block_forward.1} parent=27 // pred_check_branch
        %155 = sbr.rel (%p153) target = $region32
      $region31: #{basic_block_forward.1} parent=27 // pred_region
        %p156 = scmp.lt.s32.totalorder %s10, 1
        %s157 = scalar_select %p156, %s10, 1
        %s158 = smul.addr %s157, 36
        %s159 = smul.addr %s158, 4
        %s160 = scalar_lea.vmem %s0, %s159
      $region32: #{basic_block_forward.1} parent=27 // pred_fallthru
        _
    $region28: #{basic_block_forward.1} parent=5 // pred_fallthru
      _
    %p161 = scmp.le.s32.totalorder 1, %s10
    %p162 = scmp.lt.s32.totalorder %s10, 3
    %p163 = pnand %p161, %p162
    %p164 = pneg %p163
    // Predicated region
    $region33: #{basic_block_forward.1} parent=5 // pred_check
      _
    $region34: #{basic_block_forward.1} parent=5 // pred_check_branch
      %166 = sbr.rel (%p163) target = $region36
    $region35: #{basic_block_forward.1} parent=5 // pred_region
      %s167 = ssub.s32 %s10, 1
      %p168 = scmp.lt.s32.totalorder %s15, 1
      %s169 = scalar_select %p168, %s15, 1
      %s170 = smul.addr %s169, 36
      %s171 = smul.addr %s170, 4
      %s172 = scalar_lea.vmem %s0, %s171
      %p173 = pneg %p36
      %p174 = pneg %p33
      %p175 = pneg %p57
      %p176 = pneg %p54
      %p177 = pneg %p78
      %p178 = pneg %p75
      %p179 = pneg %p99
      %p180 = pneg %p96
      %p181 = pneg %p125
      %p182 = pneg %p122
      %p183 = scmp.lt.s32.totalorder %s15, 1
      %s184 = scalar_select %p183, %s15, 1
      %s185 = smul.addr %s184, 32
      %s186 = smul.addr %s185, 8
      %s187 = scalar_lea.vmem %s4, %s186
      %p188 = scmp.lt.s32.totalorder %s15, 1
      %s189 = scalar_select %p188, %s15, 1
      %s190 = smul.addr %s189, 36
      %s191 = smul.addr %s190, 4
      %s192 = scalar_lea.vmem %s0, %s191
      %p193 = scmp.lt.s32.totalorder %s15, 1
      %s194 = scalar_select %p193, %s15, 1
      %s195 = smul.addr %s194, 32
      %s196 = smul.addr %s195, 8
      %s197 = scalar_lea.vmem %s4, %s196
      %v199 = vlaneseq
      %v200 = vshrl.u32 %v199, 7
      %v201 = vadd.s32 %v200, 8
      %v202 = vadd.s32 %v200, 16
      %v203 = vadd.s32 %v200, 24
      %v204 = vadd.s32 %v200, 32
      %v205 = vadd.s32 %v200, 40
      %v206 = vadd.s32 %v200, 48
      %v207 = vadd.s32 %v200, 56
      %v208 = vadd.s32 %v200, 64
      %v209 = vadd.s32 %v200, 72
      %v210 = vadd.s32 %v200, 80
      %v211 = vadd.s32 %v200, 88
      %v212 = vadd.s32 %v200, 96
      %v213 = vadd.s32 %v200, 104
      %v214 = vadd.s32 %v200, 112
      %v215 = vadd.s32 %v200, 120
      %v216 = vadd.s32 %v200, 128
      %v217 = vadd.s32 %v200, 136
      %v218 = vadd.s32 %v200, 144
      %v219 = vadd.s32 %v200, 152
      %v220 = vadd.s32 %v200, 160
      %v221 = vadd.s32 %v200, 168
      %v222 = vadd.s32 %v200, 176
      %v223 = vadd.s32 %v200, 184
      %v224 = vadd.s32 %v200, 192
      %v225 = vadd.s32 %v200, 200
      %v226 = vadd.s32 %v200, 208
      %v227 = vadd.s32 %v200, 216
      %v228 = vadd.s32 %v200, 224
      %v229 = vadd.s32 %v200, 232
      %v230 = vadd.s32 %v200, 240
      %v231 = vadd.s32 %v200, 248
      %vm232 = vcmp.lt.s32.totalorder %v200, 0
      %v233 = vsub.s32 0, %v200
      %v234 = vsel %vm232, %v233, %v200
      %v235 = vshrl.u32 %v234, 4
      %v236 = vand.u32 %v234, 15
      %v237 = vsub.s32 0, %v236
      %v238 = vsel %vm232, %v237, %v236
      %vm239 = vcmp.lt.s32.totalorder %v201, 0
      %v240 = vsub.s32 0, %v201
      %v241 = vsel %vm239, %v240, %v201
      %v242 = vshrl.u32 %v241, 4
      %v243 = vand.u32 %v241, 15
      %v244 = vsub.s32 0, %v243
      %v245 = vsel %vm239, %v244, %v243
      %vm246 = vcmp.lt.s32.totalorder %v202, 0
      %v247 = vsub.s32 0, %v202
      %v248 = vsel %vm246, %v247, %v202
      %v249 = vshrl.u32 %v248, 4
      %v250 = vand.u32 %v248, 15
      %v251 = vsub.s32 0, %v250
      %v252 = vsel %vm246, %v251, %v250
      %vm253 = vcmp.lt.s32.totalorder %v203, 0
      %v254 = vsub.s32 0, %v203
      %v255 = vsel %vm253, %v254, %v203
      %v256 = vshrl.u32 %v255, 4
      %v257 = vand.u32 %v255, 15
      %v258 = vsub.s32 0, %v257
      %v259 = vsel %vm253, %v258, %v257
      %vm260 = vcmp.lt.s32.totalorder %v204, 0
      %v261 = vsub.s32 0, %v204
      %v262 = vsel %vm260, %v261, %v204
      %v263 = vshrl.u32 %v262, 4
      %v264 = vand.u32 %v262, 15
      %v265 = vsub.s32 0, %v264
      %v266 = vsel %vm260, %v265, %v264
      %vm267 = vcmp.lt.s32.totalorder %v205, 0
      %v268 = vsub.s32 0, %v205
      %v269 = vsel %vm267, %v268, %v205
      %v270 = vshrl.u32 %v269, 4
      %v271 = vand.u32 %v269, 15
      %v272 = vsub.s32 0, %v271
      %v273 = vsel %vm267, %v272, %v271
      %vm274 = vcmp.lt.s32.totalorder %v206, 0
      %v275 = vsub.s32 0, %v206
      %v276 = vsel %vm274, %v275, %v206
      %v277 = vshrl.u32 %v276, 4
      %v278 = vand.u32 %v276, 15
      %v279 = vsub.s32 0, %v278
      %v280 = vsel %vm274, %v279, %v278
      %vm281 = vcmp.lt.s32.totalorder %v207, 0
      %v282 = vsub.s32 0, %v207
      %v283 = vsel %vm281, %v282, %v207
      %v284 = vshrl.u32 %v283, 4
      %v285 = vand.u32 %v283, 15
      %v286 = vsub.s32 0, %v285
      %v287 = vsel %vm281, %v286, %v285
      %vm288 = vcmp.lt.s32.totalorder %v208, 0
      %v289 = vsub.s32 0, %v208
      %v290 = vsel %vm288, %v289, %v208
      %v291 = vshrl.u32 %v290, 4
      %v292 = vand.u32 %v290, 15
      %v293 = vsub.s32 0, %v292
      %v294 = vsel %vm288, %v293, %v292
      %vm295 = vcmp.lt.s32.totalorder %v209, 0
      %v296 = vsub.s32 0, %v209
      %v297 = vsel %vm295, %v296, %v209
      %v298 = vshrl.u32 %v297, 4
      %v299 = vand.u32 %v297, 15
      %v300 = vsub.s32 0, %v299
      %v301 = vsel %vm295, %v300, %v299
      %vm302 = vcmp.lt.s32.totalorder %v210, 0
      %v303 = vsub.s32 0, %v210
      %v304 = vsel %vm302, %v303, %v210
      %v305 = vshrl.u32 %v304, 4
      %v306 = vand.u32 %v304, 15
      %v307 = vsub.s32 0, %v306
      %v308 = vsel %vm302, %v307, %v306
      %vm309 = vcmp.lt.s32.totalorder %v211, 0
      %v310 = vsub.s32 0, %v211
      %v311 = vsel %vm309, %v310, %v211
      %v312 = vshrl.u32 %v311, 4
      %v313 = vand.u32 %v311, 15
      %v314 = vsub.s32 0, %v313
      %v315 = vsel %vm309, %v314, %v313
      %vm316 = vcmp.lt.s32.totalorder %v212, 0
      %v317 = vsub.s32 0, %v212
      %v318 = vsel %vm316, %v317, %v212
      %v319 = vshrl.u32 %v318, 4
      %v320 = vand.u32 %v318, 15
      %v321 = vsub.s32 0, %v320
      %v322 = vsel %vm316, %v321, %v320
      %vm323 = vcmp.lt.s32.totalorder %v213, 0
      %v324 = vsub.s32 0, %v213
      %v325 = vsel %vm323, %v324, %v213
      %v326 = vshrl.u32 %v325, 4
      %v327 = vand.u32 %v325, 15
      %v328 = vsub.s32 0, %v327
      %v329 = vsel %vm323, %v328, %v327
      %vm330 = vcmp.lt.s32.totalorder %v214, 0
      %v331 = vsub.s32 0, %v214
      %v332 = vsel %vm330, %v331, %v214
      %v333 = vshrl.u32 %v332, 4
      %v334 = vand.u32 %v332, 15
      %v335 = vsub.s32 0, %v334
      %v336 = vsel %vm330, %v335, %v334
      %vm337 = vcmp.lt.s32.totalorder %v215, 0
      %v338 = vsub.s32 0, %v215
      %v339 = vsel %vm337, %v338, %v215
      %v340 = vshrl.u32 %v339, 4
      %v341 = vand.u32 %v339, 15
      %v342 = vsub.s32 0, %v341
      %v343 = vsel %vm337, %v342, %v341
      %vm344 = vcmp.lt.s32.totalorder %v216, 0
      %v345 = vsub.s32 0, %v216
      %v346 = vsel %vm344, %v345, %v216
      %v347 = vshrl.u32 %v346, 4
      %v348 = vand.u32 %v346, 15
      %v349 = vsub.s32 0, %v348
      %v350 = vsel %vm344, %v349, %v348
      %vm351 = vcmp.lt.s32.totalorder %v217, 0
      %v352 = vsub.s32 0, %v217
      %v353 = vsel %vm351, %v352, %v217
      %v354 = vshrl.u32 %v353, 4
      %v355 = vand.u32 %v353, 15
      %v356 = vsub.s32 0, %v355
      %v357 = vsel %vm351, %v356, %v355
      %vm358 = vcmp.lt.s32.totalorder %v218, 0
      %v359 = vsub.s32 0, %v218
      %v360 = vsel %vm358, %v359, %v218
      %v361 = vshrl.u32 %v360, 4
      %v362 = vand.u32 %v360, 15
      %v363 = vsub.s32 0, %v362
      %v364 = vsel %vm358, %v363, %v362
      %vm365 = vcmp.lt.s32.totalorder %v219, 0
      %v366 = vsub.s32 0, %v219
      %v367 = vsel %vm365, %v366, %v219
      %v368 = vshrl.u32 %v367, 4
      %v369 = vand.u32 %v367, 15
      %v370 = vsub.s32 0, %v369
      %v371 = vsel %vm365, %v370, %v369
      %vm372 = vcmp.lt.s32.totalorder %v220, 0
      %v373 = vsub.s32 0, %v220
      %v374 = vsel %vm372, %v373, %v220
      %v375 = vshrl.u32 %v374, 4
      %v376 = vand.u32 %v374, 15
      %v377 = vsub.s32 0, %v376
      %v378 = vsel %vm372, %v377, %v376
      %vm379 = vcmp.lt.s32.totalorder %v221, 0
      %v380 = vsub.s32 0, %v221
      %v381 = vsel %vm379, %v380, %v221
      %v382 = vshrl.u32 %v381, 4
      %v383 = vand.u32 %v381, 15
      %v384 = vsub.s32 0, %v383
      %v385 = vsel %vm379, %v384, %v383
      %vm386 = vcmp.lt.s32.totalorder %v222, 0
      %v387 = vsub.s32 0, %v222
      %v388 = vsel %vm386, %v387, %v222
      %v389 = vshrl.u32 %v388, 4
      %v390 = vand.u32 %v388, 15
      %v391 = vsub.s32 0, %v390
      %v392 = vsel %vm386, %v391, %v390
      %vm393 = vcmp.lt.s32.totalorder %v223, 0
      %v394 = vsub.s32 0, %v223
      %v395 = vsel %vm393, %v394, %v223
      %v396 = vshrl.u32 %v395, 4
      %v397 = vand.u32 %v395, 15
      %v398 = vsub.s32 0, %v397
      %v399 = vsel %vm393, %v398, %v397
      %vm400 = vcmp.lt.s32.totalorder %v224, 0
      %v401 = vsub.s32 0, %v224
      %v402 = vsel %vm400, %v401, %v224
      %v403 = vshrl.u32 %v402, 4
      %v404 = vand.u32 %v402, 15
      %v405 = vsub.s32 0, %v404
      %v406 = vsel %vm400, %v405, %v404
      %vm407 = vcmp.lt.s32.totalorder %v225, 0
      %v408 = vsub.s32 0, %v225
      %v409 = vsel %vm407, %v408, %v225
      %v410 = vshrl.u32 %v409, 4
      %v411 = vand.u32 %v409, 15
      %v412 = vsub.s32 0, %v411
      %v413 = vsel %vm407, %v412, %v411
      %vm414 = vcmp.lt.s32.totalorder %v226, 0
      %v415 = vsub.s32 0, %v226
      %v416 = vsel %vm414, %v415, %v226
      %v417 = vshrl.u32 %v416, 4
      %v418 = vand.u32 %v416, 15
      %v419 = vsub.s32 0, %v418
      %v420 = vsel %vm414, %v419, %v418
      %vm421 = vcmp.lt.s32.totalorder %v227, 0
      %v422 = vsub.s32 0, %v227
      %v423 = vsel %vm421, %v422, %v227
      %v424 = vshrl.u32 %v423, 4
      %v425 = vand.u32 %v423, 15
      %v426 = vsub.s32 0, %v425
      %v427 = vsel %vm421, %v426, %v425
      %vm428 = vcmp.lt.s32.totalorder %v228, 0
      %v429 = vsub.s32 0, %v228
      %v430 = vsel %vm428, %v429, %v228
      %v431 = vshrl.u32 %v430, 4
      %v432 = vand.u32 %v430, 15
      %v433 = vsub.s32 0, %v432
      %v434 = vsel %vm428, %v433, %v432
      %vm435 = vcmp.lt.s32.totalorder %v229, 0
      %v436 = vsub.s32 0, %v229
      %v437 = vsel %vm435, %v436, %v229
      %v438 = vshrl.u32 %v437, 4
      %v439 = vand.u32 %v437, 15
      %v440 = vsub.s32 0, %v439
      %v441 = vsel %vm435, %v440, %v439
      %vm442 = vcmp.lt.s32.totalorder %v230, 0
      %v443 = vsub.s32 0, %v230
      %v444 = vsel %vm442, %v443, %v230
      %v445 = vshrl.u32 %v444, 4
      %v446 = vand.u32 %v444, 15
      %v447 = vsub.s32 0, %v446
      %v448 = vsel %vm442, %v447, %v446
      %vm449 = vcmp.lt.s32.totalorder %v231, 0
      %v450 = vsub.s32 0, %v231
      %v451 = vsel %vm449, %v450, %v231
      %v452 = vshrl.u32 %v451, 4
      %v453 = vand.u32 %v451, 15
      %v454 = vsub.s32 0, %v453
      %v455 = vsel %vm449, %v454, %v453
      %vm456 = vcmp.ne.s32.totalorder %v238, 0
      %vm457 = vcmp.ne.s32.totalorder %v245, 0
      %vm458 = vcmp.ne.s32.totalorder %v252, 0
      %vm459 = vcmp.ne.s32.totalorder %v259, 0
      %vm460 = vcmp.ne.s32.totalorder %v266, 0
      %vm461 = vcmp.ne.s32.totalorder %v273, 0
      %vm462 = vcmp.ne.s32.totalorder %v280, 0
      %vm463 = vcmp.ne.s32.totalorder %v287, 0
      %vm464 = vcmp.ne.s32.totalorder %v294, 0
      %vm465 = vcmp.ne.s32.totalorder %v301, 0
      %vm466 = vcmp.ne.s32.totalorder %v308, 0
      %vm467 = vcmp.ne.s32.totalorder %v315, 0
      %vm468 = vcmp.ne.s32.totalorder %v322, 0
      %vm469 = vcmp.ne.s32.totalorder %v329, 0
      %vm470 = vcmp.ne.s32.totalorder %v336, 0
      %vm471 = vcmp.ne.s32.totalorder %v343, 0
      %vm472 = vcmp.ne.s32.totalorder %v350, 0
      %vm473 = vcmp.ne.s32.totalorder %v357, 0
      %vm474 = vcmp.ne.s32.totalorder %v364, 0
      %vm475 = vcmp.ne.s32.totalorder %v371, 0
      %vm476 = vcmp.ne.s32.totalorder %v378, 0
      %vm477 = vcmp.ne.s32.totalorder %v385, 0
      %vm478 = vcmp.ne.s32.totalorder %v392, 0
      %vm479 = vcmp.ne.s32.totalorder %v399, 0
      %vm480 = vcmp.ne.s32.totalorder %v406, 0
      %vm481 = vcmp.ne.s32.totalorder %v413, 0
      %vm482 = vcmp.ne.s32.totalorder %v420, 0
      %vm483 = vcmp.ne.s32.totalorder %v427, 0
      %vm484 = vcmp.ne.s32.totalorder %v434, 0
      %vm485 = vcmp.ne.s32.totalorder %v441, 0
      %vm486 = vcmp.ne.s32.totalorder %v448, 0
      %vm487 = vcmp.ne.s32.totalorder %v455, 0
      %vm488 = vcmp.lt.s32.totalorder %v238, 0
      %vm489 = vcmp.lt.s32.totalorder %v245, 0
      %vm490 = vcmp.lt.s32.totalorder %v252, 0
      %vm491 = vcmp.lt.s32.totalorder %v259, 0
      %vm492 = vcmp.lt.s32.totalorder %v266, 0
      %vm493 = vcmp.lt.s32.totalorder %v273, 0
      %vm494 = vcmp.lt.s32.totalorder %v280, 0
      %vm495 = vcmp.lt.s32.totalorder %v287, 0
      %vm496 = vcmp.lt.s32.totalorder %v294, 0
      %vm497 = vcmp.lt.s32.totalorder %v301, 0
      %vm498 = vcmp.lt.s32.totalorder %v308, 0
      %vm499 = vcmp.lt.s32.totalorder %v315, 0
      %vm500 = vcmp.lt.s32.totalorder %v322, 0
      %vm501 = vcmp.lt.s32.totalorder %v329, 0
      %vm502 = vcmp.lt.s32.totalorder %v336, 0
      %vm503 = vcmp.lt.s32.totalorder %v343, 0
      %vm504 = vcmp.lt.s32.totalorder %v350, 0
      %vm505 = vcmp.lt.s32.totalorder %v357, 0
      %vm506 = vcmp.lt.s32.totalorder %v364, 0
      %vm507 = vcmp.lt.s32.totalorder %v371, 0
      %vm508 = vcmp.lt.s32.totalorder %v378, 0
      %vm509 = vcmp.lt.s32.totalorder %v385, 0
      %vm510 = vcmp.lt.s32.totalorder %v392, 0
      %vm511 = vcmp.lt.s32.totalorder %v399, 0
      %vm512 = vcmp.lt.s32.totalorder %v406, 0
      %vm513 = vcmp.lt.s32.totalorder %v413, 0
      %vm514 = vcmp.lt.s32.totalorder %v420, 0
      %vm515 = vcmp.lt.s32.totalorder %v427, 0
      %vm516 = vcmp.lt.s32.totalorder %v434, 0
      %vm517 = vcmp.lt.s32.totalorder %v441, 0
      %vm518 = vcmp.lt.s32.totalorder %v448, 0
      %vm519 = vcmp.lt.s32.totalorder %v455, 0
      %vm520 = vmand %vm488, %vm456
      %vm521 = vmand %vm489, %vm457
      %vm522 = vmand %vm490, %vm458
      %vm523 = vmand %vm491, %vm459
      %vm524 = vmand %vm492, %vm460
      %vm525 = vmand %vm493, %vm461
      %vm526 = vmand %vm494, %vm462
      %vm527 = vmand %vm495, %vm463
      %vm528 = vmand %vm496, %vm464
      %vm529 = vmand %vm497, %vm465
      %vm530 = vmand %vm498, %vm466
      %vm531 = vmand %vm499, %vm467
      %vm532 = vmand %vm500, %vm468
      %vm533 = vmand %vm501, %vm469
      %vm534 = vmand %vm502, %vm470
      %vm535 = vmand %vm503, %vm471
      %vm536 = vmand %vm504, %vm472
      %vm537 = vmand %vm505, %vm473
      %vm538 = vmand %vm506, %vm474
      %vm539 = vmand %vm507, %vm475
      %vm540 = vmand %vm508, %vm476
      %vm541 = vmand %vm509, %vm477
      %vm542 = vmand %vm510, %vm478
      %vm543 = vmand %vm511, %vm479
      %vm544 = vmand %vm512, %vm480
      %vm545 = vmand %vm513, %vm481
      %vm546 = vmand %vm514, %vm482
      %vm547 = vmand %vm515, %vm483
      %vm548 = vmand %vm516, %vm484
      %vm549 = vmand %vm517, %vm485
      %vm550 = vmand %vm518, %vm486
      %vm551 = vmand %vm519, %vm487
      %v552 = vadd.s32 %v238, 16
      %v553 = vadd.s32 %v245, 16
      %v554 = vadd.s32 %v252, 16
      %v555 = vadd.s32 %v259, 16
      %v556 = vadd.s32 %v266, 16
      %v557 = vadd.s32 %v273, 16
      %v558 = vadd.s32 %v280, 16
      %v559 = vadd.s32 %v287, 16
      %v560 = vadd.s32 %v294, 16
      %v561 = vadd.s32 %v301, 16
      %v562 = vadd.s32 %v308, 16
      %v563 = vadd.s32 %v315, 16
      %v564 = vadd.s32 %v322, 16
      %v565 = vadd.s32 %v329, 16
      %v566 = vadd.s32 %v336, 16
      %v567 = vadd.s32 %v343, 16
      %v568 = vadd.s32 %v350, 16
      %v569 = vadd.s32 %v357, 16
      %v570 = vadd.s32 %v364, 16
      %v571 = vadd.s32 %v371, 16
      %v572 = vadd.s32 %v378, 16
      %v573 = vadd.s32 %v385, 16
      %v574 = vadd.s32 %v392, 16
      %v575 = vadd.s32 %v399, 16
      %v576 = vadd.s32 %v406, 16
      %v577 = vadd.s32 %v413, 16
      %v578 = vadd.s32 %v420, 16
      %v579 = vadd.s32 %v427, 16
      %v580 = vadd.s32 %v434, 16
      %v581 = vadd.s32 %v441, 16
      %v582 = vadd.s32 %v448, 16
      %v583 = vadd.s32 %v455, 16
      %v584 = vsel %vm520, %v552, %v238
      %v585 = vsel %vm521, %v553, %v245
      %v586 = vsel %vm522, %v554, %v252
      %v587 = vsel %vm523, %v555, %v259
      %v588 = vsel %vm524, %v556, %v266
      %v589 = vsel %vm525, %v557, %v273
      %v590 = vsel %vm526, %v558, %v280
      %v591 = vsel %vm527, %v559, %v287
      %v592 = vsel %vm528, %v560, %v294
      %v593 = vsel %vm529, %v561, %v301
      %v594 = vsel %vm530, %v562, %v308
      %v595 = vsel %vm531, %v563, %v315
      %v596 = vsel %vm532, %v564, %v322
      %v597 = vsel %vm533, %v565, %v329
      %v598 = vsel %vm534, %v566, %v336
      %v599 = vsel %vm535, %v567, %v343
      %v600 = vsel %vm536, %v568, %v350
      %v601 = vsel %vm537, %v569, %v357
      %v602 = vsel %vm538, %v570, %v364
      %v603 = vsel %vm539, %v571, %v371
      %v604 = vsel %vm540, %v572, %v378
      %v605 = vsel %vm541, %v573, %v385
      %v606 = vsel %vm542, %v574, %v392
      %v607 = vsel %vm543, %v575, %v399
      %v608 = vsel %vm544, %v576, %v406
      %v609 = vsel %vm545, %v577, %v413
      %v610 = vsel %vm546, %v578, %v420
      %v611 = vsel %vm547, %v579, %v427
      %v612 = vsel %vm548, %v580, %v434
      %v613 = vsel %vm549, %v581, %v441
      %v614 = vsel %vm550, %v582, %v448
      %v615 = vsel %vm551, %v583, %v455
      %vm616 = vcmp.ne.s32.totalorder %v584, 0
      %vm617 = vcmp.ne.s32.totalorder %v585, 0
      %vm618 = vcmp.ne.s32.totalorder %v586, 0
      %vm619 = vcmp.ne.s32.totalorder %v587, 0
      %vm620 = vcmp.ne.s32.totalorder %v588, 0
      %vm621 = vcmp.ne.s32.totalorder %v589, 0
      %vm622 = vcmp.ne.s32.totalorder %v590, 0
      %vm623 = vcmp.ne.s32.totalorder %v591, 0
      %vm624 = vcmp.ne.s32.totalorder %v592, 0
      %vm625 = vcmp.ne.s32.totalorder %v593, 0
      %vm626 = vcmp.ne.s32.totalorder %v594, 0
      %vm627 = vcmp.ne.s32.totalorder %v595, 0
      %vm628 = vcmp.ne.s32.totalorder %v596, 0
      %vm629 = vcmp.ne.s32.totalorder %v597, 0
      %vm630 = vcmp.ne.s32.totalorder %v598, 0
      %vm631 = vcmp.ne.s32.totalorder %v599, 0
      %vm632 = vcmp.ne.s32.totalorder %v600, 0
      %vm633 = vcmp.ne.s32.totalorder %v601, 0
      %vm634 = vcmp.ne.s32.totalorder %v602, 0
      %vm635 = vcmp.ne.s32.totalorder %v603, 0
      %vm636 = vcmp.ne.s32.totalorder %v604, 0
      %vm637 = vcmp.ne.s32.totalorder %v605, 0
      %vm638 = vcmp.ne.s32.totalorder %v606, 0
      %vm639 = vcmp.ne.s32.totalorder %v607, 0
      %vm640 = vcmp.ne.s32.totalorder %v608, 0
      %vm641 = vcmp.ne.s32.totalorder %v609, 0
      %vm642 = vcmp.ne.s32.totalorder %v610, 0
      %vm643 = vcmp.ne.s32.totalorder %v611, 0
      %vm644 = vcmp.ne.s32.totalorder %v612, 0
      %vm645 = vcmp.ne.s32.totalorder %v613, 0
      %vm646 = vcmp.ne.s32.totalorder %v614, 0
      %vm647 = vcmp.ne.s32.totalorder %v615, 0
      %vm648 = vcmp.ne.s32.totalorder %v584, 15
      %vm649 = vcmp.ne.s32.totalorder %v585, 15
      %vm650 = vcmp.ne.s32.totalorder %v586, 15
      %vm651 = vcmp.ne.s32.totalorder %v587, 15
      %vm652 = vcmp.ne.s32.totalorder %v588, 15
      %vm653 = vcmp.ne.s32.totalorder %v589, 15
      %vm654 = vcmp.ne.s32.totalorder %v590, 15
      %vm655 = vcmp.ne.s32.totalorder %v591, 15
      %vm656 = vcmp.ne.s32.totalorder %v592, 15
      %vm657 = vcmp.ne.s32.totalorder %v593, 15
      %vm658 = vcmp.ne.s32.totalorder %v594, 15
      %vm659 = vcmp.ne.s32.totalorder %v595, 15
      %vm660 = vcmp.ne.s32.totalorder %v596, 15
      %vm661 = vcmp.ne.s32.totalorder %v597, 15
      %vm662 = vcmp.ne.s32.totalorder %v598, 15
      %vm663 = vcmp.ne.s32.totalorder %v599, 15
      %vm664 = vcmp.ne.s32.totalorder %v600, 15
      %vm665 = vcmp.ne.s32.totalorder %v601, 15
      %vm666 = vcmp.ne.s32.totalorder %v602, 15
      %vm667 = vcmp.ne.s32.totalorder %v603, 15
      %vm668 = vcmp.ne.s32.totalorder %v604, 15
      %vm669 = vcmp.ne.s32.totalorder %v605, 15
      %vm670 = vcmp.ne.s32.totalorder %v606, 15
      %vm671 = vcmp.ne.s32.totalorder %v607, 15
      %vm672 = vcmp.ne.s32.totalorder %v608, 15
      %vm673 = vcmp.ne.s32.totalorder %v609, 15
      %vm674 = vcmp.ne.s32.totalorder %v610, 15
      %vm675 = vcmp.ne.s32.totalorder %v611, 15
      %vm676 = vcmp.ne.s32.totalorder %v612, 15
      %vm677 = vcmp.ne.s32.totalorder %v613, 15
      %vm678 = vcmp.ne.s32.totalorder %v614, 15
      %vm679 = vcmp.ne.s32.totalorder %v615, 15
      %v680 = vld [vmem:[%s192] sm:$0xf]
      %v681 = vld [vmem:[%s192 + $0x4] sm:$0xf]
      %v682 = vld [vmem:[%s192 + $0x8] sm:$0xf]
      %v683 = vld [vmem:[%s192 + $0xc] sm:$0xf]
      %v684 = vld [vmem:[%s192 + $0x10] sm:$0xf]
      %v685 = vld [vmem:[%s192 + $0x14] sm:$0xf]
      %v686 = vld [vmem:[%s192 + $0x18] sm:$0xf]
      %v687 = vld [vmem:[%s192 + $0x1c] sm:$0xf]
      %v688 = vld [vmem:[%s192 + $0x20] sm:$0xf]
      %v689 = vld [vmem:[%s192 + $0x24] sm:$0xf]
      %v690 = vld [vmem:[%s192 + $0x28] sm:$0xf]
      %v691 = vld [vmem:[%s192 + $0x2c] sm:$0xf]
      %v692 = vld [vmem:[%s192 + $0x30] sm:$0xf]
      %v693 = vld [vmem:[%s192 + $0x34] sm:$0xf]
      %v694 = vld [vmem:[%s192 + $0x38] sm:$0xf]
      %v695 = vld [vmem:[%s192 + $0x3c] sm:$0xf]
      %v696 = vld [vmem:[%s192 + $0x40] sm:$0xf]
      %v697 = vld [vmem:[%s192 + $0x44] sm:$0xf]
      %v698 = vld [vmem:[%s192 + $0x48] sm:$0xf]
      %v699 = vld [vmem:[%s192 + $0x4c] sm:$0xf]
      %v700 = vld [vmem:[%s192 + $0x50] sm:$0xf]
      %v701 = vld [vmem:[%s192 + $0x54] sm:$0xf]
      %v702 = vld [vmem:[%s192 + $0x58] sm:$0xf]
      %v703 = vld [vmem:[%s192 + $0x5c] sm:$0xf]
      %v704 = vld [vmem:[%s192 + $0x60] sm:$0xf]
      %v705 = vld [vmem:[%s192 + $0x64] sm:$0xf]
      %v706 = vld [vmem:[%s192 + $0x68] sm:$0xf]
      %v707 = vld [vmem:[%s192 + $0x6c] sm:$0xf]
      %v708 = vld [vmem:[%s192 + $0x70] sm:$0xf]
      %v709 = vld [vmem:[%s192 + $0x74] sm:$0xf]
      %v710 = vld [vmem:[%s192 + $0x78] sm:$0xf]
      %v711 = vld [vmem:[%s192 + $0x7c] sm:$0xf]
      %v712 = vld [vmem:[%s192 + $0x80] sm:$0xf]
      %v713 = vld [vmem:[%s192 + $0x84] sm:$0xf]
      %v714 = vld [vmem:[%s192 + $0x88] sm:$0xf]
      %v715 = vld [vmem:[%s192 + $0x8c] sm:$0xf]
      %v716 = vunpack.c.l.bf16 %v680
      %v717 = vunpack.c.l.bf16 %v681
      %v718 = vunpack.c.l.bf16 %v682
      %v719 = vunpack.c.l.bf16 %v683
      %v720 = vunpack.c.l.bf16 %v684
      %v721 = vunpack.c.l.bf16 %v685
      %v722 = vunpack.c.l.bf16 %v686
      %v723 = vunpack.c.l.bf16 %v687
      %v724 = vunpack.c.l.bf16 %v688
      %v725 = vunpack.c.l.bf16 %v689
      %v726 = vunpack.c.l.bf16 %v690
      %v727 = vunpack.c.l.bf16 %v691
      %v728 = vunpack.c.l.bf16 %v692
      %v729 = vunpack.c.l.bf16 %v693
      %v730 = vunpack.c.l.bf16 %v694
      %v731 = vunpack.c.l.bf16 %v695
      %v732 = vunpack.c.l.bf16 %v696
      %v733 = vunpack.c.l.bf16 %v697
      %v734 = vunpack.c.l.bf16 %v698
      %v735 = vunpack.c.l.bf16 %v699
      %v736 = vunpack.c.l.bf16 %v700
      %v737 = vunpack.c.l.bf16 %v701
      %v738 = vunpack.c.l.bf16 %v702
      %v739 = vunpack.c.l.bf16 %v703
      %v740 = vunpack.c.l.bf16 %v704
      %v741 = vunpack.c.l.bf16 %v705
      %v742 = vunpack.c.l.bf16 %v706
      %v743 = vunpack.c.l.bf16 %v707
      %v744 = vunpack.c.l.bf16 %v708
      %v745 = vunpack.c.l.bf16 %v709
      %v746 = vunpack.c.l.bf16 %v710
      %v747 = vunpack.c.l.bf16 %v711
      %v748 = vunpack.c.l.bf16 %v712
      %v749 = vunpack.c.l.bf16 %v713
      %v750 = vunpack.c.l.bf16 %v714
      %v751 = vunpack.c.l.bf16 %v715
      %v752 = vrot.slane %v716, 7
      %v753 = vrot.slane %v717, 7
      %v754 = vrot.slane %v718, 7
      %v755 = vrot.slane %v719, 7
      %v756 = vrot.slane %v720, 7
      %v757 = vrot.slane %v721, 7
      %v758 = vrot.slane %v722, 7
      %v759 = vrot.slane %v723, 7
      %v760 = vrot.slane %v724, 7
      %v761 = vrot.slane %v725, 7
      %v762 = vrot.slane %v726, 7
      %v763 = vrot.slane %v727, 7
      %v764 = vrot.slane %v728, 7
      %v765 = vrot.slane %v729, 7
      %v766 = vrot.slane %v730, 7
      %v767 = vrot.slane %v731, 7
      %v768 = vrot.slane %v732, 7
      %v769 = vrot.slane %v733, 7
      %v770 = vrot.slane %v734, 7
      %v771 = vrot.slane %v735, 7
      %v772 = vrot.slane %v736, 7
      %v773 = vrot.slane %v737, 7
      %v774 = vrot.slane %v738, 7
      %v775 = vrot.slane %v739, 7
      %v776 = vrot.slane %v740, 7
      %v777 = vrot.slane %v741, 7
      %v778 = vrot.slane %v742, 7
      %v779 = vrot.slane %v743, 7
      %v780 = vrot.slane %v744, 7
      %v781 = vrot.slane %v745, 7
      %v782 = vrot.slane %v746, 7
      %v783 = vrot.slane %v747, 7
      %vm784 = vcmp.lt.s32.totalorder %v200, 1
      %v785 = vsel %vm784, %v782, %v783
      %v786 = vsel %vm784, %v781, %v782
      %v787 = vsel %vm784, %v780, %v781
      %v788 = vsel %vm784, %v779, %v780
      %v789 = vsel %vm784, %v778, %v779
      %v790 = vsel %vm784, %v777, %v778
      %v791 = vsel %vm784, %v776, %v777
      %v792 = vsel %vm784, %v775, %v776
      %v793 = vsel %vm784, %v774, %v775
      %v794 = vsel %vm784, %v773, %v774
      %v795 = vsel %vm784, %v772, %v773
      %v796 = vsel %vm784, %v771, %v772
      %v797 = vsel %vm784, %v770, %v771
      %v798 = vsel %vm784, %v769, %v770
      %v799 = vsel %vm784, %v768, %v769
      %v800 = vsel %vm784, %v767, %v768
      %v801 = vsel %vm784, %v766, %v767
      %v802 = vsel %vm784, %v765, %v766
      %v803 = vsel %vm784, %v764, %v765
      %v804 = vsel %vm784, %v763, %v764
      %v805 = vsel %vm784, %v762, %v763
      %v806 = vsel %vm784, %v761, %v762
      %v807 = vsel %vm784, %v760, %v761
      %v808 = vsel %vm784, %v759, %v760
      %v809 = vsel %vm784, %v758, %v759
      %v810 = vsel %vm784, %v757, %v758
      %v811 = vsel %vm784, %v756, %v757
      %v812 = vsel %vm784, %v755, %v756
      %v813 = vsel %vm784, %v754, %v755
      %v814 = vsel %vm784, %v753, %v754
      %v815 = vsel %vm784, %v752, %v753
      %v816 = vsel %vm784, %v783, %v752
      %v817 = vsel %vm616, %v816, 0.0
      %v818 = vsel %vm617, %v815, 0.0
      %v819 = vsel %vm618, %v814, 0.0
      %v820 = vsel %vm619, %v813, 0.0
      %v821 = vsel %vm620, %v812, 0.0
      %v822 = vsel %vm621, %v811, 0.0
      %v823 = vsel %vm622, %v810, 0.0
      %v824 = vsel %vm623, %v809, 0.0
      %v825 = vsel %vm624, %v808, 0.0
      %v826 = vsel %vm625, %v807, 0.0
      %v827 = vsel %vm626, %v806, 0.0
      %v828 = vsel %vm627, %v805, 0.0
      %v829 = vsel %vm628, %v804, 0.0
      %v830 = vsel %vm629, %v803, 0.0
      %v831 = vsel %vm630, %v802, 0.0
      %v832 = vsel %vm631, %v801, 0.0
      %v833 = vsel %vm632, %v800, 0.0
      %v834 = vsel %vm633, %v799, 0.0
      %v835 = vsel %vm634, %v798, 0.0
      %v836 = vsel %vm635, %v797, 0.0
      %v837 = vsel %vm636, %v796, 0.0
      %v838 = vsel %vm637, %v795, 0.0
      %v839 = vsel %vm638, %v794, 0.0
      %v840 = vsel %vm639, %v793, 0.0
      %v841 = vsel %vm640, %v792, 0.0
      %v842 = vsel %vm641, %v791, 0.0
      %v843 = vsel %vm642, %v790, 0.0
      %v844 = vsel %vm643, %v789, 0.0
      %v845 = vsel %vm644, %v788, 0.0
      %v846 = vsel %vm645, %v787, 0.0
      %v847 = vsel %vm646, %v786, 0.0
      %v848 = vsel %vm647, %v785, 0.0
      %v849 = vrot.slane %v716, 1
      %v850 = vrot.slane %v717, 1
      %v851 = vrot.slane %v718, 1
      %v852 = vrot.slane %v719, 1
      %v853 = vrot.slane %v720, 1
      %v854 = vrot.slane %v721, 1
      %v855 = vrot.slane %v722, 1
      %v856 = vrot.slane %v723, 1
      %v857 = vrot.slane %v724, 1
      %v858 = vrot.slane %v725, 1
      %v859 = vrot.slane %v726, 1
      %v860 = vrot.slane %v727, 1
      %v861 = vrot.slane %v728, 1
      %v862 = vrot.slane %v729, 1
      %v863 = vrot.slane %v730, 1
      %v864 = vrot.slane %v731, 1
      %v865 = vrot.slane %v732, 1
      %v866 = vrot.slane %v733, 1
      %v867 = vrot.slane %v734, 1
      %v868 = vrot.slane %v735, 1
      %v869 = vrot.slane %v736, 1
      %v870 = vrot.slane %v737, 1
      %v871 = vrot.slane %v738, 1
      %v872 = vrot.slane %v739, 1
      %v873 = vrot.slane %v740, 1
      %v874 = vrot.slane %v741, 1
      %v875 = vrot.slane %v742, 1
      %v876 = vrot.slane %v743, 1
      %v877 = vrot.slane %v744, 1
      %v878 = vrot.slane %v745, 1
      %v879 = vrot.slane %v746, 1
      %v880 = vrot.slane %v747, 1
      %vm881 = vcmp.lt.s32.totalorder %v200, 7
      %v882 = vsel %vm881, %v879, %v880
      %v883 = vsel %vm881, %v878, %v879
      %v884 = vsel %vm881, %v877, %v878
      %v885 = vsel %vm881, %v876, %v877
      %v886 = vsel %vm881, %v875, %v876
      %v887 = vsel %vm881, %v874, %v875
      %v888 = vsel %vm881, %v873, %v874
      %v889 = vsel %vm881, %v872, %v873
      %v890 = vsel %vm881, %v871, %v872
      %v891 = vsel %vm881, %v870, %v871
      %v892 = vsel %vm881, %v869, %v870
      %v893 = vsel %vm881, %v868, %v869
      %v894 = vsel %vm881, %v867, %v868
      %v895 = vsel %vm881, %v866, %v867
      %v896 = vsel %vm881, %v865, %v866
      %v897 = vsel %vm881, %v864, %v865
      %v898 = vsel %vm881, %v863, %v864
      %v899 = vsel %vm881, %v862, %v863
      %v900 = vsel %vm881, %v861, %v862
      %v901 = vsel %vm881, %v860, %v861
      %v902 = vsel %vm881, %v859, %v860
      %v903 = vsel %vm881, %v858, %v859
      %v904 = vsel %vm881, %v857, %v858
      %v905 = vsel %vm881, %v856, %v857
      %v906 = vsel %vm881, %v855, %v856
      %v907 = vsel %vm881, %v854, %v855
      %v908 = vsel %vm881, %v853, %v854
      %v909 = vsel %vm881, %v852, %v853
      %v910 = vsel %vm881, %v851, %v852
      %v911 = vsel %vm881, %v850, %v851
      %v912 = vsel %vm881, %v849, %v850
      %v913 = vsel %vm881, %v880, %v849
      %v914 = vsel %vm648, %v912, 0.0
      %v915 = vsel %vm649, %v911, 0.0
      %v916 = vsel %vm650, %v910, 0.0
      %v917 = vsel %vm651, %v909, 0.0
      %v918 = vsel %vm652, %v908, 0.0
      %v919 = vsel %vm653, %v907, 0.0
      %v920 = vsel %vm654, %v906, 0.0
      %v921 = vsel %vm655, %v905, 0.0
      %v922 = vsel %vm656, %v904, 0.0
      %v923 = vsel %vm657, %v903, 0.0
      %v924 = vsel %vm658, %v902, 0.0
      %v925 = vsel %vm659, %v901, 0.0
      %v926 = vsel %vm660, %v900, 0.0
      %v927 = vsel %vm661, %v899, 0.0
      %v928 = vsel %vm662, %v898, 0.0
      %v929 = vsel %vm663, %v897, 0.0
      %v930 = vsel %vm664, %v896, 0.0
      %v931 = vsel %vm665, %v895, 0.0
      %v932 = vsel %vm666, %v894, 0.0
      %v933 = vsel %vm667, %v893, 0.0
      %v934 = vsel %vm668, %v892, 0.0
      %v935 = vsel %vm669, %v891, 0.0
      %v936 = vsel %vm670, %v890, 0.0
      %v937 = vsel %vm671, %v889, 0.0
      %v938 = vsel %vm672, %v888, 0.0
      %v939 = vsel %vm673, %v887, 0.0
      %v940 = vsel %vm674, %v886, 0.0
      %v941 = vsel %vm675, %v885, 0.0
      %v942 = vsel %vm676, %v884, 0.0
      %v943 = vsel %vm677, %v883, 0.0
      %v944 = vsel %vm678, %v882, 0.0
      %v945 = vsel %vm679, %v913, 0.0
      %v946 = vpack.c.bf16 %v818, %v817
      %v947 = vpack.c.bf16 %v820, %v819
      %v948 = vpack.c.bf16 %v822, %v821
      %v949 = vpack.c.bf16 %v824, %v823
      %v950 = vpack.c.bf16 %v826, %v825
      %v951 = vpack.c.bf16 %v828, %v827
      %v952 = vpack.c.bf16 %v830, %v829
      %v953 = vpack.c.bf16 %v832, %v831
      %v954 = vpack.c.bf16 %v834, %v833
      %v955 = vpack.c.bf16 %v836, %v835
      %v956 = vpack.c.bf16 %v838, %v837
      %v957 = vpack.c.bf16 %v840, %v839
      %v958 = vpack.c.bf16 %v842, %v841
      %v959 = vpack.c.bf16 %v844, %v843
      %v960 = vpack.c.bf16 %v846, %v845
      %v961 = vpack.c.bf16 %v848, %v847
      %v962 = vpack.c.bf16 %v717, %v716
      %v963 = vpack.c.bf16 %v719, %v718
      %v964 = vpack.c.bf16 %v721, %v720
      %v965 = vpack.c.bf16 %v723, %v722
      %v966 = vpack.c.bf16 %v725, %v724
      %v967 = vpack.c.bf16 %v727, %v726
      %v968 = vpack.c.bf16 %v729, %v728
      %v969 = vpack.c.bf16 %v731, %v730
      %v970 = vpack.c.bf16 %v733, %v732
      %v971 = vpack.c.bf16 %v735, %v734
      %v972 = vpack.c.bf16 %v737, %v736
      %v973 = vpack.c.bf16 %v739, %v738
      %v974 = vpack.c.bf16 %v741, %v740
      %v975 = vpack.c.bf16 %v743, %v742
      %v976 = vpack.c.bf16 %v745, %v744
      %v977 = vpack.c.bf16 %v747, %v746
      %v978 = vpack.c.bf16 %v915, %v914
      %v979 = vpack.c.bf16 %v917, %v916
      %v980 = vpack.c.bf16 %v919, %v918
      %v981 = vpack.c.bf16 %v921, %v920
      %v982 = vpack.c.bf16 %v923, %v922
      %v983 = vpack.c.bf16 %v925, %v924
      %v984 = vpack.c.bf16 %v927, %v926
      %v985 = vpack.c.bf16 %v929, %v928
      %v986 = vpack.c.bf16 %v931, %v930
      %v987 = vpack.c.bf16 %v933, %v932
      %v988 = vpack.c.bf16 %v935, %v934
      %v989 = vpack.c.bf16 %v937, %v936
      %v990 = vpack.c.bf16 %v939, %v938
      %v991 = vpack.c.bf16 %v941, %v940
      %v992 = vpack.c.bf16 %v943, %v942
      %v993 = vpack.c.bf16 %v945, %v944
      %v994 = vrot.slane %v748, 7
      %v995 = vrot.slane %v749, 7
      %v996 = vsel %vm784, %v994, %v995
      %v997 = vsel %vm784, %v783, %v994
      %v998 = vsel %vm784, %v995, %v754
      %v999 = vsel %vm616, %v998, 0.0
      %v1000 = vsel %vm617, %v813, 0.0
      %v1001 = vsel %vm618, %v812, 0.0
      %v1002 = vsel %vm619, %v811, 0.0
      %v1003 = vsel %vm620, %v810, 0.0
      %v1004 = vsel %vm621, %v809, 0.0
      %v1005 = vsel %vm622, %v808, 0.0
      %v1006 = vsel %vm623, %v807, 0.0
      %v1007 = vsel %vm624, %v806, 0.0
      %v1008 = vsel %vm625, %v805, 0.0
      %v1009 = vsel %vm626, %v804, 0.0
      %v1010 = vsel %vm627, %v803, 0.0
      %v1011 = vsel %vm628, %v802, 0.0
      %v1012 = vsel %vm629, %v801, 0.0
      %v1013 = vsel %vm630, %v800, 0.0
      %v1014 = vsel %vm631, %v799, 0.0
      %v1015 = vsel %vm632, %v798, 0.0
      %v1016 = vsel %vm633, %v797, 0.0
      %v1017 = vsel %vm634, %v796, 0.0
      %v1018 = vsel %vm635, %v795, 0.0
      %v1019 = vsel %vm636, %v794, 0.0
      %v1020 = vsel %vm637, %v793, 0.0
      %v1021 = vsel %vm638, %v792, 0.0
      %v1022 = vsel %vm639, %v791, 0.0
      %v1023 = vsel %vm640, %v790, 0.0
      %v1024 = vsel %vm641, %v789, 0.0
      %v1025 = vsel %vm642, %v788, 0.0
      %v1026 = vsel %vm643, %v787, 0.0
      %v1027 = vsel %vm644, %v786, 0.0
      %v1028 = vsel %vm645, %v785, 0.0
      %v1029 = vsel %vm646, %v997, 0.0
      %v1030 = vsel %vm647, %v996, 0.0
      %v1031 = vrot.slane %v748, 1
      %v1032 = vrot.slane %v749, 1
      %v1033 = vsel %vm881, %v1031, %v1032
      %v1034 = vsel %vm881, %v880, %v1031
      %v1035 = vsel %vm881, %v1032, %v851
      %v1036 = vsel %vm648, %v910, 0.0
      %v1037 = vsel %vm649, %v909, 0.0
      %v1038 = vsel %vm650, %v908, 0.0
      %v1039 = vsel %vm651, %v907, 0.0
      %v1040 = vsel %vm652, %v906, 0.0
      %v1041 = vsel %vm653, %v905, 0.0
      %v1042 = vsel %vm654, %v904, 0.0
      %v1043 = vsel %vm655, %v903, 0.0
      %v1044 = vsel %vm656, %v902, 0.0
      %v1045 = vsel %vm657, %v901, 0.0
      %v1046 = vsel %vm658, %v900, 0.0
      %v1047 = vsel %vm659, %v899, 0.0
      %v1048 = vsel %vm660, %v898, 0.0
      %v1049 = vsel %vm661, %v897, 0.0
      %v1050 = vsel %vm662, %v896, 0.0
      %v1051 = vsel %vm663, %v895, 0.0
      %v1052 = vsel %vm664, %v894, 0.0
      %v1053 = vsel %vm665, %v893, 0.0
      %v1054 = vsel %vm666, %v892, 0.0
      %v1055 = vsel %vm667, %v891, 0.0
      %v1056 = vsel %vm668, %v890, 0.0
      %v1057 = vsel %vm669, %v889, 0.0
      %v1058 = vsel %vm670, %v888, 0.0
      %v1059 = vsel %vm671, %v887, 0.0
      %v1060 = vsel %vm672, %v886, 0.0
      %v1061 = vsel %vm673, %v885, 0.0
      %v1062 = vsel %vm674, %v884, 0.0
      %v1063 = vsel %vm675, %v883, 0.0
      %v1064 = vsel %vm676, %v882, 0.0
      %v1065 = vsel %vm677, %v1034, 0.0
      %v1066 = vsel %vm678, %v1033, 0.0
      %v1067 = vsel %vm679, %v1035, 0.0
      %v1068 = vpack.c.bf16 %v1000, %v999
      %v1069 = vpack.c.bf16 %v1002, %v1001
      %v1070 = vpack.c.bf16 %v1004, %v1003
      %v1071 = vpack.c.bf16 %v1006, %v1005
      %v1072 = vpack.c.bf16 %v1008, %v1007
      %v1073 = vpack.c.bf16 %v1010, %v1009
      %v1074 = vpack.c.bf16 %v1012, %v1011
      %v1075 = vpack.c.bf16 %v1014, %v1013
      %v1076 = vpack.c.bf16 %v1016, %v1015
      %v1077 = vpack.c.bf16 %v1018, %v1017
      %v1078 = vpack.c.bf16 %v1020, %v1019
      %v1079 = vpack.c.bf16 %v1022, %v1021
      %v1080 = vpack.c.bf16 %v1024, %v1023
      %v1081 = vpack.c.bf16 %v1026, %v1025
      %v1082 = vpack.c.bf16 %v1028, %v1027
      %v1083 = vpack.c.bf16 %v1030, %v1029
      %v1084 = vpack.c.bf16 %v749, %v748
      %v1085 = vpack.c.bf16 %v1037, %v1036
      %v1086 = vpack.c.bf16 %v1039, %v1038
      %v1087 = vpack.c.bf16 %v1041, %v1040
      %v1088 = vpack.c.bf16 %v1043, %v1042
      %v1089 = vpack.c.bf16 %v1045, %v1044
      %v1090 = vpack.c.bf16 %v1047, %v1046
      %v1091 = vpack.c.bf16 %v1049, %v1048
      %v1092 = vpack.c.bf16 %v1051, %v1050
      %v1093 = vpack.c.bf16 %v1053, %v1052
      %v1094 = vpack.c.bf16 %v1055, %v1054
      %v1095 = vpack.c.bf16 %v1057, %v1056
      %v1096 = vpack.c.bf16 %v1059, %v1058
      %v1097 = vpack.c.bf16 %v1061, %v1060
      %v1098 = vpack.c.bf16 %v1063, %v1062
      %v1099 = vpack.c.bf16 %v1065, %v1064
      %v1100 = vpack.c.bf16 %v1067, %v1066
      %v1101 = vrot.slane %v750, 7
      %v1102 = vrot.slane %v751, 7
      %v1103 = vsel %vm784, %v1101, %v1102
      %v1104 = vsel %vm784, %v995, %v1101
      %v1105 = vsel %vm784, %v1102, %v756
      %v1106 = vsel %vm616, %v1105, 0.0
      %v1107 = vsel %vm617, %v811, 0.0
      %v1108 = vsel %vm618, %v810, 0.0
      %v1109 = vsel %vm619, %v809, 0.0
      %v1110 = vsel %vm620, %v808, 0.0
      %v1111 = vsel %vm621, %v807, 0.0
      %v1112 = vsel %vm622, %v806, 0.0
      %v1113 = vsel %vm623, %v805, 0.0
      %v1114 = vsel %vm624, %v804, 0.0
      %v1115 = vsel %vm625, %v803, 0.0
      %v1116 = vsel %vm626, %v802, 0.0
      %v1117 = vsel %vm627, %v801, 0.0
      %v1118 = vsel %vm628, %v800, 0.0
      %v1119 = vsel %vm629, %v799, 0.0
      %v1120 = vsel %vm630, %v798, 0.0
      %v1121 = vsel %vm631, %v797, 0.0
      %v1122 = vsel %vm632, %v796, 0.0
      %v1123 = vsel %vm633, %v795, 0.0
      %v1124 = vsel %vm634, %v794, 0.0
      %v1125 = vsel %vm635, %v793, 0.0
      %v1126 = vsel %vm636, %v792, 0.0
      %v1127 = vsel %vm637, %v791, 0.0
      %v1128 = vsel %vm638, %v790, 0.0
      %v1129 = vsel %vm639, %v789, 0.0
      %v1130 = vsel %vm640, %v788, 0.0
      %v1131 = vsel %vm641, %v787, 0.0
      %v1132 = vsel %vm642, %v786, 0.0
      %v1133 = vsel %vm643, %v785, 0.0
      %v1134 = vsel %vm644, %v997, 0.0
      %v1135 = vsel %vm645, %v996, 0.0
      %v1136 = vsel %vm646, %v1104, 0.0
      %v1137 = vsel %vm647, %v1103, 0.0
      %v1138 = vrot.slane %v750, 1
      %v1139 = vrot.slane %v751, 1
      %v1140 = vsel %vm881, %v1138, %v1139
      %v1141 = vsel %vm881, %v1032, %v1138
      %v1142 = vsel %vm881, %v1139, %v853
      %v1143 = vsel %vm648, %v908, 0.0
      %v1144 = vsel %vm649, %v907, 0.0
      %v1145 = vsel %vm650, %v906, 0.0
      %v1146 = vsel %vm651, %v905, 0.0
      %v1147 = vsel %vm652, %v904, 0.0
      %v1148 = vsel %vm653, %v903, 0.0
      %v1149 = vsel %vm654, %v902, 0.0
      %v1150 = vsel %vm655, %v901, 0.0
      %v1151 = vsel %vm656, %v900, 0.0
      %v1152 = vsel %vm657, %v899, 0.0
      %v1153 = vsel %vm658, %v898, 0.0
      %v1154 = vsel %vm659, %v897, 0.0
      %v1155 = vsel %vm660, %v896, 0.0
      %v1156 = vsel %vm661, %v895, 0.0
      %v1157 = vsel %vm662, %v894, 0.0
      %v1158 = vsel %vm663, %v893, 0.0
      %v1159 = vsel %vm664, %v892, 0.0
      %v1160 = vsel %vm665, %v891, 0.0
      %v1161 = vsel %vm666, %v890, 0.0
      %v1162 = vsel %vm667, %v889, 0.0
      %v1163 = vsel %vm668, %v888, 0.0
      %v1164 = vsel %vm669, %v887, 0.0
      %v1165 = vsel %vm670, %v886, 0.0
      %v1166 = vsel %vm671, %v885, 0.0
      %v1167 = vsel %vm672, %v884, 0.0
      %v1168 = vsel %vm673, %v883, 0.0
      %v1169 = vsel %vm674, %v882, 0.0
      %v1170 = vsel %vm675, %v1034, 0.0
      %v1171 = vsel %vm676, %v1033, 0.0
      %v1172 = vsel %vm677, %v1141, 0.0
      %v1173 = vsel %vm678, %v1140, 0.0
      %v1174 = vsel %vm679, %v1142, 0.0
      %v1175 = vpack.c.bf16 %v1107, %v1106
      %v1176 = vpack.c.bf16 %v1109, %v1108
      %v1177 = vpack.c.bf16 %v1111, %v1110
      %v1178 = vpack.c.bf16 %v1113, %v1112
      %v1179 = vpack.c.bf16 %v1115, %v1114
      %v1180 = vpack.c.bf16 %v1117, %v1116
      %v1181 = vpack.c.bf16 %v1119, %v1118
      %v1182 = vpack.c.bf16 %v1121, %v1120
      %v1183 = vpack.c.bf16 %v1123, %v1122
      %v1184 = vpack.c.bf16 %v1125, %v1124
      %v1185 = vpack.c.bf16 %v1127, %v1126
      %v1186 = vpack.c.bf16 %v1129, %v1128
      %v1187 = vpack.c.bf16 %v1131, %v1130
      %v1188 = vpack.c.bf16 %v1133, %v1132
      %v1189 = vpack.c.bf16 %v1135, %v1134
      %v1190 = vpack.c.bf16 %v1137, %v1136
      %v1191 = vpack.c.bf16 %v751, %v750
      %v1192 = vpack.c.bf16 %v1144, %v1143
      %v1193 = vpack.c.bf16 %v1146, %v1145
      %v1194 = vpack.c.bf16 %v1148, %v1147
      %v1195 = vpack.c.bf16 %v1150, %v1149
      %v1196 = vpack.c.bf16 %v1152, %v1151
      %v1197 = vpack.c.bf16 %v1154, %v1153
      %v1198 = vpack.c.bf16 %v1156, %v1155
      %v1199 = vpack.c.bf16 %v1158, %v1157
      %v1200 = vpack.c.bf16 %v1160, %v1159
      %v1201 = vpack.c.bf16 %v1162, %v1161
      %v1202 = vpack.c.bf16 %v1164, %v1163
      %v1203 = vpack.c.bf16 %v1166, %v1165
      %v1204 = vpack.c.bf16 %v1168, %v1167
      %v1205 = vpack.c.bf16 %v1170, %v1169
      %v1206 = vpack.c.bf16 %v1172, %v1171
      %v1207 = vpack.c.bf16 %v1174, %v1173
      %v1208 = vld [vmem:[%s1] sm:$0xf]
      %v1209 = vld [vmem:[%s1 + $0x4] sm:$0xf]
      %v1210 = vld [vmem:[%s1 + $0x8] sm:$0xf]
      %v1211 = vld [vmem:[%s1 + $0xc] sm:$0xf]
      %v1212 = vld [vmem:[%s1 + $0x10] sm:$0xf]
      %v1213 = vld [vmem:[%s1 + $0x14] sm:$0xf]
      %v1214 = vld [vmem:[%s1 + $0x18] sm:$0xf]
      %v1215 = vld [vmem:[%s1 + $0x1c] sm:$0xf]
      %v1216 = vld [vmem:[%s1 + $0x20] sm:$0xf]
      %v1217 = vld [vmem:[%s1 + $0x24] sm:$0xf]
      %v1218 = vld [vmem:[%s1 + $0x28] sm:$0xf]
      %v1219 = vld [vmem:[%s1 + $0x2c] sm:$0xf]
      %v1220 = vld [vmem:[%s1 + $0x30] sm:$0xf]
      %v1221 = vld [vmem:[%s1 + $0x34] sm:$0xf]
      %v1222 = vld [vmem:[%s1 + $0x38] sm:$0xf]
      %v1223 = vld [vmem:[%s1 + $0x3c] sm:$0xf]
      %v1224 = vld [vmem:[%s1 + $0x40] sm:$0xf]
      %v1225 = vld [vmem:[%s1 + $0x44] sm:$0xf]
      %v1226 = vld [vmem:[%s1 + $0x48] sm:$0xf]
      %v1227 = vld [vmem:[%s1 + $0x4c] sm:$0xf]
      %v1228 = vld [vmem:[%s1 + $0x50] sm:$0xf]
      %v1229 = vld [vmem:[%s1 + $0x54] sm:$0xf]
      %v1230 = vld [vmem:[%s1 + $0x58] sm:$0xf]
      %v1231 = vld [vmem:[%s1 + $0x5c] sm:$0xf]
      %v1232 = vld [vmem:[%s1 + $0x60] sm:$0xf]
      %v1233 = vld [vmem:[%s1 + $0x64] sm:$0xf]
      %v1234 = vld [vmem:[%s1 + $0x68] sm:$0xf]
      %v1235 = vld [vmem:[%s1 + $0x6c] sm:$0xf]
      %v1236 = vld [vmem:[%s1 + $0x70] sm:$0xf]
      %v1237 = vld [vmem:[%s1 + $0x74] sm:$0xf]
      %v1238 = vld [vmem:[%s1 + $0x78] sm:$0xf]
      %v1239 = vld [vmem:[%s1 + $0x7c] sm:$0xf]
      %v1240 = vld [vmem:[%s1 + $0x80] sm:$0xf]
      %v1241 = vld [vmem:[%s1 + $0x84] sm:$0xf]
      %v1242 = vld [vmem:[%s1 + $0x88] sm:$0xf]
      %v1243 = vld [vmem:[%s1 + $0x8c] sm:$0xf]
      %v1244 = vld [vmem:[%s1 + $0x90] sm:$0xf]
      %v1245 = vld [vmem:[%s1 + $0x94] sm:$0xf]
      %v1246 = vld [vmem:[%s1 + $0x98] sm:$0xf]
      %v1247 = vld [vmem:[%s1 + $0x9c] sm:$0xf]
      %v1248 = vld [vmem:[%s1 + $0xa0] sm:$0xf]
      %v1249 = vld [vmem:[%s1 + $0xa4] sm:$0xf]
      %v1250 = vld [vmem:[%s1 + $0xa8] sm:$0xf]
      %v1251 = vld [vmem:[%s1 + $0xac] sm:$0xf]
      %v1252 = vld [vmem:[%s1 + $0xb0] sm:$0xf]
      %v1253 = vld [vmem:[%s1 + $0xb4] sm:$0xf]
      %v1254 = vld [vmem:[%s1 + $0xb8] sm:$0xf]
      %v1255 = vld [vmem:[%s1 + $0xbc] sm:$0xf]
      %v1256 = vld [vmem:[%s1 + $0xc0] sm:$0xf]
      %v1257 = vld [vmem:[%s1 + $0xc4] sm:$0xf]
      %v1258 = vld [vmem:[%s1 + $0xc8] sm:$0xf]
      %v1259 = vld [vmem:[%s1 + $0xcc] sm:$0xf]
      %v1260 = vld [vmem:[%s1 + $0xd0] sm:$0xf]
      %v1261 = vld [vmem:[%s1 + $0xd4] sm:$0xf]
      %v1262 = vld [vmem:[%s1 + $0xd8] sm:$0xf]
      %v1263 = vld [vmem:[%s1 + $0xdc] sm:$0xf]
      %v1264 = vld [vmem:[%s1 + $0xe0] sm:$0xf]
      %v1265 = vld [vmem:[%s1 + $0xe4] sm:$0xf]
      %v1266 = vld [vmem:[%s1 + $0xe8] sm:$0xf]
      %v1267 = vld [vmem:[%s1 + $0xec] sm:$0xf]
      %v1268 = vld [vmem:[%s1 + $0xf0] sm:$0xf]
      %v1269 = vld [vmem:[%s1 + $0xf4] sm:$0xf]
      %v1270 = vld [vmem:[%s1 + $0xf8] sm:$0xf]
      %v1271 = vld [vmem:[%s1 + $0xfc] sm:$0xf]
      %v1272 = vld [vmem:[%s1 + $0x100] sm:$0xf]
      %v1273 = vld [vmem:[%s1 + $0x104] sm:$0xf]
      %v1274 = vld [vmem:[%s1 + $0x108] sm:$0xf]
      %v1275 = vld [vmem:[%s1 + $0x10c] sm:$0xf]
      %v1276 = vld [vmem:[%s1 + $0x110] sm:$0xf]
      %v1277 = vld [vmem:[%s1 + $0x114] sm:$0xf]
      %v1278 = vld [vmem:[%s1 + $0x118] sm:$0xf]
      %v1279 = vld [vmem:[%s1 + $0x11c] sm:$0xf]
      %v1280 = vld [vmem:[%s1 + $0x120] sm:$0xf]
      %v1281 = vld [vmem:[%s1 + $0x124] sm:$0xf]
      %v1282 = vld [vmem:[%s1 + $0x128] sm:$0xf]
      %v1283 = vld [vmem:[%s1 + $0x12c] sm:$0xf]
      %v1284 = vld [vmem:[%s1 + $0x130] sm:$0xf]
      %v1285 = vld [vmem:[%s1 + $0x134] sm:$0xf]
      %v1286 = vld [vmem:[%s1 + $0x138] sm:$0xf]
      %v1287 = vld [vmem:[%s1 + $0x13c] sm:$0xf]
      %v1288 = vld [vmem:[%s1 + $0x140] sm:$0xf]
      %v1289 = vld [vmem:[%s1 + $0x144] sm:$0xf]
      %v1290 = vld [vmem:[%s1 + $0x148] sm:$0xf]
      %v1291 = vld [vmem:[%s1 + $0x14c] sm:$0xf]
      %v1292 = vld [vmem:[%s1 + $0x150] sm:$0xf]
      %v1293 = vld [vmem:[%s1 + $0x154] sm:$0xf]
      %v1294 = vld [vmem:[%s1 + $0x158] sm:$0xf]
      %v1295 = vld [vmem:[%s1 + $0x15c] sm:$0xf]
      %v1296 = vld [vmem:[%s1 + $0x160] sm:$0xf]
      %v1297 = vld [vmem:[%s1 + $0x164] sm:$0xf]
      %v1298 = vld [vmem:[%s1 + $0x168] sm:$0xf]
      %v1299 = vld [vmem:[%s1 + $0x16c] sm:$0xf]
      %v1300 = vld [vmem:[%s1 + $0x170] sm:$0xf]
      %v1301 = vld [vmem:[%s1 + $0x174] sm:$0xf]
      %v1302 = vld [vmem:[%s1 + $0x178] sm:$0xf]
      %v1303 = vld [vmem:[%s1 + $0x17c] sm:$0xf]
      %v1304 = vld [vmem:[%s1 + $0x180] sm:$0xf]
      %v1305 = vld [vmem:[%s1 + $0x184] sm:$0xf]
      %v1306 = vld [vmem:[%s1 + $0x188] sm:$0xf]
      %v1307 = vld [vmem:[%s1 + $0x18c] sm:$0xf]
      %v1308 = vld [vmem:[%s1 + $0x190] sm:$0xf]
      %v1309 = vld [vmem:[%s1 + $0x194] sm:$0xf]
      %v1310 = vld [vmem:[%s1 + $0x198] sm:$0xf]
      %v1311 = vld [vmem:[%s1 + $0x19c] sm:$0xf]
      %v1312 = vld [vmem:[%s1 + $0x1a0] sm:$0xf]
      %v1313 = vld [vmem:[%s1 + $0x1a4] sm:$0xf]
      %v1314 = vld [vmem:[%s1 + $0x1a8] sm:$0xf]
      %v1315 = vld [vmem:[%s1 + $0x1ac] sm:$0xf]
      %v1316 = vld [vmem:[%s1 + $0x1b0] sm:$0xf]
      %v1317 = vld [vmem:[%s1 + $0x1b4] sm:$0xf]
      %v1318 = vld [vmem:[%s1 + $0x1b8] sm:$0xf]
      %v1319 = vld [vmem:[%s1 + $0x1bc] sm:$0xf]
      %v1320 = vld [vmem:[%s1 + $0x1c0] sm:$0xf]
      %v1321 = vld [vmem:[%s1 + $0x1c4] sm:$0xf]
      %v1322 = vld [vmem:[%s1 + $0x1c8] sm:$0xf]
      %v1323 = vld [vmem:[%s1 + $0x1cc] sm:$0xf]
      %v1324 = vld [vmem:[%s1 + $0x1d0] sm:$0xf]
      %v1325 = vld [vmem:[%s1 + $0x1d4] sm:$0xf]
      %v1326 = vld [vmem:[%s1 + $0x1d8] sm:$0xf]
      %v1327 = vld [vmem:[%s1 + $0x1dc] sm:$0xf]
      %v1328 = vld [vmem:[%s1 + $0x1e0] sm:$0xf]
      %v1329 = vld [vmem:[%s1 + $0x1e4] sm:$0xf]
      %v1330 = vld [vmem:[%s1 + $0x1e8] sm:$0xf]
      %v1331 = vld [vmem:[%s1 + $0x1ec] sm:$0xf]
      %v1332 = vld [vmem:[%s1 + $0x1f0] sm:$0xf]
      %v1333 = vld [vmem:[%s1 + $0x1f4] sm:$0xf]
      %v1334 = vld [vmem:[%s1 + $0x1f8] sm:$0xf]
      %v1335 = vld [vmem:[%s1 + $0x1fc] sm:$0xf]
      %v1336 = vld [vmem:[%s1 + $0x200] sm:$0xf]
      %v1337 = vld [vmem:[%s1 + $0x204] sm:$0xf]
      %v1338 = vld [vmem:[%s1 + $0x208] sm:$0xf]
      %v1339 = vld [vmem:[%s1 + $0x20c] sm:$0xf]
      %v1340 = vld [vmem:[%s1 + $0x210] sm:$0xf]
      %v1341 = vld [vmem:[%s1 + $0x214] sm:$0xf]
      %v1342 = vld [vmem:[%s1 + $0x218] sm:$0xf]
      %v1343 = vld [vmem:[%s1 + $0x21c] sm:$0xf]
      %v1344 = vld [vmem:[%s1 + $0x220] sm:$0xf]
      %v1345 = vld [vmem:[%s1 + $0x224] sm:$0xf]
      %v1346 = vld [vmem:[%s1 + $0x228] sm:$0xf]
      %v1347 = vld [vmem:[%s1 + $0x22c] sm:$0xf]
      %v1348 = vld [vmem:[%s1 + $0x230] sm:$0xf]
      %v1349 = vld [vmem:[%s1 + $0x234] sm:$0xf]
      %v1350 = vld [vmem:[%s1 + $0x238] sm:$0xf]
      %v1351 = vld [vmem:[%s1 + $0x23c] sm:$0xf]
      %v1352 = vld [vmem:[%s3] sm:$0x1]
      %v1353 = vlaneseq
      %v1354 = vshrl.u32 %v1353, 7
      %v1355 = vsub.s32 0, %v1354
      %v1356 = vrot.slane %v1352, %v1355
      %v1501 = vunpack.c.l.b16 %v1208
      %v1502 = vunpack.c.l.b16 %v1209
      %v1503 = vunpack.c.l.b16 %v1210
      %v1504 = vunpack.c.l.b16 %v1211
      %v1505 = vunpack.c.l.b16 %v1212
      %v1506 = vunpack.c.l.b16 %v1213
      %v1507 = vunpack.c.l.b16 %v1214
      %v1508 = vunpack.c.l.b16 %v1215
      %v1509 = vunpack.c.l.b16 %v1216
      %v1510 = vunpack.c.l.b16 %v1217
      %v1511 = vunpack.c.l.b16 %v1218
      %v1512 = vunpack.c.l.b16 %v1219
      %v1513 = vunpack.c.l.b16 %v1220
      %v1514 = vunpack.c.l.b16 %v1221
      %v1515 = vunpack.c.l.b16 %v1222
      %v1516 = vunpack.c.l.b16 %v1223
      %v1517 = vunpack.c.l.b16 %v1224
      %v1518 = vunpack.c.l.b16 %v1225
      %v1519 = vunpack.c.l.b16 %v1226
      %v1520 = vunpack.c.l.b16 %v1227
      %v1521 = vunpack.c.l.b16 %v1228
      %v1522 = vunpack.c.l.b16 %v1229
      %v1523 = vunpack.c.l.b16 %v1230
      %v1524 = vunpack.c.l.b16 %v1231
      %v1525 = vunpack.c.l.b16 %v1232
      %v1526 = vunpack.c.l.b16 %v1233
      %v1527 = vunpack.c.l.b16 %v1234
      %v1528 = vunpack.c.l.b16 %v1235
      %v1529 = vunpack.c.l.b16 %v1236
      %v1530 = vunpack.c.l.b16 %v1237
      %v1531 = vunpack.c.l.b16 %v1238
      %v1532 = vunpack.c.l.b16 %v1239
      %v1533 = vunpack.c.l.b16 %v1240
      %v1534 = vunpack.c.l.b16 %v1241
      %v1535 = vunpack.c.l.b16 %v1242
      %v1536 = vunpack.c.l.b16 %v1243
      %v1537 = vunpack.c.l.b16 %v1244
      %v1538 = vunpack.c.l.b16 %v1245
      %v1539 = vunpack.c.l.b16 %v1246
      %v1540 = vunpack.c.l.b16 %v1247
      %v1541 = vunpack.c.l.b16 %v1248
      %v1542 = vunpack.c.l.b16 %v1249
      %v1543 = vunpack.c.l.b16 %v1250
      %v1544 = vunpack.c.l.b16 %v1251
      %v1545 = vunpack.c.l.b16 %v1252
      %v1546 = vunpack.c.l.b16 %v1253
      %v1547 = vunpack.c.l.b16 %v1254
      %v1548 = vunpack.c.l.b16 %v1255
      %v1549 = vunpack.c.l.b16 %v1256
      %v1550 = vunpack.c.l.b16 %v1257
      %v1551 = vunpack.c.l.b16 %v1258
      %v1552 = vunpack.c.l.b16 %v1259
      %v1553 = vunpack.c.l.b16 %v1260
      %v1554 = vunpack.c.l.b16 %v1261
      %v1555 = vunpack.c.l.b16 %v1262
      %v1556 = vunpack.c.l.b16 %v1263
      %v1557 = vunpack.c.l.b16 %v1264
      %v1558 = vunpack.c.l.b16 %v1265
      %v1559 = vunpack.c.l.b16 %v1266
      %v1560 = vunpack.c.l.b16 %v1267
      %v1561 = vunpack.c.l.b16 %v1268
      %v1562 = vunpack.c.l.b16 %v1269
      %v1563 = vunpack.c.l.b16 %v1270
      %v1564 = vunpack.c.l.b16 %v1271
      %v1565 = vunpack.c.l.b16 %v1272
      %v1566 = vunpack.c.l.b16 %v1273
      %v1567 = vunpack.c.l.b16 %v1274
      %v1568 = vunpack.c.l.b16 %v1275
      %v1569 = vunpack.c.l.b16 %v1276
      %v1570 = vunpack.c.l.b16 %v1277
      %v1571 = vunpack.c.l.b16 %v1278
      %v1572 = vunpack.c.l.b16 %v1279
      %v1573 = vunpack.c.l.b16 %v1280
      %v1574 = vunpack.c.l.b16 %v1281
      %v1575 = vunpack.c.l.b16 %v1282
      %v1576 = vunpack.c.l.b16 %v1283
      %v1577 = vunpack.c.l.b16 %v1284
      %v1578 = vunpack.c.l.b16 %v1285
      %v1579 = vunpack.c.l.b16 %v1286
      %v1580 = vunpack.c.l.b16 %v1287
      %v1581 = vunpack.c.l.b16 %v1288
      %v1582 = vunpack.c.l.b16 %v1289
      %v1583 = vunpack.c.l.b16 %v1290
      %v1584 = vunpack.c.l.b16 %v1291
      %v1585 = vunpack.c.l.b16 %v1292
      %v1586 = vunpack.c.l.b16 %v1293
      %v1587 = vunpack.c.l.b16 %v1294
      %v1588 = vunpack.c.l.b16 %v1295
      %v1589 = vunpack.c.l.b16 %v1296
      %v1590 = vunpack.c.l.b16 %v1297
      %v1591 = vunpack.c.l.b16 %v1298
      %v1592 = vunpack.c.l.b16 %v1299
      %v1593 = vunpack.c.l.b16 %v1300
      %v1594 = vunpack.c.l.b16 %v1301
      %v1595 = vunpack.c.l.b16 %v1302
      %v1596 = vunpack.c.l.b16 %v1303
      %v1597 = vunpack.c.l.b16 %v1304
      %v1598 = vunpack.c.l.b16 %v1305
      %v1599 = vunpack.c.l.b16 %v1306
      %v1600 = vunpack.c.l.b16 %v1307
      %v1601 = vunpack.c.l.b16 %v1308
      %v1602 = vunpack.c.l.b16 %v1309
      %v1603 = vunpack.c.l.b16 %v1310
      %v1604 = vunpack.c.l.b16 %v1311
      %v1605 = vunpack.c.l.b16 %v1312
      %v1606 = vunpack.c.l.b16 %v1313
      %v1607 = vunpack.c.l.b16 %v1314
      %v1608 = vunpack.c.l.b16 %v1315
      %v1609 = vunpack.c.l.b16 %v1316
      %v1610 = vunpack.c.l.b16 %v1317
      %v1611 = vunpack.c.l.b16 %v1318
      %v1612 = vunpack.c.l.b16 %v1319
      %v1613 = vunpack.c.l.b16 %v1320
      %v1614 = vunpack.c.l.b16 %v1321
      %v1615 = vunpack.c.l.b16 %v1322
      %v1616 = vunpack.c.l.b16 %v1323
      %v1617 = vunpack.c.l.b16 %v1324
      %v1618 = vunpack.c.l.b16 %v1325
      %v1619 = vunpack.c.l.b16 %v1326
      %v1620 = vunpack.c.l.b16 %v1327
      %v1621 = vunpack.c.l.b16 %v1328
      %v1622 = vunpack.c.l.b16 %v1329
      %v1623 = vunpack.c.l.b16 %v1330
      %v1624 = vunpack.c.l.b16 %v1331
      %v1625 = vunpack.c.l.b16 %v1332
      %v1626 = vunpack.c.l.b16 %v1333
      %v1627 = vunpack.c.l.b16 %v1334
      %v1628 = vunpack.c.l.b16 %v1335
      %v1629 = vunpack.c.l.b16 %v1336
      %v1630 = vunpack.c.l.b16 %v1337
      %v1631 = vunpack.c.l.b16 %v1338
      %v1632 = vunpack.c.l.b16 %v1339
      %v1633 = vunpack.c.l.b16 %v1340
      %v1634 = vunpack.c.l.b16 %v1341
      %v1635 = vunpack.c.l.b16 %v1342
      %v1636 = vunpack.c.l.b16 %v1343
      %v1637 = vunpack.c.l.b16 %v1344
      %v1638 = vunpack.c.l.b16 %v1345
      %v1639 = vunpack.c.l.b16 %v1346
      %v1640 = vunpack.c.l.b16 %v1347
      %v1641 = vunpack.c.l.b16 %v1348
      %v1642 = vunpack.c.l.b16 %v1349
      %v1643 = vunpack.c.l.b16 %v1350
      %v1644 = vunpack.c.l.b16 %v1351
      %v1645 = vpack.c.b16 %v1502, %v1501
      %v1646 = vpack.c.b16 %v1504, %v1503
      %v1647 = vpack.c.b16 %v1506, %v1505
      %v1648 = vpack.c.b16 %v1508, %v1507
      %v1649 = vpack.c.b16 %v1510, %v1509
      %v1650 = vpack.c.b16 %v1512, %v1511
      %v1651 = vpack.c.b16 %v1514, %v1513
      %v1652 = vpack.c.b16 %v1516, %v1515
      %v1653 = vpack.c.b16 %v1518, %v1517
      %v1654 = vpack.c.b16 %v1520, %v1519
      %v1655 = vpack.c.b16 %v1522, %v1521
      %v1656 = vpack.c.b16 %v1524, %v1523
      %v1657 = vpack.c.b16 %v1526, %v1525
      %v1658 = vpack.c.b16 %v1528, %v1527
      %v1659 = vpack.c.b16 %v1530, %v1529
      %v1660 = vpack.c.b16 %v1532, %v1531
      %v1661 = vpack.c.b16 %v1534, %v1533
      %v1662 = vpack.c.b16 %v1536, %v1535
      %v1663 = vpack.c.b16 %v1538, %v1537
      %v1664 = vpack.c.b16 %v1540, %v1539
      %v1665 = vpack.c.b16 %v1542, %v1541
      %v1666 = vpack.c.b16 %v1544, %v1543
      %v1667 = vpack.c.b16 %v1546, %v1545
      %v1668 = vpack.c.b16 %v1548, %v1547
      %v1669 = vpack.c.b16 %v1550, %v1549
      %v1670 = vpack.c.b16 %v1552, %v1551
      %v1671 = vpack.c.b16 %v1554, %v1553
      %v1672 = vpack.c.b16 %v1556, %v1555
      %v1673 = vpack.c.b16 %v1558, %v1557
      %v1674 = vpack.c.b16 %v1560, %v1559
      %v1675 = vpack.c.b16 %v1562, %v1561
      %v1676 = vpack.c.b16 %v1564, %v1563
      %v1677 = vpack.c.b16 %v1566, %v1565
      %v1678 = vpack.c.b16 %v1568, %v1567
      %v1679 = vpack.c.b16 %v1570, %v1569
      %v1680 = vpack.c.b16 %v1572, %v1571
      %v1681 = vpack.c.b16 %v1574, %v1573
      %v1682 = vpack.c.b16 %v1576, %v1575
      %v1683 = vpack.c.b16 %v1578, %v1577
      %v1684 = vpack.c.b16 %v1580, %v1579
      %v1685 = vpack.c.b16 %v1582, %v1581
      %v1686 = vpack.c.b16 %v1584, %v1583
      %v1687 = vpack.c.b16 %v1586, %v1585
      %v1688 = vpack.c.b16 %v1588, %v1587
      %v1689 = vpack.c.b16 %v1590, %v1589
      %v1690 = vpack.c.b16 %v1592, %v1591
      %v1691 = vpack.c.b16 %v1594, %v1593
      %v1692 = vpack.c.b16 %v1596, %v1595
      %v1693 = vpack.c.b16 %v1598, %v1597
      %v1694 = vpack.c.b16 %v1600, %v1599
      %v1695 = vpack.c.b16 %v1602, %v1601
      %v1696 = vpack.c.b16 %v1604, %v1603
      %v1697 = vpack.c.b16 %v1606, %v1605
      %v1698 = vpack.c.b16 %v1608, %v1607
      %v1699 = vpack.c.b16 %v1610, %v1609
      %v1700 = vpack.c.b16 %v1612, %v1611
      %v1701 = vpack.c.b16 %v1614, %v1613
      %v1702 = vpack.c.b16 %v1616, %v1615
      %v1703 = vpack.c.b16 %v1618, %v1617
      %v1704 = vpack.c.b16 %v1620, %v1619
      %v1705 = vpack.c.b16 %v1622, %v1621
      %v1706 = vpack.c.b16 %v1624, %v1623
      %v1707 = vpack.c.b16 %v1626, %v1625
      %v1708 = vpack.c.b16 %v1628, %v1627
      %v1709 = vpack.c.b16 %v1630, %v1629
      %v1710 = vpack.c.b16 %v1632, %v1631
      %v1711 = vpack.c.b16 %v1634, %v1633
      %v1712 = vpack.c.b16 %v1636, %v1635
      %v1713 = vpack.c.b16 %v1638, %v1637
      %v1714 = vpack.c.b16 %v1640, %v1639
      %v1715 = vpack.c.b16 %v1642, %v1641
      %v1716 = vpack.c.b16 %v1644, %v1643
      %1789 = vmatprep.subr.bf16.mxu0 0
      %1790 = vmatpush1.bf16.msra.mxu0 %v1652
      %1791 = vmatprep.subr.bf16.mxu0 0
      %1792 = vmatpush1.bf16.msra.mxu0 %v1651
      %1793 = vmatprep.subr.bf16.mxu0 0
      %1794 = vmatpush1.bf16.msra.mxu0 %v1650
      %1795 = vmatprep.subr.bf16.mxu0 0
      %1796 = vmatpush1.bf16.msra.mxu0 %v1649
      %1797 = vmatprep.subr.bf16.mxu0 0
      %1798 = vmatpush1.bf16.msra.mxu0 %v1648
      %1799 = vmatprep.subr.bf16.mxu0 0
      %1800 = vmatpush1.bf16.msra.mxu0 %v1647
      %1801 = vmatprep.subr.bf16.mxu0 0
      %1802 = vmatpush1.bf16.msra.mxu0 %v1646
      %1803 = vmatprep.subr.bf16.mxu0 0
      %1804 = vmatpush1.bf16.msra.mxu0 %v1645
      %1805 = vmatprep.subr.bf16.mxu0 0
      %1806 = vmatpush2.bf16.msra.mxu0 %v1660
      %1807 = vmatprep.subr.bf16.mxu0 0
      %1808 = vmatpush2.bf16.msra.mxu0 %v1659
      %1809 = vmatprep.subr.bf16.mxu0 0
      %1810 = vmatpush2.bf16.msra.mxu0 %v1658
      %1811 = vmatprep.subr.bf16.mxu0 0
      %1812 = vmatpush2.bf16.msra.mxu0 %v1657
      %1813 = vmatprep.subr.bf16.mxu0 0
      %1814 = vmatpush2.bf16.msra.mxu0 %v1656
      %1815 = vmatprep.subr.bf16.mxu0 0
      %1816 = vmatpush2.bf16.msra.mxu0 %v1655
      %1817 = vmatprep.subr.bf16.mxu0 0
      %1818 = vmatpush2.bf16.msra.mxu0 %v1654
      %1819 = vmatprep.subr.bf16.mxu0 0
      %1820 = vmatpush2.bf16.msra.mxu0 %v1653
      %1821 = vmatprep.mubr.bf16.mxu0 %v962
      %1822 = vmatmul.mubr.bf16.gmra.mxu0 %v946
      %v1823 = vpop.f32.mrf.mxu0
      %v1824 = vadd.f32 %v1356, %v1823
      %v1825 = vpop.f32.mrf.mxu0
      %v1826 = vpop.f32.mrf.mxu0
      %v1827 = vadd.f32 %v1356, %v1826
      %v1828 = vpop.f32.mrf.mxu0
      %1829 = vmatprep.mubr.bf16.mxu0 %v963
      %1830 = vmatmul.mubr.bf16.gmra.mxu0 %v947
      %v1831 = vpop.f32.mrf.mxu0
      %v1832 = vadd.f32 %v1356, %v1831
      %v1833 = vpop.f32.mrf.mxu0
      %v1834 = vpop.f32.mrf.mxu0
      %v1835 = vadd.f32 %v1356, %v1834
      %v1836 = vpop.f32.mrf.mxu0
      %1837 = vmatprep.mubr.bf16.mxu0 %v964
      %1838 = vmatmul.mubr.bf16.gmra.mxu0 %v948
      %v1839 = vpop.f32.mrf.mxu0
      %v1840 = vadd.f32 %v1356, %v1839
      %v1841 = vpop.f32.mrf.mxu0
      %v1842 = vpop.f32.mrf.mxu0
      %v1843 = vadd.f32 %v1356, %v1842
      %v1844 = vpop.f32.mrf.mxu0
      %1845 = vmatprep.mubr.bf16.mxu0 %v965
      %1846 = vmatmul.mubr.bf16.gmra.mxu0 %v949
      %v1847 = vpop.f32.mrf.mxu0
      %v1848 = vadd.f32 %v1356, %v1847
      %v1849 = vpop.f32.mrf.mxu0
      %v1850 = vpop.f32.mrf.mxu0
      %v1851 = vadd.f32 %v1356, %v1850
      %v1852 = vpop.f32.mrf.mxu0
      %1853 = vmatprep.mubr.bf16.mxu0 %v966
      %1854 = vmatmul.mubr.bf16.gmra.mxu0 %v950
      %v1855 = vpop.f32.mrf.mxu0
      %v1856 = vadd.f32 %v1356, %v1855
      %v1857 = vpop.f32.mrf.mxu0
      %v1858 = vpop.f32.mrf.mxu0
      %v1859 = vadd.f32 %v1356, %v1858
      %v1860 = vpop.f32.mrf.mxu0
      %1861 = vmatprep.mubr.bf16.mxu0 %v967
      %1862 = vmatmul.mubr.bf16.gmra.mxu0 %v951
      %v1863 = vpop.f32.mrf.mxu0
      %v1864 = vadd.f32 %v1356, %v1863
      %v1865 = vpop.f32.mrf.mxu0
      %v1866 = vpop.f32.mrf.mxu0
      %v1867 = vadd.f32 %v1356, %v1866
      %v1868 = vpop.f32.mrf.mxu0
      %1869 = vmatprep.mubr.bf16.mxu0 %v968
      %1870 = vmatmul.mubr.bf16.gmra.mxu0 %v952
      %v1871 = vpop.f32.mrf.mxu0
      %v1872 = vadd.f32 %v1356, %v1871
      %v1873 = vpop.f32.mrf.mxu0
      %v1874 = vpop.f32.mrf.mxu0
      %v1875 = vadd.f32 %v1356, %v1874
      %v1876 = vpop.f32.mrf.mxu0
      %1877 = vmatprep.mubr.bf16.mxu0 %v969
      %1878 = vmatmul.mubr.bf16.gmra.mxu0 %v953
      %v1879 = vpop.f32.mrf.mxu0
      %v1880 = vadd.f32 %v1356, %v1879
      %v1881 = vpop.f32.mrf.mxu0
      %v1882 = vpop.f32.mrf.mxu0
      %v1883 = vadd.f32 %v1356, %v1882
      %v1884 = vpop.f32.mrf.mxu0
      %1885 = vmatprep.mubr.bf16.mxu0 %v970
      %1886 = vmatmul.mubr.bf16.gmra.mxu0 %v954
      %v1887 = vpop.f32.mrf.mxu0
      %v1888 = vadd.f32 %v1356, %v1887
      %v1889 = vpop.f32.mrf.mxu0
      %v1890 = vpop.f32.mrf.mxu0
      %v1891 = vadd.f32 %v1356, %v1890
      %v1892 = vpop.f32.mrf.mxu0
      %1893 = vmatprep.mubr.bf16.mxu0 %v971
      %1894 = vmatmul.mubr.bf16.gmra.mxu0 %v955
      %v1895 = vpop.f32.mrf.mxu0
      %v1896 = vadd.f32 %v1356, %v1895
      %v1897 = vpop.f32.mrf.mxu0
      %v1898 = vpop.f32.mrf.mxu0
      %v1899 = vadd.f32 %v1356, %v1898
      %v1900 = vpop.f32.mrf.mxu0
      %1901 = vmatprep.mubr.bf16.mxu0 %v972
      %1902 = vmatmul.mubr.bf16.gmra.mxu0 %v956
      %v1903 = vpop.f32.mrf.mxu0
      %v1904 = vadd.f32 %v1356, %v1903
      %v1905 = vpop.f32.mrf.mxu0
      %v1906 = vpop.f32.mrf.mxu0
      %v1907 = vadd.f32 %v1356, %v1906
      %v1908 = vpop.f32.mrf.mxu0
      %1909 = vmatprep.mubr.bf16.mxu0 %v973
      %1910 = vmatmul.mubr.bf16.gmra.mxu0 %v957
      %v1911 = vpop.f32.mrf.mxu0
      %v1912 = vadd.f32 %v1356, %v1911
      %v1913 = vpop.f32.mrf.mxu0
      %v1914 = vpop.f32.mrf.mxu0
      %v1915 = vadd.f32 %v1356, %v1914
      %v1916 = vpop.f32.mrf.mxu0
      %1917 = vmatprep.mubr.bf16.mxu0 %v974
      %1918 = vmatmul.mubr.bf16.gmra.mxu0 %v958
      %v1919 = vpop.f32.mrf.mxu0
      %v1920 = vadd.f32 %v1356, %v1919
      %v1921 = vpop.f32.mrf.mxu0
      %v1922 = vpop.f32.mrf.mxu0
      %v1923 = vadd.f32 %v1356, %v1922
      %v1924 = vpop.f32.mrf.mxu0
      %1925 = vmatprep.mubr.bf16.mxu0 %v975
      %1926 = vmatmul.mubr.bf16.gmra.mxu0 %v959
      %v1927 = vpop.f32.mrf.mxu0
      %v1928 = vadd.f32 %v1356, %v1927
      %v1929 = vpop.f32.mrf.mxu0
      %v1930 = vpop.f32.mrf.mxu0
      %v1931 = vadd.f32 %v1356, %v1930
      %v1932 = vpop.f32.mrf.mxu0
      %1933 = vmatprep.mubr.bf16.mxu0 %v976
      %1934 = vmatmul.mubr.bf16.gmra.mxu0 %v960
      %v1935 = vpop.f32.mrf.mxu0
      %v1936 = vadd.f32 %v1356, %v1935
      %v1937 = vpop.f32.mrf.mxu0
      %v1938 = vpop.f32.mrf.mxu0
      %v1939 = vadd.f32 %v1356, %v1938
      %v1940 = vpop.f32.mrf.mxu0
      %1941 = vmatprep.mubr.bf16.mxu0 %v977
      %1942 = vmatmul.mubr.bf16.gmra.mxu0 %v961
      %v1943 = vpop.f32.mrf.mxu0
      %v1944 = vadd.f32 %v1356, %v1943
      %v1945 = vpop.f32.mrf.mxu0
      %v1946 = vpop.f32.mrf.mxu0
      %v1947 = vadd.f32 %v1356, %v1946
      %v1948 = vpop.f32.mrf.mxu0
      %1949 = vdwg.mxu0
      %1950 = vmatprep.subr.bf16.mxu0 0
      %1951 = vmatpush1.bf16.msra.mxu0 %v1668
      %1952 = vmatprep.subr.bf16.mxu0 0
      %1953 = vmatpush1.bf16.msra.mxu0 %v1667
      %1954 = vmatprep.subr.bf16.mxu0 0
      %1955 = vmatpush1.bf16.msra.mxu0 %v1666
      %1956 = vmatprep.subr.bf16.mxu0 0
      %1957 = vmatpush1.bf16.msra.mxu0 %v1665
      %1958 = vmatprep.subr.bf16.mxu0 0
      %1959 = vmatpush1.bf16.msra.mxu0 %v1664
      %1960 = vmatprep.subr.bf16.mxu0 0
      %1961 = vmatpush1.bf16.msra.mxu0 %v1663
      %1962 = vmatprep.subr.bf16.mxu0 0
      %1963 = vmatpush1.bf16.msra.mxu0 %v1662
      %1964 = vmatprep.subr.bf16.mxu0 0
      %1965 = vmatpush1.bf16.msra.mxu0 %v1661
      %1966 = vmatprep.subr.bf16.mxu0 0
      %1967 = vmatpush2.bf16.msra.mxu0 %v1676
      %1968 = vmatprep.subr.bf16.mxu0 0
      %1969 = vmatpush2.bf16.msra.mxu0 %v1675
      %1970 = vmatprep.subr.bf16.mxu0 0
      %1971 = vmatpush2.bf16.msra.mxu0 %v1674
      %1972 = vmatprep.subr.bf16.mxu0 0
      %1973 = vmatpush2.bf16.msra.mxu0 %v1673
      %1974 = vmatprep.subr.bf16.mxu0 0
      %1975 = vmatpush2.bf16.msra.mxu0 %v1672
      %1976 = vmatprep.subr.bf16.mxu0 0
      %1977 = vmatpush2.bf16.msra.mxu0 %v1671
      %1978 = vmatprep.subr.bf16.mxu0 0
      %1979 = vmatpush2.bf16.msra.mxu0 %v1670
      %1980 = vmatprep.subr.bf16.mxu0 0
      %1981 = vmatpush2.bf16.msra.mxu0 %v1669
      %1982 = vmatprep.mubr.bf16.mxu0 %v1068
      %1983 = vmatmul.mubr.bf16.gmra.mxu0 %v978
      %v1984 = vpop.f32.mrf.mxu0
      %v1985 = vadd.f32 %v1824, %v1984
      %v1986 = vpop.f32.mrf.mxu0
      %v1987 = vpop.f32.mrf.mxu0
      %v1988 = vadd.f32 %v1827, %v1987
      %v1989 = vpop.f32.mrf.mxu0
      %1990 = vmatprep.mubr.bf16.mxu0 %v1069
      %1991 = vmatmul.mubr.bf16.gmra.mxu0 %v979
      %v1992 = vpop.f32.mrf.mxu0
      %v1993 = vadd.f32 %v1832, %v1992
      %v1994 = vpop.f32.mrf.mxu0
      %v1995 = vpop.f32.mrf.mxu0
      %v1996 = vadd.f32 %v1835, %v1995
      %v1997 = vpop.f32.mrf.mxu0
      %1998 = vmatprep.mubr.bf16.mxu0 %v1070
      %1999 = vmatmul.mubr.bf16.gmra.mxu0 %v980
      %v2000 = vpop.f32.mrf.mxu0
      %v2001 = vadd.f32 %v1840, %v2000
      %v2002 = vpop.f32.mrf.mxu0
      %v2003 = vpop.f32.mrf.mxu0
      %v2004 = vadd.f32 %v1843, %v2003
      %v2005 = vpop.f32.mrf.mxu0
      %2006 = vmatprep.mubr.bf16.mxu0 %v1071
      %2007 = vmatmul.mubr.bf16.gmra.mxu0 %v981
      %v2008 = vpop.f32.mrf.mxu0
      %v2009 = vadd.f32 %v1848, %v2008
      %v2010 = vpop.f32.mrf.mxu0
      %v2011 = vpop.f32.mrf.mxu0
      %v2012 = vadd.f32 %v1851, %v2011
      %v2013 = vpop.f32.mrf.mxu0
      %2014 = vmatprep.mubr.bf16.mxu0 %v1072
      %2015 = vmatmul.mubr.bf16.gmra.mxu0 %v982
      %v2016 = vpop.f32.mrf.mxu0
      %v2017 = vadd.f32 %v1856, %v2016
      %v2018 = vpop.f32.mrf.mxu0
      %v2019 = vpop.f32.mrf.mxu0
      %v2020 = vadd.f32 %v1859, %v2019
      %v2021 = vpop.f32.mrf.mxu0
      %2022 = vmatprep.mubr.bf16.mxu0 %v1073
      %2023 = vmatmul.mubr.bf16.gmra.mxu0 %v983
      %v2024 = vpop.f32.mrf.mxu0
      %v2025 = vadd.f32 %v1864, %v2024
      %v2026 = vpop.f32.mrf.mxu0
      %v2027 = vpop.f32.mrf.mxu0
      %v2028 = vadd.f32 %v1867, %v2027
      %v2029 = vpop.f32.mrf.mxu0
      %2030 = vmatprep.mubr.bf16.mxu0 %v1074
      %2031 = vmatmul.mubr.bf16.gmra.mxu0 %v984
      %v2032 = vpop.f32.mrf.mxu0
      %v2033 = vadd.f32 %v1872, %v2032
      %v2034 = vpop.f32.mrf.mxu0
      %v2035 = vpop.f32.mrf.mxu0
      %v2036 = vadd.f32 %v1875, %v2035
      %v2037 = vpop.f32.mrf.mxu0
      %2038 = vmatprep.mubr.bf16.mxu0 %v1075
      %2039 = vmatmul.mubr.bf16.gmra.mxu0 %v985
      %v2040 = vpop.f32.mrf.mxu0
      %v2041 = vadd.f32 %v1880, %v2040
      %v2042 = vpop.f32.mrf.mxu0
      %v2043 = vpop.f32.mrf.mxu0
      %v2044 = vadd.f32 %v1883, %v2043
      %v2045 = vpop.f32.mrf.mxu0
      %2046 = vmatprep.mubr.bf16.mxu0 %v1076
      %2047 = vmatmul.mubr.bf16.gmra.mxu0 %v986
      %v2048 = vpop.f32.mrf.mxu0
      %v2049 = vadd.f32 %v1888, %v2048
      %v2050 = vpop.f32.mrf.mxu0
      %v2051 = vpop.f32.mrf.mxu0
      %v2052 = vadd.f32 %v1891, %v2051
      %v2053 = vpop.f32.mrf.mxu0
      %2054 = vmatprep.mubr.bf16.mxu0 %v1077
      %2055 = vmatmul.mubr.bf16.gmra.mxu0 %v987
      %v2056 = vpop.f32.mrf.mxu0
      %v2057 = vadd.f32 %v1896, %v2056
      %v2058 = vpop.f32.mrf.mxu0
      %v2059 = vpop.f32.mrf.mxu0
      %v2060 = vadd.f32 %v1899, %v2059
      %v2061 = vpop.f32.mrf.mxu0
      %2062 = vmatprep.mubr.bf16.mxu0 %v1078
      %2063 = vmatmul.mubr.bf16.gmra.mxu0 %v988
      %v2064 = vpop.f32.mrf.mxu0
      %v2065 = vadd.f32 %v1904, %v2064
      %v2066 = vpop.f32.mrf.mxu0
      %v2067 = vpop.f32.mrf.mxu0
      %v2068 = vadd.f32 %v1907, %v2067
      %v2069 = vpop.f32.mrf.mxu0
      %2070 = vmatprep.mubr.bf16.mxu0 %v1079
      %2071 = vmatmul.mubr.bf16.gmra.mxu0 %v989
      %v2072 = vpop.f32.mrf.mxu0
      %v2073 = vadd.f32 %v1912, %v2072
      %v2074 = vpop.f32.mrf.mxu0
      %v2075 = vpop.f32.mrf.mxu0
      %v2076 = vadd.f32 %v1915, %v2075
      %v2077 = vpop.f32.mrf.mxu0
      %2078 = vmatprep.mubr.bf16.mxu0 %v1080
      %2079 = vmatmul.mubr.bf16.gmra.mxu0 %v990
      %v2080 = vpop.f32.mrf.mxu0
      %v2081 = vadd.f32 %v1920, %v2080
      %v2082 = vpop.f32.mrf.mxu0
      %v2083 = vpop.f32.mrf.mxu0
      %v2084 = vadd.f32 %v1923, %v2083
      %v2085 = vpop.f32.mrf.mxu0
      %2086 = vmatprep.mubr.bf16.mxu0 %v1081
      %2087 = vmatmul.mubr.bf16.gmra.mxu0 %v991
      %v2088 = vpop.f32.mrf.mxu0
      %v2089 = vadd.f32 %v1928, %v2088
      %v2090 = vpop.f32.mrf.mxu0
      %v2091 = vpop.f32.mrf.mxu0
      %v2092 = vadd.f32 %v1931, %v2091
      %v2093 = vpop.f32.mrf.mxu0
      %2094 = vmatprep.mubr.bf16.mxu0 %v1082
      %2095 = vmatmul.mubr.bf16.gmra.mxu0 %v992
      %v2096 = vpop.f32.mrf.mxu0
      %v2097 = vadd.f32 %v1936, %v2096
      %v2098 = vpop.f32.mrf.mxu0
      %v2099 = vpop.f32.mrf.mxu0
      %v2100 = vadd.f32 %v1939, %v2099
      %v2101 = vpop.f32.mrf.mxu0
      %2102 = vmatprep.mubr.bf16.mxu0 %v1083
      %2103 = vmatmul.mubr.bf16.gmra.mxu0 %v993
      %v2104 = vpop.f32.mrf.mxu0
      %v2105 = vadd.f32 %v1944, %v2104
      %v2106 = vpop.f32.mrf.mxu0
      %v2107 = vpop.f32.mrf.mxu0
      %v2108 = vadd.f32 %v1947, %v2107
      %v2109 = vpop.f32.mrf.mxu0
      %2110 = vdwg.mxu0
      %2111 = vmatprep.subr.bf16.mxu0 0
      %2112 = vmatpush1.bf16.msra.mxu0 %v1684
      %2113 = vmatprep.subr.bf16.mxu0 0
      %2114 = vmatpush1.bf16.msra.mxu0 %v1683
      %2115 = vmatprep.subr.bf16.mxu0 0
      %2116 = vmatpush1.bf16.msra.mxu0 %v1682
      %2117 = vmatprep.subr.bf16.mxu0 0
      %2118 = vmatpush1.bf16.msra.mxu0 %v1681
      %2119 = vmatprep.subr.bf16.mxu0 0
      %2120 = vmatpush1.bf16.msra.mxu0 %v1680
      %2121 = vmatprep.subr.bf16.mxu0 0
      %2122 = vmatpush1.bf16.msra.mxu0 %v1679
      %2123 = vmatprep.subr.bf16.mxu0 0
      %2124 = vmatpush1.bf16.msra.mxu0 %v1678
      %2125 = vmatprep.subr.bf16.mxu0 0
      %2126 = vmatpush1.bf16.msra.mxu0 %v1677
      %2127 = vmatprep.subr.bf16.mxu0 0
      %2128 = vmatpush2.bf16.msra.mxu0 %v1692
      %2129 = vmatprep.subr.bf16.mxu0 0
      %2130 = vmatpush2.bf16.msra.mxu0 %v1691
      %2131 = vmatprep.subr.bf16.mxu0 0
      %2132 = vmatpush2.bf16.msra.mxu0 %v1690
      %2133 = vmatprep.subr.bf16.mxu0 0
      %2134 = vmatpush2.bf16.msra.mxu0 %v1689
      %2135 = vmatprep.subr.bf16.mxu0 0
      %2136 = vmatpush2.bf16.msra.mxu0 %v1688
      %2137 = vmatprep.subr.bf16.mxu0 0
      %2138 = vmatpush2.bf16.msra.mxu0 %v1687
      %2139 = vmatprep.subr.bf16.mxu0 0
      %2140 = vmatpush2.bf16.msra.mxu0 %v1686
      %2141 = vmatprep.subr.bf16.mxu0 0
      %2142 = vmatpush2.bf16.msra.mxu0 %v1685
      %2143 = vmatprep.mubr.bf16.mxu0 %v1085
      %2144 = vmatmul.mubr.bf16.gmra.mxu0 %v963
      %v2145 = vpop.f32.mrf.mxu0
      %v2146 = vadd.f32 %v1985, %v2145
      %v2147 = vpop.f32.mrf.mxu0
      %v2148 = vpop.f32.mrf.mxu0
      %v2149 = vadd.f32 %v1988, %v2148
      %v2150 = vpop.f32.mrf.mxu0
      %2151 = vmatprep.mubr.bf16.mxu0 %v1086
      %2152 = vmatmul.mubr.bf16.gmra.mxu0 %v964
      %v2153 = vpop.f32.mrf.mxu0
      %v2154 = vadd.f32 %v1993, %v2153
      %v2155 = vpop.f32.mrf.mxu0
      %v2156 = vpop.f32.mrf.mxu0
      %v2157 = vadd.f32 %v1996, %v2156
      %v2158 = vpop.f32.mrf.mxu0
      %2159 = vmatprep.mubr.bf16.mxu0 %v1087
      %2160 = vmatmul.mubr.bf16.gmra.mxu0 %v965
      %v2161 = vpop.f32.mrf.mxu0
      %v2162 = vadd.f32 %v2001, %v2161
      %v2163 = vpop.f32.mrf.mxu0
      %v2164 = vpop.f32.mrf.mxu0
      %v2165 = vadd.f32 %v2004, %v2164
      %v2166 = vpop.f32.mrf.mxu0
      %2167 = vmatprep.mubr.bf16.mxu0 %v1088
      %2168 = vmatmul.mubr.bf16.gmra.mxu0 %v966
      %v2169 = vpop.f32.mrf.mxu0
      %v2170 = vadd.f32 %v2009, %v2169
      %v2171 = vpop.f32.mrf.mxu0
      %v2172 = vpop.f32.mrf.mxu0
      %v2173 = vadd.f32 %v2012, %v2172
      %v2174 = vpop.f32.mrf.mxu0
      %2175 = vmatprep.mubr.bf16.mxu0 %v1089
      %2176 = vmatmul.mubr.bf16.gmra.mxu0 %v967
      %v2177 = vpop.f32.mrf.mxu0
      %v2178 = vadd.f32 %v2017, %v2177
      %v2179 = vpop.f32.mrf.mxu0
      %v2180 = vpop.f32.mrf.mxu0
      %v2181 = vadd.f32 %v2020, %v2180
      %v2182 = vpop.f32.mrf.mxu0
      %2183 = vmatprep.mubr.bf16.mxu0 %v1090
      %2184 = vmatmul.mubr.bf16.gmra.mxu0 %v968
      %v2185 = vpop.f32.mrf.mxu0
      %v2186 = vadd.f32 %v2025, %v2185
      %v2187 = vpop.f32.mrf.mxu0
      %v2188 = vpop.f32.mrf.mxu0
      %v2189 = vadd.f32 %v2028, %v2188
      %v2190 = vpop.f32.mrf.mxu0
      %2191 = vmatprep.mubr.bf16.mxu0 %v1091
      %2192 = vmatmul.mubr.bf16.gmra.mxu0 %v969
      %v2193 = vpop.f32.mrf.mxu0
      %v2194 = vadd.f32 %v2033, %v2193
      %v2195 = vpop.f32.mrf.mxu0
      %v2196 = vpop.f32.mrf.mxu0
      %v2197 = vadd.f32 %v2036, %v2196
      %v2198 = vpop.f32.mrf.mxu0
      %2199 = vmatprep.mubr.bf16.mxu0 %v1092
      %2200 = vmatmul.mubr.bf16.gmra.mxu0 %v970
      %v2201 = vpop.f32.mrf.mxu0
      %v2202 = vadd.f32 %v2041, %v2201
      %v2203 = vpop.f32.mrf.mxu0
      %v2204 = vpop.f32.mrf.mxu0
      %v2205 = vadd.f32 %v2044, %v2204
      %v2206 = vpop.f32.mrf.mxu0
      %2207 = vmatprep.mubr.bf16.mxu0 %v1093
      %2208 = vmatmul.mubr.bf16.gmra.mxu0 %v971
      %v2209 = vpop.f32.mrf.mxu0
      %v2210 = vadd.f32 %v2049, %v2209
      %v2211 = vpop.f32.mrf.mxu0
      %v2212 = vpop.f32.mrf.mxu0
      %v2213 = vadd.f32 %v2052, %v2212
      %v2214 = vpop.f32.mrf.mxu0
      %2215 = vmatprep.mubr.bf16.mxu0 %v1094
      %2216 = vmatmul.mubr.bf16.gmra.mxu0 %v972
      %v2217 = vpop.f32.mrf.mxu0
      %v2218 = vadd.f32 %v2057, %v2217
      %v2219 = vpop.f32.mrf.mxu0
      %v2220 = vpop.f32.mrf.mxu0
      %v2221 = vadd.f32 %v2060, %v2220
      %v2222 = vpop.f32.mrf.mxu0
      %2223 = vmatprep.mubr.bf16.mxu0 %v1095
      %2224 = vmatmul.mubr.bf16.gmra.mxu0 %v973
      %v2225 = vpop.f32.mrf.mxu0
      %v2226 = vadd.f32 %v2065, %v2225
      %v2227 = vpop.f32.mrf.mxu0
      %v2228 = vpop.f32.mrf.mxu0
      %v2229 = vadd.f32 %v2068, %v2228
      %v2230 = vpop.f32.mrf.mxu0
      %2231 = vmatprep.mubr.bf16.mxu0 %v1096
      %2232 = vmatmul.mubr.bf16.gmra.mxu0 %v974
      %v2233 = vpop.f32.mrf.mxu0
      %v2234 = vadd.f32 %v2073, %v2233
      %v2235 = vpop.f32.mrf.mxu0
      %v2236 = vpop.f32.mrf.mxu0
      %v2237 = vadd.f32 %v2076, %v2236
      %v2238 = vpop.f32.mrf.mxu0
      %2239 = vmatprep.mubr.bf16.mxu0 %v1097
      %2240 = vmatmul.mubr.bf16.gmra.mxu0 %v975
      %v2241 = vpop.f32.mrf.mxu0
      %v2242 = vadd.f32 %v2081, %v2241
      %v2243 = vpop.f32.mrf.mxu0
      %v2244 = vpop.f32.mrf.mxu0
      %v2245 = vadd.f32 %v2084, %v2244
      %v2246 = vpop.f32.mrf.mxu0
      %2247 = vmatprep.mubr.bf16.mxu0 %v1098
      %2248 = vmatmul.mubr.bf16.gmra.mxu0 %v976
      %v2249 = vpop.f32.mrf.mxu0
      %v2250 = vadd.f32 %v2089, %v2249
      %v2251 = vpop.f32.mrf.mxu0
      %v2252 = vpop.f32.mrf.mxu0
      %v2253 = vadd.f32 %v2092, %v2252
      %v2254 = vpop.f32.mrf.mxu0
      %2255 = vmatprep.mubr.bf16.mxu0 %v1099
      %2256 = vmatmul.mubr.bf16.gmra.mxu0 %v977
      %v2257 = vpop.f32.mrf.mxu0
      %v2258 = vadd.f32 %v2097, %v2257
      %v2259 = vpop.f32.mrf.mxu0
      %v2260 = vpop.f32.mrf.mxu0
      %v2261 = vadd.f32 %v2100, %v2260
      %v2262 = vpop.f32.mrf.mxu0
      %2263 = vmatprep.mubr.bf16.mxu0 %v1100
      %2264 = vmatmul.mubr.bf16.gmra.mxu0 %v1084
      %v2265 = vpop.f32.mrf.mxu0
      %v2266 = vadd.f32 %v2105, %v2265
      %v2267 = vpop.f32.mrf.mxu0
      %v2268 = vpop.f32.mrf.mxu0
      %v2269 = vadd.f32 %v2108, %v2268
      %v2270 = vpop.f32.mrf.mxu0
      %2271 = vdwg.mxu0
      %2272 = vmatprep.subr.bf16.mxu0 0
      %2273 = vmatpush1.bf16.msra.mxu0 %v1700
      %2274 = vmatprep.subr.bf16.mxu0 0
      %2275 = vmatpush1.bf16.msra.mxu0 %v1699
      %2276 = vmatprep.subr.bf16.mxu0 0
      %2277 = vmatpush1.bf16.msra.mxu0 %v1698
      %2278 = vmatprep.subr.bf16.mxu0 0
      %2279 = vmatpush1.bf16.msra.mxu0 %v1697
      %2280 = vmatprep.subr.bf16.mxu0 0
      %2281 = vmatpush1.bf16.msra.mxu0 %v1696
      %2282 = vmatprep.subr.bf16.mxu0 0
      %2283 = vmatpush1.bf16.msra.mxu0 %v1695
      %2284 = vmatprep.subr.bf16.mxu0 0
      %2285 = vmatpush1.bf16.msra.mxu0 %v1694
      %2286 = vmatprep.subr.bf16.mxu0 0
      %2287 = vmatpush1.bf16.msra.mxu0 %v1693
      %2288 = vmatprep.subr.bf16.mxu0 0
      %2289 = vmatpush2.bf16.msra.mxu0 %v1708
      %2290 = vmatprep.subr.bf16.mxu0 0
      %2291 = vmatpush2.bf16.msra.mxu0 %v1707
      %2292 = vmatprep.subr.bf16.mxu0 0
      %2293 = vmatpush2.bf16.msra.mxu0 %v1706
      %2294 = vmatprep.subr.bf16.mxu0 0
      %2295 = vmatpush2.bf16.msra.mxu0 %v1705
      %2296 = vmatprep.subr.bf16.mxu0 0
      %2297 = vmatpush2.bf16.msra.mxu0 %v1704
      %2298 = vmatprep.subr.bf16.mxu0 0
      %2299 = vmatpush2.bf16.msra.mxu0 %v1703
      %2300 = vmatprep.subr.bf16.mxu0 0
      %2301 = vmatpush2.bf16.msra.mxu0 %v1702
      %2302 = vmatprep.subr.bf16.mxu0 0
      %2303 = vmatpush2.bf16.msra.mxu0 %v1701
      %2304 = vmatprep.mubr.bf16.mxu0 %v964
      %2305 = vmatmul.mubr.bf16.gmra.mxu0 %v1175
      %v2306 = vpop.f32.mrf.mxu0
      %v2307 = vadd.f32 %v2146, %v2306
      %v2308 = vpop.f32.mrf.mxu0
      %v2309 = vpop.f32.mrf.mxu0
      %v2310 = vadd.f32 %v2149, %v2309
      %v2311 = vpop.f32.mrf.mxu0
      %2312 = vmatprep.mubr.bf16.mxu0 %v965
      %2313 = vmatmul.mubr.bf16.gmra.mxu0 %v1176
      %v2314 = vpop.f32.mrf.mxu0
      %v2315 = vadd.f32 %v2154, %v2314
      %v2316 = vpop.f32.mrf.mxu0
      %v2317 = vpop.f32.mrf.mxu0
      %v2318 = vadd.f32 %v2157, %v2317
      %v2319 = vpop.f32.mrf.mxu0
      %2320 = vmatprep.mubr.bf16.mxu0 %v966
      %2321 = vmatmul.mubr.bf16.gmra.mxu0 %v1177
      %v2322 = vpop.f32.mrf.mxu0
      %v2323 = vadd.f32 %v2162, %v2322
      %v2324 = vpop.f32.mrf.mxu0
      %v2325 = vpop.f32.mrf.mxu0
      %v2326 = vadd.f32 %v2165, %v2325
      %v2327 = vpop.f32.mrf.mxu0
      %2328 = vmatprep.mubr.bf16.mxu0 %v967
      %2329 = vmatmul.mubr.bf16.gmra.mxu0 %v1178
      %v2330 = vpop.f32.mrf.mxu0
      %v2331 = vadd.f32 %v2170, %v2330
      %v2332 = vpop.f32.mrf.mxu0
      %v2333 = vpop.f32.mrf.mxu0
      %v2334 = vadd.f32 %v2173, %v2333
      %v2335 = vpop.f32.mrf.mxu0
      %2336 = vmatprep.mubr.bf16.mxu0 %v968
      %2337 = vmatmul.mubr.bf16.gmra.mxu0 %v1179
      %v2338 = vpop.f32.mrf.mxu0
      %v2339 = vadd.f32 %v2178, %v2338
      %v2340 = vpop.f32.mrf.mxu0
      %v2341 = vpop.f32.mrf.mxu0
      %v2342 = vadd.f32 %v2181, %v2341
      %v2343 = vpop.f32.mrf.mxu0
      %2344 = vmatprep.mubr.bf16.mxu0 %v969
      %2345 = vmatmul.mubr.bf16.gmra.mxu0 %v1180
      %v2346 = vpop.f32.mrf.mxu0
      %v2347 = vadd.f32 %v2186, %v2346
      %v2348 = vpop.f32.mrf.mxu0
      %v2349 = vpop.f32.mrf.mxu0
      %v2350 = vadd.f32 %v2189, %v2349
      %v2351 = vpop.f32.mrf.mxu0
      %2352 = vmatprep.mubr.bf16.mxu0 %v970
      %2353 = vmatmul.mubr.bf16.gmra.mxu0 %v1181
      %v2354 = vpop.f32.mrf.mxu0
      %v2355 = vadd.f32 %v2194, %v2354
      %v2356 = vpop.f32.mrf.mxu0
      %v2357 = vpop.f32.mrf.mxu0
      %v2358 = vadd.f32 %v2197, %v2357
      %v2359 = vpop.f32.mrf.mxu0
      %2360 = vmatprep.mubr.bf16.mxu0 %v971
      %2361 = vmatmul.mubr.bf16.gmra.mxu0 %v1182
      %v2362 = vpop.f32.mrf.mxu0
      %v2363 = vadd.f32 %v2202, %v2362
      %v2364 = vpop.f32.mrf.mxu0
      %v2365 = vpop.f32.mrf.mxu0
      %v2366 = vadd.f32 %v2205, %v2365
      %v2367 = vpop.f32.mrf.mxu0
      %2368 = vmatprep.mubr.bf16.mxu0 %v972
      %2369 = vmatmul.mubr.bf16.gmra.mxu0 %v1183
      %v2370 = vpop.f32.mrf.mxu0
      %v2371 = vadd.f32 %v2210, %v2370
      %v2372 = vpop.f32.mrf.mxu0
      %v2373 = vpop.f32.mrf.mxu0
      %v2374 = vadd.f32 %v2213, %v2373
      %v2375 = vpop.f32.mrf.mxu0
      %2376 = vmatprep.mubr.bf16.mxu0 %v973
      %2377 = vmatmul.mubr.bf16.gmra.mxu0 %v1184
      %v2378 = vpop.f32.mrf.mxu0
      %v2379 = vadd.f32 %v2218, %v2378
      %v2380 = vpop.f32.mrf.mxu0
      %v2381 = vpop.f32.mrf.mxu0
      %v2382 = vadd.f32 %v2221, %v2381
      %v2383 = vpop.f32.mrf.mxu0
      %2384 = vmatprep.mubr.bf16.mxu0 %v974
      %2385 = vmatmul.mubr.bf16.gmra.mxu0 %v1185
      %v2386 = vpop.f32.mrf.mxu0
      %v2387 = vadd.f32 %v2226, %v2386
      %v2388 = vpop.f32.mrf.mxu0
      %v2389 = vpop.f32.mrf.mxu0
      %v2390 = vadd.f32 %v2229, %v2389
      %v2391 = vpop.f32.mrf.mxu0
      %2392 = vmatprep.mubr.bf16.mxu0 %v975
      %2393 = vmatmul.mubr.bf16.gmra.mxu0 %v1186
      %v2394 = vpop.f32.mrf.mxu0
      %v2395 = vadd.f32 %v2234, %v2394
      %v2396 = vpop.f32.mrf.mxu0
      %v2397 = vpop.f32.mrf.mxu0
      %v2398 = vadd.f32 %v2237, %v2397
      %v2399 = vpop.f32.mrf.mxu0
      %2400 = vmatprep.mubr.bf16.mxu0 %v976
      %2401 = vmatmul.mubr.bf16.gmra.mxu0 %v1187
      %v2402 = vpop.f32.mrf.mxu0
      %v2403 = vadd.f32 %v2242, %v2402
      %v2404 = vpop.f32.mrf.mxu0
      %v2405 = vpop.f32.mrf.mxu0
      %v2406 = vadd.f32 %v2245, %v2405
      %v2407 = vpop.f32.mrf.mxu0
      %2408 = vmatprep.mubr.bf16.mxu0 %v977
      %2409 = vmatmul.mubr.bf16.gmra.mxu0 %v1188
      %v2410 = vpop.f32.mrf.mxu0
      %v2411 = vadd.f32 %v2250, %v2410
      %v2412 = vpop.f32.mrf.mxu0
      %v2413 = vpop.f32.mrf.mxu0
      %v2414 = vadd.f32 %v2253, %v2413
      %v2415 = vpop.f32.mrf.mxu0
      %2416 = vmatprep.mubr.bf16.mxu0 %v1084
      %2417 = vmatmul.mubr.bf16.gmra.mxu0 %v1189
      %v2418 = vpop.f32.mrf.mxu0
      %v2419 = vadd.f32 %v2258, %v2418
      %v2420 = vpop.f32.mrf.mxu0
      %v2421 = vpop.f32.mrf.mxu0
      %v2422 = vadd.f32 %v2261, %v2421
      %v2423 = vpop.f32.mrf.mxu0
      %2424 = vmatprep.mubr.bf16.mxu0 %v1191
      %2425 = vmatmul.mubr.bf16.gmra.mxu0 %v1190
      %v2426 = vpop.f32.mrf.mxu0
      %v2427 = vadd.f32 %v2266, %v2426
      %v2428 = vpop.f32.mrf.mxu0
      %v2429 = vpop.f32.mrf.mxu0
      %v2430 = vadd.f32 %v2269, %v2429
      %v2431 = vpop.f32.mrf.mxu0
      %2432 = vdwg.mxu0
      %2433 = vmatprep.subr.bf16.mxu0 0
      %2434 = vmatpush1.bf16.msra.mxu0 %v1716
      %2435 = vmatprep.subr.bf16.mxu0 0
      %2436 = vmatpush1.bf16.msra.mxu0 %v1715
      %2437 = vmatprep.subr.bf16.mxu0 0
      %2438 = vmatpush1.bf16.msra.mxu0 %v1714
      %2439 = vmatprep.subr.bf16.mxu0 0
      %2440 = vmatpush1.bf16.msra.mxu0 %v1713
      %2441 = vmatprep.subr.bf16.mxu0 0
      %2442 = vmatpush1.bf16.msra.mxu0 %v1712
      %2443 = vmatprep.subr.bf16.mxu0 0
      %2444 = vmatpush1.bf16.msra.mxu0 %v1711
      %2445 = vmatprep.subr.bf16.mxu0 0
      %2446 = vmatpush1.bf16.msra.mxu0 %v1710
      %2447 = vmatprep.subr.bf16.mxu0 0
      %2448 = vmatpush1.bf16.msra.mxu0 %v1709
      %2449 = vmatprep.subr.bf16.mxu0 0
      %2450 = vmatpush2.bf16.msra.mxu0 0
      %2451 = vmatprep.subr.bf16.mxu0 0
      %2452 = vmatpush2.bf16.msra.mxu0 0
      %2453 = vmatprep.subr.bf16.mxu0 0
      %2454 = vmatpush2.bf16.msra.mxu0 0
      %2455 = vmatprep.subr.bf16.mxu0 0
      %2456 = vmatpush2.bf16.msra.mxu0 0
      %2457 = vmatprep.subr.bf16.mxu0 0
      %2458 = vmatpush2.bf16.msra.mxu0 0
      %2459 = vmatprep.subr.bf16.mxu0 0
      %2460 = vmatpush2.bf16.msra.mxu0 0
      %2461 = vmatprep.subr.bf16.mxu0 0
      %2462 = vmatpush2.bf16.msra.mxu0 0
      %2463 = vmatprep.subr.bf16.mxu0 0
      %2464 = vmatpush2.bf16.msra.mxu0 0
      %2465 = vmatprep.mubr.bf16.mxu0 0
      %2466 = vmatmul.mubr.bf16.gmra.mxu0 %v1192
      %v2467 = vpop.f32.mrf.mxu0
      %v2468 = vadd.f32 %v2307, %v2467
      %v2469 = vpop.f32.mrf.mxu0
      %v2470 = vpop.f32.mrf.mxu0
      %v2471 = vadd.f32 %v2310, %v2470
      %v2472 = vpop.f32.mrf.mxu0
      %2473 = vmatprep.mubr.bf16.mxu0 0
      %2474 = vmatmul.mubr.bf16.gmra.mxu0 %v1193
      %v2475 = vpop.f32.mrf.mxu0
      %v2476 = vadd.f32 %v2315, %v2475
      %v2477 = vpop.f32.mrf.mxu0
      %v2478 = vpop.f32.mrf.mxu0
      %v2479 = vadd.f32 %v2318, %v2478
      %v2480 = vpop.f32.mrf.mxu0
      %2481 = vmatprep.mubr.bf16.mxu0 0
      %2482 = vmatmul.mubr.bf16.gmra.mxu0 %v1194
      %v2483 = vpop.f32.mrf.mxu0
      %v2484 = vadd.f32 %v2323, %v2483
      %v2485 = vpop.f32.mrf.mxu0
      %v2486 = vpop.f32.mrf.mxu0
      %v2487 = vadd.f32 %v2326, %v2486
      %v2488 = vpop.f32.mrf.mxu0
      %2489 = vmatprep.mubr.bf16.mxu0 0
      %2490 = vmatmul.mubr.bf16.gmra.mxu0 %v1195
      %v2491 = vpop.f32.mrf.mxu0
      %v2492 = vadd.f32 %v2331, %v2491
      %v2493 = vpop.f32.mrf.mxu0
      %v2494 = vpop.f32.mrf.mxu0
      %v2495 = vadd.f32 %v2334, %v2494
      %v2496 = vpop.f32.mrf.mxu0
      %2497 = vmatprep.mubr.bf16.mxu0 0
      %2498 = vmatmul.mubr.bf16.gmra.mxu0 %v1196
      %v2499 = vpop.f32.mrf.mxu0
      %v2500 = vadd.f32 %v2339, %v2499
      %v2501 = vpop.f32.mrf.mxu0
      %v2502 = vpop.f32.mrf.mxu0
      %v2503 = vadd.f32 %v2342, %v2502
      %v2504 = vpop.f32.mrf.mxu0
      %2505 = vmatprep.mubr.bf16.mxu0 0
      %2506 = vmatmul.mubr.bf16.gmra.mxu0 %v1197
      %v2507 = vpop.f32.mrf.mxu0
      %v2508 = vadd.f32 %v2347, %v2507
      %v2509 = vpop.f32.mrf.mxu0
      %v2510 = vpop.f32.mrf.mxu0
      %v2511 = vadd.f32 %v2350, %v2510
      %v2512 = vpop.f32.mrf.mxu0
      %2513 = vmatprep.mubr.bf16.mxu0 0
      %2514 = vmatmul.mubr.bf16.gmra.mxu0 %v1198
      %v2515 = vpop.f32.mrf.mxu0
      %v2516 = vadd.f32 %v2355, %v2515
      %v2517 = vpop.f32.mrf.mxu0
      %v2518 = vpop.f32.mrf.mxu0
      %v2519 = vadd.f32 %v2358, %v2518
      %v2520 = vpop.f32.mrf.mxu0
      %2521 = vmatprep.mubr.bf16.mxu0 0
      %2522 = vmatmul.mubr.bf16.gmra.mxu0 %v1199
      %v2523 = vpop.f32.mrf.mxu0
      %v2524 = vadd.f32 %v2363, %v2523
      %v2525 = vpop.f32.mrf.mxu0
      %v2526 = vpop.f32.mrf.mxu0
      %v2527 = vadd.f32 %v2366, %v2526
      %v2528 = vpop.f32.mrf.mxu0
      %2529 = vmatprep.mubr.bf16.mxu0 0
      %2530 = vmatmul.mubr.bf16.gmra.mxu0 %v1200
      %v2531 = vpop.f32.mrf.mxu0
      %v2532 = vadd.f32 %v2371, %v2531
      %v2533 = vpop.f32.mrf.mxu0
      %v2534 = vpop.f32.mrf.mxu0
      %v2535 = vadd.f32 %v2374, %v2534
      %v2536 = vpop.f32.mrf.mxu0
      %2537 = vmatprep.mubr.bf16.mxu0 0
      %2538 = vmatmul.mubr.bf16.gmra.mxu0 %v1201
      %v2539 = vpop.f32.mrf.mxu0
      %v2540 = vadd.f32 %v2379, %v2539
      %v2541 = vpop.f32.mrf.mxu0
      %v2542 = vpop.f32.mrf.mxu0
      %v2543 = vadd.f32 %v2382, %v2542
      %v2544 = vpop.f32.mrf.mxu0
      %2545 = vmatprep.mubr.bf16.mxu0 0
      %2546 = vmatmul.mubr.bf16.gmra.mxu0 %v1202
      %v2547 = vpop.f32.mrf.mxu0
      %v2548 = vadd.f32 %v2387, %v2547
      %v2549 = vpop.f32.mrf.mxu0
      %v2550 = vpop.f32.mrf.mxu0
      %v2551 = vadd.f32 %v2390, %v2550
      %v2552 = vpop.f32.mrf.mxu0
      %2553 = vmatprep.mubr.bf16.mxu0 0
      %2554 = vmatmul.mubr.bf16.gmra.mxu0 %v1203
      %v2555 = vpop.f32.mrf.mxu0
      %v2556 = vadd.f32 %v2395, %v2555
      %v2557 = vpop.f32.mrf.mxu0
      %v2558 = vpop.f32.mrf.mxu0
      %v2559 = vadd.f32 %v2398, %v2558
      %v2560 = vpop.f32.mrf.mxu0
      %2561 = vmatprep.mubr.bf16.mxu0 0
      %2562 = vmatmul.mubr.bf16.gmra.mxu0 %v1204
      %v2563 = vpop.f32.mrf.mxu0
      %v2564 = vadd.f32 %v2403, %v2563
      %v2565 = vpop.f32.mrf.mxu0
      %v2566 = vpop.f32.mrf.mxu0
      %v2567 = vadd.f32 %v2406, %v2566
      %v2568 = vpop.f32.mrf.mxu0
      %2569 = vmatprep.mubr.bf16.mxu0 0
      %2570 = vmatmul.mubr.bf16.gmra.mxu0 %v1205
      %v2571 = vpop.f32.mrf.mxu0
      %v2572 = vadd.f32 %v2411, %v2571
      %v2573 = vpop.f32.mrf.mxu0
      %v2574 = vpop.f32.mrf.mxu0
      %v2575 = vadd.f32 %v2414, %v2574
      %v2576 = vpop.f32.mrf.mxu0
      %2577 = vmatprep.mubr.bf16.mxu0 0
      %2578 = vmatmul.mubr.bf16.gmra.mxu0 %v1206
      %v2579 = vpop.f32.mrf.mxu0
      %v2580 = vadd.f32 %v2419, %v2579
      %v2581 = vpop.f32.mrf.mxu0
      %v2582 = vpop.f32.mrf.mxu0
      %v2583 = vadd.f32 %v2422, %v2582
      %v2584 = vpop.f32.mrf.mxu0
      %2585 = vmatprep.mubr.bf16.mxu0 0
      %2586 = vmatmul.mubr.bf16.gmra.mxu0 %v1207
      %v2587 = vpop.f32.mrf.mxu0
      %v2588 = vadd.f32 %v2427, %v2587
      %v2589 = vpop.f32.mrf.mxu0
      %v2590 = vpop.f32.mrf.mxu0
      %v2591 = vadd.f32 %v2430, %v2590
      %v2592 = vpop.f32.mrf.mxu0
      %2593 = vdwg.mxu0
      %v2594 = vmax.f32 %v2468, 0.0
      %v2595 = vmax.f32 %v2471, 0.0
      %v2596 = vmax.f32 %v2476, 0.0
      %v2597 = vmax.f32 %v2479, 0.0
      %v2598 = vmax.f32 %v2484, 0.0
      %v2599 = vmax.f32 %v2487, 0.0
      %v2600 = vmax.f32 %v2492, 0.0
      %v2601 = vmax.f32 %v2495, 0.0
      %v2602 = vmax.f32 %v2500, 0.0
      %v2603 = vmax.f32 %v2503, 0.0
      %v2604 = vmax.f32 %v2508, 0.0
      %v2605 = vmax.f32 %v2511, 0.0
      %v2606 = vmax.f32 %v2516, 0.0
      %v2607 = vmax.f32 %v2519, 0.0
      %v2608 = vmax.f32 %v2524, 0.0
      %v2609 = vmax.f32 %v2527, 0.0
      %v2610 = vmax.f32 %v2532, 0.0
      %v2611 = vmax.f32 %v2535, 0.0
      %v2612 = vmax.f32 %v2540, 0.0
      %v2613 = vmax.f32 %v2543, 0.0
      %v2614 = vmax.f32 %v2548, 0.0
      %v2615 = vmax.f32 %v2551, 0.0
      %v2616 = vmax.f32 %v2556, 0.0
      %v2617 = vmax.f32 %v2559, 0.0
      %v2618 = vmax.f32 %v2564, 0.0
      %v2619 = vmax.f32 %v2567, 0.0
      %v2620 = vmax.f32 %v2572, 0.0
      %v2621 = vmax.f32 %v2575, 0.0
      %v2622 = vmax.f32 %v2580, 0.0
      %v2623 = vmax.f32 %v2583, 0.0
      %v2624 = vmax.f32 %v2588, 0.0
      %v2625 = vmax.f32 %v2591, 0.0
      %v2626 = vrot.slane %v2594, 7
      %v2627 = vrot.slane %v2595, 7
      %v2628 = vrot.slane %v2596, 7
      %v2629 = vrot.slane %v2597, 7
      %v2630 = vrot.slane %v2598, 7
      %v2631 = vrot.slane %v2599, 7
      %v2632 = vrot.slane %v2600, 7
      %v2633 = vrot.slane %v2601, 7
      %v2634 = vrot.slane %v2602, 7
      %v2635 = vrot.slane %v2603, 7
      %v2636 = vrot.slane %v2604, 7
      %v2637 = vrot.slane %v2605, 7
      %v2638 = vrot.slane %v2606, 7
      %v2639 = vrot.slane %v2607, 7
      %v2640 = vrot.slane %v2608, 7
      %v2641 = vrot.slane %v2609, 7
      %v2642 = vrot.slane %v2610, 7
      %v2643 = vrot.slane %v2611, 7
      %v2644 = vrot.slane %v2612, 7
      %v2645 = vrot.slane %v2613, 7
      %v2646 = vrot.slane %v2614, 7
      %v2647 = vrot.slane %v2615, 7
      %v2648 = vrot.slane %v2616, 7
      %v2649 = vrot.slane %v2617, 7
      %v2650 = vrot.slane %v2618, 7
      %v2651 = vrot.slane %v2619, 7
      %v2652 = vrot.slane %v2620, 7
      %v2653 = vrot.slane %v2621, 7
      %v2654 = vrot.slane %v2622, 7
      %v2655 = vrot.slane %v2623, 7
      %v2656 = vsel %vm784, %v2654, %v2655
      %v2657 = vsel %vm784, %v2653, %v2654
      %v2658 = vsel %vm784, %v2652, %v2653
      %v2659 = vsel %vm784, %v2651, %v2652
      %v2660 = vsel %vm784, %v2650, %v2651
      %v2661 = vsel %vm784, %v2649, %v2650
      %v2662 = vsel %vm784, %v2648, %v2649
      %v2663 = vsel %vm784, %v2647, %v2648
      %v2664 = vsel %vm784, %v2646, %v2647
      %v2665 = vsel %vm784, %v2645, %v2646
      %v2666 = vsel %vm784, %v2644, %v2645
      %v2667 = vsel %vm784, %v2643, %v2644
      %v2668 = vsel %vm784, %v2642, %v2643
      %v2669 = vsel %vm784, %v2641, %v2642
      %v2670 = vsel %vm784, %v2640, %v2641
      %v2671 = vsel %vm784, %v2639, %v2640
      %v2672 = vsel %vm784, %v2638, %v2639
      %v2673 = vsel %vm784, %v2637, %v2638
      %v2674 = vsel %vm784, %v2636, %v2637
      %v2675 = vsel %vm784, %v2635, %v2636
      %v2676 = vsel %vm784, %v2634, %v2635
      %v2677 = vsel %vm784, %v2633, %v2634
      %v2678 = vsel %vm784, %v2632, %v2633
      %v2679 = vsel %vm784, %v2631, %v2632
      %v2680 = vsel %vm784, %v2630, %v2631
      %v2681 = vsel %vm784, %v2629, %v2630
      %v2682 = vsel %vm784, %v2628, %v2629
      %v2683 = vsel %vm784, %v2627, %v2628
      %v2684 = vsel %vm784, %v2626, %v2627
      %v2685 = vsel %vm784, 0.0, %v2626
      %v2686 = vsel %vm784, %v2655, 0.0
      %v2687 = vsel %vm616, %v2686, 0.0
      %v2688 = vsel %vm617, 0.0, 0.0
      %v2689 = vsel %vm618, %v2685, 0.0
      %v2690 = vsel %vm619, %v2684, 0.0
      %v2691 = vsel %vm620, %v2683, 0.0
      %v2692 = vsel %vm621, %v2682, 0.0
      %v2693 = vsel %vm622, %v2681, 0.0
      %v2694 = vsel %vm623, %v2680, 0.0
      %v2695 = vsel %vm624, %v2679, 0.0
      %v2696 = vsel %vm625, %v2678, 0.0
      %v2697 = vsel %vm626, %v2677, 0.0
      %v2698 = vsel %vm627, %v2676, 0.0
      %v2699 = vsel %vm628, %v2675, 0.0
      %v2700 = vsel %vm629, %v2674, 0.0
      %v2701 = vsel %vm630, %v2673, 0.0
      %v2702 = vsel %vm631, %v2672, 0.0
      %v2703 = vsel %vm632, %v2671, 0.0
      %v2704 = vsel %vm633, %v2670, 0.0
      %v2705 = vsel %vm634, %v2669, 0.0
      %v2706 = vsel %vm635, %v2668, 0.0
      %v2707 = vsel %vm636, %v2667, 0.0
      %v2708 = vsel %vm637, %v2666, 0.0
      %v2709 = vsel %vm638, %v2665, 0.0
      %v2710 = vsel %vm639, %v2664, 0.0
      %v2711 = vsel %vm640, %v2663, 0.0
      %v2712 = vsel %vm641, %v2662, 0.0
      %v2713 = vsel %vm642, %v2661, 0.0
      %v2714 = vsel %vm643, %v2660, 0.0
      %v2715 = vsel %vm644, %v2659, 0.0
      %v2716 = vsel %vm645, %v2658, 0.0
      %v2717 = vsel %vm646, %v2657, 0.0
      %v2718 = vsel %vm647, %v2656, 0.0
      %v2719 = vrot.slane %v2594, 1
      %v2720 = vrot.slane %v2595, 1
      %v2721 = vrot.slane %v2596, 1
      %v2722 = vrot.slane %v2597, 1
      %v2723 = vrot.slane %v2598, 1
      %v2724 = vrot.slane %v2599, 1
      %v2725 = vrot.slane %v2600, 1
      %v2726 = vrot.slane %v2601, 1
      %v2727 = vrot.slane %v2602, 1
      %v2728 = vrot.slane %v2603, 1
      %v2729 = vrot.slane %v2604, 1
      %v2730 = vrot.slane %v2605, 1
      %v2731 = vrot.slane %v2606, 1
      %v2732 = vrot.slane %v2607, 1
      %v2733 = vrot.slane %v2608, 1
      %v2734 = vrot.slane %v2609, 1
      %v2735 = vrot.slane %v2610, 1
      %v2736 = vrot.slane %v2611, 1
      %v2737 = vrot.slane %v2612, 1
      %v2738 = vrot.slane %v2613, 1
      %v2739 = vrot.slane %v2614, 1
      %v2740 = vrot.slane %v2615, 1
      %v2741 = vrot.slane %v2616, 1
      %v2742 = vrot.slane %v2617, 1
      %v2743 = vrot.slane %v2618, 1
      %v2744 = vrot.slane %v2619, 1
      %v2745 = vrot.slane %v2620, 1
      %v2746 = vrot.slane %v2621, 1
      %v2747 = vrot.slane %v2622, 1
      %v2748 = vrot.slane %v2623, 1
      %v2749 = vsel %vm881, %v2747, %v2748
      %v2750 = vsel %vm881, %v2746, %v2747
      %v2751 = vsel %vm881, %v2745, %v2746
      %v2752 = vsel %vm881, %v2744, %v2745
      %v2753 = vsel %vm881, %v2743, %v2744
      %v2754 = vsel %vm881, %v2742, %v2743
      %v2755 = vsel %vm881, %v2741, %v2742
      %v2756 = vsel %vm881, %v2740, %v2741
      %v2757 = vsel %vm881, %v2739, %v2740
      %v2758 = vsel %vm881, %v2738, %v2739
      %v2759 = vsel %vm881, %v2737, %v2738
      %v2760 = vsel %vm881, %v2736, %v2737
      %v2761 = vsel %vm881, %v2735, %v2736
      %v2762 = vsel %vm881, %v2734, %v2735
      %v2763 = vsel %vm881, %v2733, %v2734
      %v2764 = vsel %vm881, %v2732, %v2733
      %v2765 = vsel %vm881, %v2731, %v2732
      %v2766 = vsel %vm881, %v2730, %v2731
      %v2767 = vsel %vm881, %v2729, %v2730
      %v2768 = vsel %vm881, %v2728, %v2729
      %v2769 = vsel %vm881, %v2727, %v2728
      %v2770 = vsel %vm881, %v2726, %v2727
      %v2771 = vsel %vm881, %v2725, %v2726
      %v2772 = vsel %vm881, %v2724, %v2725
      %v2773 = vsel %vm881, %v2723, %v2724
      %v2774 = vsel %vm881, %v2722, %v2723
      %v2775 = vsel %vm881, %v2721, %v2722
      %v2776 = vsel %vm881, %v2720, %v2721
      %v2777 = vsel %vm881, %v2719, %v2720
      %v2778 = vsel %vm881, 0.0, %v2719
      %v2779 = vsel %vm881, %v2748, 0.0
      %v2780 = vsel %vm648, 0.0, 0.0
      %v2781 = vsel %vm649, %v2778, 0.0
      %v2782 = vsel %vm650, %v2777, 0.0
      %v2783 = vsel %vm651, %v2776, 0.0
      %v2784 = vsel %vm652, %v2775, 0.0
      %v2785 = vsel %vm653, %v2774, 0.0
      %v2786 = vsel %vm654, %v2773, 0.0
      %v2787 = vsel %vm655, %v2772, 0.0
      %v2788 = vsel %vm656, %v2771, 0.0
      %v2789 = vsel %vm657, %v2770, 0.0
      %v2790 = vsel %vm658, %v2769, 0.0
      %v2791 = vsel %vm659, %v2768, 0.0
      %v2792 = vsel %vm660, %v2767, 0.0
      %v2793 = vsel %vm661, %v2766, 0.0
      %v2794 = vsel %vm662, %v2765, 0.0
      %v2795 = vsel %vm663, %v2764, 0.0
      %v2796 = vsel %vm664, %v2763, 0.0
      %v2797 = vsel %vm665, %v2762, 0.0
      %v2798 = vsel %vm666, %v2761, 0.0
      %v2799 = vsel %vm667, %v2760, 0.0
      %v2800 = vsel %vm668, %v2759, 0.0
      %v2801 = vsel %vm669, %v2758, 0.0
      %v2802 = vsel %vm670, %v2757, 0.0
      %v2803 = vsel %vm671, %v2756, 0.0
      %v2804 = vsel %vm672, %v2755, 0.0
      %v2805 = vsel %vm673, %v2754, 0.0
      %v2806 = vsel %vm674, %v2753, 0.0
      %v2807 = vsel %vm675, %v2752, 0.0
      %v2808 = vsel %vm676, %v2751, 0.0
      %v2809 = vsel %vm677, %v2750, 0.0
      %v2810 = vsel %vm678, %v2749, 0.0
      %v2811 = vsel %vm679, %v2779, 0.0
      %v2812 = vpack.c.bf16 %v2688, %v2687
      %v2813 = vpack.c.bf16 %v2690, %v2689
      %v2814 = vpack.c.bf16 %v2692, %v2691
      %v2815 = vpack.c.bf16 %v2694, %v2693
      %v2816 = vpack.c.bf16 %v2696, %v2695
      %v2817 = vpack.c.bf16 %v2698, %v2697
      %v2818 = vpack.c.bf16 %v2700, %v2699
      %v2819 = vpack.c.bf16 %v2702, %v2701
      %v2820 = vpack.c.bf16 %v2704, %v2703
      %v2821 = vpack.c.bf16 %v2706, %v2705
      %v2822 = vpack.c.bf16 %v2708, %v2707
      %v2823 = vpack.c.bf16 %v2710, %v2709
      %v2824 = vpack.c.bf16 %v2712, %v2711
      %v2825 = vpack.c.bf16 %v2714, %v2713
      %v2826 = vpack.c.bf16 %v2716, %v2715
      %v2827 = vpack.c.bf16 %v2718, %v2717
      %v2828 = vpack.c.bf16 0.0, 0.0
      %v2829 = vpack.c.bf16 %v2595, %v2594
      %v2830 = vpack.c.bf16 %v2597, %v2596
      %v2831 = vpack.c.bf16 %v2599, %v2598
      %v2832 = vpack.c.bf16 %v2601, %v2600
      %v2833 = vpack.c.bf16 %v2603, %v2602
      %v2834 = vpack.c.bf16 %v2605, %v2604
      %v2835 = vpack.c.bf16 %v2607, %v2606
      %v2836 = vpack.c.bf16 %v2609, %v2608
      %v2837 = vpack.c.bf16 %v2611, %v2610
      %v2838 = vpack.c.bf16 %v2613, %v2612
      %v2839 = vpack.c.bf16 %v2615, %v2614
      %v2840 = vpack.c.bf16 %v2617, %v2616
      %v2841 = vpack.c.bf16 %v2619, %v2618
      %v2842 = vpack.c.bf16 %v2621, %v2620
      %v2843 = vpack.c.bf16 %v2623, %v2622
      %v2844 = vpack.c.bf16 %v2781, %v2780
      %v2845 = vpack.c.bf16 %v2783, %v2782
      %v2846 = vpack.c.bf16 %v2785, %v2784
      %v2847 = vpack.c.bf16 %v2787, %v2786
      %v2848 = vpack.c.bf16 %v2789, %v2788
      %v2849 = vpack.c.bf16 %v2791, %v2790
      %v2850 = vpack.c.bf16 %v2793, %v2792
      %v2851 = vpack.c.bf16 %v2795, %v2794
      %v2852 = vpack.c.bf16 %v2797, %v2796
      %v2853 = vpack.c.bf16 %v2799, %v2798
      %v2854 = vpack.c.bf16 %v2801, %v2800
      %v2855 = vpack.c.bf16 %v2803, %v2802
      %v2856 = vpack.c.bf16 %v2805, %v2804
      %v2857 = vpack.c.bf16 %v2807, %v2806
      %v2858 = vpack.c.bf16 %v2809, %v2808
      %v2859 = vpack.c.bf16 %v2811, %v2810
      %v2860 = vrot.slane %v2624, 7
      %v2861 = vrot.slane %v2625, 7
      %v2862 = vsel %vm784, %v2860, %v2861
      %v2863 = vsel %vm784, %v2655, %v2860
      %v2864 = vsel %vm784, %v2861, %v2626
      %v2865 = vsel %vm616, %v2864, 0.0
      %v2866 = vsel %vm617, %v2684, 0.0
      %v2867 = vsel %vm618, %v2683, 0.0
      %v2868 = vsel %vm619, %v2682, 0.0
      %v2869 = vsel %vm620, %v2681, 0.0
      %v2870 = vsel %vm621, %v2680, 0.0
      %v2871 = vsel %vm622, %v2679, 0.0
      %v2872 = vsel %vm623, %v2678, 0.0
      %v2873 = vsel %vm624, %v2677, 0.0
      %v2874 = vsel %vm625, %v2676, 0.0
      %v2875 = vsel %vm626, %v2675, 0.0
      %v2876 = vsel %vm627, %v2674, 0.0
      %v2877 = vsel %vm628, %v2673, 0.0
      %v2878 = vsel %vm629, %v2672, 0.0
      %v2879 = vsel %vm630, %v2671, 0.0
      %v2880 = vsel %vm631, %v2670, 0.0
      %v2881 = vsel %vm632, %v2669, 0.0
      %v2882 = vsel %vm633, %v2668, 0.0
      %v2883 = vsel %vm634, %v2667, 0.0
      %v2884 = vsel %vm635, %v2666, 0.0
      %v2885 = vsel %vm636, %v2665, 0.0
      %v2886 = vsel %vm637, %v2664, 0.0
      %v2887 = vsel %vm638, %v2663, 0.0
      %v2888 = vsel %vm639, %v2662, 0.0
      %v2889 = vsel %vm640, %v2661, 0.0
      %v2890 = vsel %vm641, %v2660, 0.0
      %v2891 = vsel %vm642, %v2659, 0.0
      %v2892 = vsel %vm643, %v2658, 0.0
      %v2893 = vsel %vm644, %v2657, 0.0
      %v2894 = vsel %vm645, %v2656, 0.0
      %v2895 = vsel %vm646, %v2863, 0.0
      %v2896 = vsel %vm647, %v2862, 0.0
      %v2897 = vrot.slane %v2624, 1
      %v2898 = vrot.slane %v2625, 1
      %v2899 = vsel %vm881, %v2897, %v2898
      %v2900 = vsel %vm881, %v2748, %v2897
      %v2901 = vsel %vm881, %v2898, %v2719
      %v2902 = vsel %vm648, %v2777, 0.0
      %v2903 = vsel %vm649, %v2776, 0.0
      %v2904 = vsel %vm650, %v2775, 0.0
      %v2905 = vsel %vm651, %v2774, 0.0
      %v2906 = vsel %vm652, %v2773, 0.0
      %v2907 = vsel %vm653, %v2772, 0.0
      %v2908 = vsel %vm654, %v2771, 0.0
      %v2909 = vsel %vm655, %v2770, 0.0
      %v2910 = vsel %vm656, %v2769, 0.0
      %v2911 = vsel %vm657, %v2768, 0.0
      %v2912 = vsel %vm658, %v2767, 0.0
      %v2913 = vsel %vm659, %v2766, 0.0
      %v2914 = vsel %vm660, %v2765, 0.0
      %v2915 = vsel %vm661, %v2764, 0.0
      %v2916 = vsel %vm662, %v2763, 0.0
      %v2917 = vsel %vm663, %v2762, 0.0
      %v2918 = vsel %vm664, %v2761, 0.0
      %v2919 = vsel %vm665, %v2760, 0.0
      %v2920 = vsel %vm666, %v2759, 0.0
      %v2921 = vsel %vm667, %v2758, 0.0
      %v2922 = vsel %vm668, %v2757, 0.0
      %v2923 = vsel %vm669, %v2756, 0.0
      %v2924 = vsel %vm670, %v2755, 0.0
      %v2925 = vsel %vm671, %v2754, 0.0
      %v2926 = vsel %vm672, %v2753, 0.0
      %v2927 = vsel %vm673, %v2752, 0.0
      %v2928 = vsel %vm674, %v2751, 0.0
      %v2929 = vsel %vm675, %v2750, 0.0
      %v2930 = vsel %vm676, %v2749, 0.0
      %v2931 = vsel %vm677, %v2900, 0.0
      %v2932 = vsel %vm678, %v2899, 0.0
      %v2933 = vsel %vm679, %v2901, 0.0
      %v2934 = vpack.c.bf16 %v2866, %v2865
      %v2935 = vpack.c.bf16 %v2868, %v2867
      %v2936 = vpack.c.bf16 %v2870, %v2869
      %v2937 = vpack.c.bf16 %v2872, %v2871
      %v2938 = vpack.c.bf16 %v2874, %v2873
      %v2939 = vpack.c.bf16 %v2876, %v2875
      %v2940 = vpack.c.bf16 %v2878, %v2877
      %v2941 = vpack.c.bf16 %v2880, %v2879
      %v2942 = vpack.c.bf16 %v2882, %v2881
      %v2943 = vpack.c.bf16 %v2884, %v2883
      %v2944 = vpack.c.bf16 %v2886, %v2885
      %v2945 = vpack.c.bf16 %v2888, %v2887
      %v2946 = vpack.c.bf16 %v2890, %v2889
      %v2947 = vpack.c.bf16 %v2892, %v2891
      %v2948 = vpack.c.bf16 %v2894, %v2893
      %v2949 = vpack.c.bf16 %v2896, %v2895
      %v2950 = vpack.c.bf16 %v2625, %v2624
      %v2951 = vpack.c.bf16 %v2903, %v2902
      %v2952 = vpack.c.bf16 %v2905, %v2904
      %v2953 = vpack.c.bf16 %v2907, %v2906
      %v2954 = vpack.c.bf16 %v2909, %v2908
      %v2955 = vpack.c.bf16 %v2911, %v2910
      %v2956 = vpack.c.bf16 %v2913, %v2912
      %v2957 = vpack.c.bf16 %v2915, %v2914
      %v2958 = vpack.c.bf16 %v2917, %v2916
      %v2959 = vpack.c.bf16 %v2919, %v2918
      %v2960 = vpack.c.bf16 %v2921, %v2920
      %v2961 = vpack.c.bf16 %v2923, %v2922
      %v2962 = vpack.c.bf16 %v2925, %v2924
      %v2963 = vpack.c.bf16 %v2927, %v2926
      %v2964 = vpack.c.bf16 %v2929, %v2928
      %v2965 = vpack.c.bf16 %v2931, %v2930
      %v2966 = vpack.c.bf16 %v2933, %v2932
      %v2967 = vsel %vm784, %v2861, 0.0
      %v2968 = vsel %vm784, 0.0, %v2628
      %v2969 = vsel %vm616, %v2968, 0.0
      %v2970 = vsel %vm617, %v2682, 0.0
      %v2971 = vsel %vm618, %v2681, 0.0
      %v2972 = vsel %vm619, %v2680, 0.0
      %v2973 = vsel %vm620, %v2679, 0.0
      %v2974 = vsel %vm621, %v2678, 0.0
      %v2975 = vsel %vm622, %v2677, 0.0
      %v2976 = vsel %vm623, %v2676, 0.0
      %v2977 = vsel %vm624, %v2675, 0.0
      %v2978 = vsel %vm625, %v2674, 0.0
      %v2979 = vsel %vm626, %v2673, 0.0
      %v2980 = vsel %vm627, %v2672, 0.0
      %v2981 = vsel %vm628, %v2671, 0.0
      %v2982 = vsel %vm629, %v2670, 0.0
      %v2983 = vsel %vm630, %v2669, 0.0
      %v2984 = vsel %vm631, %v2668, 0.0
      %v2985 = vsel %vm632, %v2667, 0.0
      %v2986 = vsel %vm633, %v2666, 0.0
      %v2987 = vsel %vm634, %v2665, 0.0
      %v2988 = vsel %vm635, %v2664, 0.0
      %v2989 = vsel %vm636, %v2663, 0.0
      %v2990 = vsel %vm637, %v2662, 0.0
      %v2991 = vsel %vm638, %v2661, 0.0
      %v2992 = vsel %vm639, %v2660, 0.0
      %v2993 = vsel %vm640, %v2659, 0.0
      %v2994 = vsel %vm641, %v2658, 0.0
      %v2995 = vsel %vm642, %v2657, 0.0
      %v2996 = vsel %vm643, %v2656, 0.0
      %v2997 = vsel %vm644, %v2863, 0.0
      %v2998 = vsel %vm645, %v2862, 0.0
      %v2999 = vsel %vm646, %v2967, 0.0
      %v3000 = vsel %vm647, 0.0, 0.0
      %v3001 = vsel %vm881, %v2898, 0.0
      %v3002 = vsel %vm881, 0.0, %v2721
      %v3003 = vsel %vm648, %v2775, 0.0
      %v3004 = vsel %vm649, %v2774, 0.0
      %v3005 = vsel %vm650, %v2773, 0.0
      %v3006 = vsel %vm651, %v2772, 0.0
      %v3007 = vsel %vm652, %v2771, 0.0
      %v3008 = vsel %vm653, %v2770, 0.0
      %v3009 = vsel %vm654, %v2769, 0.0
      %v3010 = vsel %vm655, %v2768, 0.0
      %v3011 = vsel %vm656, %v2767, 0.0
      %v3012 = vsel %vm657, %v2766, 0.0
      %v3013 = vsel %vm658, %v2765, 0.0
      %v3014 = vsel %vm659, %v2764, 0.0
      %v3015 = vsel %vm660, %v2763, 0.0
      %v3016 = vsel %vm661, %v2762, 0.0
      %v3017 = vsel %vm662, %v2761, 0.0
      %v3018 = vsel %vm663, %v2760, 0.0
      %v3019 = vsel %vm664, %v2759, 0.0
      %v3020 = vsel %vm665, %v2758, 0.0
      %v3021 = vsel %vm666, %v2757, 0.0
      %v3022 = vsel %vm667, %v2756, 0.0
      %v3023 = vsel %vm668, %v2755, 0.0
      %v3024 = vsel %vm669, %v2754, 0.0
      %v3025 = vsel %vm670, %v2753, 0.0
      %v3026 = vsel %vm671, %v2752, 0.0
      %v3027 = vsel %vm672, %v2751, 0.0
      %v3028 = vsel %vm673, %v2750, 0.0
      %v3029 = vsel %vm674, %v2749, 0.0
      %v3030 = vsel %vm675, %v2900, 0.0
      %v3031 = vsel %vm676, %v2899, 0.0
      %v3032 = vsel %vm677, %v3001, 0.0
      %v3033 = vsel %vm678, 0.0, 0.0
      %v3034 = vsel %vm679, %v3002, 0.0
      %v3035 = vpack.c.bf16 %v2970, %v2969
      %v3036 = vpack.c.bf16 %v2972, %v2971
      %v3037 = vpack.c.bf16 %v2974, %v2973
      %v3038 = vpack.c.bf16 %v2976, %v2975
      %v3039 = vpack.c.bf16 %v2978, %v2977
      %v3040 = vpack.c.bf16 %v2980, %v2979
      %v3041 = vpack.c.bf16 %v2982, %v2981
      %v3042 = vpack.c.bf16 %v2984, %v2983
      %v3043 = vpack.c.bf16 %v2986, %v2985
      %v3044 = vpack.c.bf16 %v2988, %v2987
      %v3045 = vpack.c.bf16 %v2990, %v2989
      %v3046 = vpack.c.bf16 %v2992, %v2991
      %v3047 = vpack.c.bf16 %v2994, %v2993
      %v3048 = vpack.c.bf16 %v2996, %v2995
      %v3049 = vpack.c.bf16 %v2998, %v2997
      %v3050 = vpack.c.bf16 %v3000, %v2999
      %v3051 = vpack.c.bf16 %v3004, %v3003
      %v3052 = vpack.c.bf16 %v3006, %v3005
      %v3053 = vpack.c.bf16 %v3008, %v3007
      %v3054 = vpack.c.bf16 %v3010, %v3009
      %v3055 = vpack.c.bf16 %v3012, %v3011
      %v3056 = vpack.c.bf16 %v3014, %v3013
      %v3057 = vpack.c.bf16 %v3016, %v3015
      %v3058 = vpack.c.bf16 %v3018, %v3017
      %v3059 = vpack.c.bf16 %v3020, %v3019
      %v3060 = vpack.c.bf16 %v3022, %v3021
      %v3061 = vpack.c.bf16 %v3024, %v3023
      %v3062 = vpack.c.bf16 %v3026, %v3025
      %v3063 = vpack.c.bf16 %v3028, %v3027
      %v3064 = vpack.c.bf16 %v3030, %v3029
      %v3065 = vpack.c.bf16 %v3032, %v3031
      %v3066 = vpack.c.bf16 %v3034, %v3033
      %v3067 = vld [vmem:[%s2] sm:$0xf]
      %v3068 = vld [vmem:[%s2 + $0x4] sm:$0xf]
      %v3069 = vld [vmem:[%s2 + $0x8] sm:$0xf]
      %v3070 = vld [vmem:[%s2 + $0xc] sm:$0xf]
      %v3071 = vld [vmem:[%s2 + $0x10] sm:$0xf]
      %v3072 = vld [vmem:[%s2 + $0x14] sm:$0xf]
      %v3073 = vld [vmem:[%s2 + $0x18] sm:$0xf]
      %v3074 = vld [vmem:[%s2 + $0x1c] sm:$0xf]
      %v3075 = vld [vmem:[%s2 + $0x20] sm:$0xf]
      %v3076 = vld [vmem:[%s2 + $0x24] sm:$0xf]
      %v3077 = vld [vmem:[%s2 + $0x28] sm:$0xf]
      %v3078 = vld [vmem:[%s2 + $0x2c] sm:$0xf]
      %v3079 = vld [vmem:[%s2 + $0x30] sm:$0xf]
      %v3080 = vld [vmem:[%s2 + $0x34] sm:$0xf]
      %v3081 = vld [vmem:[%s2 + $0x38] sm:$0xf]
      %v3082 = vld [vmem:[%s2 + $0x3c] sm:$0xf]
      %v3083 = vld [vmem:[%s2 + $0x40] sm:$0xf]
      %v3084 = vld [vmem:[%s2 + $0x44] sm:$0xf]
      %v3085 = vld [vmem:[%s2 + $0x48] sm:$0xf]
      %v3086 = vld [vmem:[%s2 + $0x4c] sm:$0xf]
      %v3087 = vld [vmem:[%s2 + $0x50] sm:$0xf]
      %v3088 = vld [vmem:[%s2 + $0x54] sm:$0xf]
      %v3089 = vld [vmem:[%s2 + $0x58] sm:$0xf]
      %v3090 = vld [vmem:[%s2 + $0x5c] sm:$0xf]
      %v3091 = vld [vmem:[%s2 + $0x60] sm:$0xf]
      %v3092 = vld [vmem:[%s2 + $0x64] sm:$0xf]
      %v3093 = vld [vmem:[%s2 + $0x68] sm:$0xf]
      %v3094 = vld [vmem:[%s2 + $0x6c] sm:$0xf]
      %v3095 = vld [vmem:[%s2 + $0x70] sm:$0xf]
      %v3096 = vld [vmem:[%s2 + $0x74] sm:$0xf]
      %v3097 = vld [vmem:[%s2 + $0x78] sm:$0xf]
      %v3098 = vld [vmem:[%s2 + $0x7c] sm:$0xf]
      %v3099 = vld [vmem:[%s2 + $0x80] sm:$0xf]
      %v3100 = vld [vmem:[%s2 + $0x84] sm:$0xf]
      %v3101 = vld [vmem:[%s2 + $0x88] sm:$0xf]
      %v3102 = vld [vmem:[%s2 + $0x8c] sm:$0xf]
      %v3103 = vld [vmem:[%s2 + $0x90] sm:$0xf]
      %v3104 = vld [vmem:[%s2 + $0x94] sm:$0xf]
      %v3105 = vld [vmem:[%s2 + $0x98] sm:$0xf]
      %v3106 = vld [vmem:[%s2 + $0x9c] sm:$0xf]
      %v3107 = vld [vmem:[%s2 + $0xa0] sm:$0xf]
      %v3108 = vld [vmem:[%s2 + $0xa4] sm:$0xf]
      %v3109 = vld [vmem:[%s2 + $0xa8] sm:$0xf]
      %v3110 = vld [vmem:[%s2 + $0xac] sm:$0xf]
      %v3111 = vld [vmem:[%s2 + $0xb0] sm:$0xf]
      %v3112 = vld [vmem:[%s2 + $0xb4] sm:$0xf]
      %v3113 = vld [vmem:[%s2 + $0xb8] sm:$0xf]
      %v3114 = vld [vmem:[%s2 + $0xbc] sm:$0xf]
      %v3115 = vld [vmem:[%s2 + $0xc0] sm:$0xf]
      %v3116 = vld [vmem:[%s2 + $0xc4] sm:$0xf]
      %v3117 = vld [vmem:[%s2 + $0xc8] sm:$0xf]
      %v3118 = vld [vmem:[%s2 + $0xcc] sm:$0xf]
      %v3119 = vld [vmem:[%s2 + $0xd0] sm:$0xf]
      %v3120 = vld [vmem:[%s2 + $0xd4] sm:$0xf]
      %v3121 = vld [vmem:[%s2 + $0xd8] sm:$0xf]
      %v3122 = vld [vmem:[%s2 + $0xdc] sm:$0xf]
      %v3123 = vld [vmem:[%s2 + $0xe0] sm:$0xf]
      %v3124 = vld [vmem:[%s2 + $0xe4] sm:$0xf]
      %v3125 = vld [vmem:[%s2 + $0xe8] sm:$0xf]
      %v3126 = vld [vmem:[%s2 + $0xec] sm:$0xf]
      %v3127 = vld [vmem:[%s2 + $0xf0] sm:$0xf]
      %v3128 = vld [vmem:[%s2 + $0xf4] sm:$0xf]
      %v3129 = vld [vmem:[%s2 + $0xf8] sm:$0xf]
      %v3130 = vld [vmem:[%s2 + $0xfc] sm:$0xf]
      %v3131 = vld [vmem:[%s2 + $0x100] sm:$0xf]
      %v3132 = vld [vmem:[%s2 + $0x104] sm:$0xf]
      %v3133 = vld [vmem:[%s2 + $0x108] sm:$0xf]
      %v3134 = vld [vmem:[%s2 + $0x10c] sm:$0xf]
      %v3135 = vld [vmem:[%s2 + $0x110] sm:$0xf]
      %v3136 = vld [vmem:[%s2 + $0x114] sm:$0xf]
      %v3137 = vld [vmem:[%s2 + $0x118] sm:$0xf]
      %v3138 = vld [vmem:[%s2 + $0x11c] sm:$0xf]
      %v3139 = vld [vmem:[%s2 + $0x120] sm:$0xf]
      %v3140 = vld [vmem:[%s2 + $0x124] sm:$0xf]
      %v3141 = vld [vmem:[%s2 + $0x128] sm:$0xf]
      %v3142 = vld [vmem:[%s2 + $0x12c] sm:$0xf]
      %v3143 = vld [vmem:[%s2 + $0x130] sm:$0xf]
      %v3144 = vld [vmem:[%s2 + $0x134] sm:$0xf]
      %v3145 = vld [vmem:[%s2 + $0x138] sm:$0xf]
      %v3146 = vld [vmem:[%s2 + $0x13c] sm:$0xf]
      %v3147 = vld [vmem:[%s2 + $0x140] sm:$0xf]
      %v3148 = vld [vmem:[%s2 + $0x144] sm:$0xf]
      %v3149 = vld [vmem:[%s2 + $0x148] sm:$0xf]
      %v3150 = vld [vmem:[%s2 + $0x14c] sm:$0xf]
      %v3151 = vld [vmem:[%s2 + $0x150] sm:$0xf]
      %v3152 = vld [vmem:[%s2 + $0x154] sm:$0xf]
      %v3153 = vld [vmem:[%s2 + $0x158] sm:$0xf]
      %v3154 = vld [vmem:[%s2 + $0x15c] sm:$0xf]
      %v3155 = vld [vmem:[%s2 + $0x160] sm:$0xf]
      %v3156 = vld [vmem:[%s2 + $0x164] sm:$0xf]
      %v3157 = vld [vmem:[%s2 + $0x168] sm:$0xf]
      %v3158 = vld [vmem:[%s2 + $0x16c] sm:$0xf]
      %v3159 = vld [vmem:[%s2 + $0x170] sm:$0xf]
      %v3160 = vld [vmem:[%s2 + $0x174] sm:$0xf]
      %v3161 = vld [vmem:[%s2 + $0x178] sm:$0xf]
      %v3162 = vld [vmem:[%s2 + $0x17c] sm:$0xf]
      %v3163 = vld [vmem:[%s2 + $0x180] sm:$0xf]
      %v3164 = vld [vmem:[%s2 + $0x184] sm:$0xf]
      %v3165 = vld [vmem:[%s2 + $0x188] sm:$0xf]
      %v3166 = vld [vmem:[%s2 + $0x18c] sm:$0xf]
      %v3167 = vld [vmem:[%s2 + $0x190] sm:$0xf]
      %v3168 = vld [vmem:[%s2 + $0x194] sm:$0xf]
      %v3169 = vld [vmem:[%s2 + $0x198] sm:$0xf]
      %v3170 = vld [vmem:[%s2 + $0x19c] sm:$0xf]
      %v3171 = vld [vmem:[%s2 + $0x1a0] sm:$0xf]
      %v3172 = vld [vmem:[%s2 + $0x1a4] sm:$0xf]
      %v3173 = vld [vmem:[%s2 + $0x1a8] sm:$0xf]
      %v3174 = vld [vmem:[%s2 + $0x1ac] sm:$0xf]
      %v3175 = vld [vmem:[%s2 + $0x1b0] sm:$0xf]
      %v3176 = vld [vmem:[%s2 + $0x1b4] sm:$0xf]
      %v3177 = vld [vmem:[%s2 + $0x1b8] sm:$0xf]
      %v3178 = vld [vmem:[%s2 + $0x1bc] sm:$0xf]
      %v3179 = vld [vmem:[%s2 + $0x1c0] sm:$0xf]
      %v3180 = vld [vmem:[%s2 + $0x1c4] sm:$0xf]
      %v3181 = vld [vmem:[%s2 + $0x1c8] sm:$0xf]
      %v3182 = vld [vmem:[%s2 + $0x1cc] sm:$0xf]
      %v3183 = vld [vmem:[%s2 + $0x1d0] sm:$0xf]
      %v3184 = vld [vmem:[%s2 + $0x1d4] sm:$0xf]
      %v3185 = vld [vmem:[%s2 + $0x1d8] sm:$0xf]
      %v3186 = vld [vmem:[%s2 + $0x1dc] sm:$0xf]
      %v3187 = vld [vmem:[%s2 + $0x1e0] sm:$0xf]
      %v3188 = vld [vmem:[%s2 + $0x1e4] sm:$0xf]
      %v3189 = vld [vmem:[%s2 + $0x1e8] sm:$0xf]
      %v3190 = vld [vmem:[%s2 + $0x1ec] sm:$0xf]
      %v3191 = vld [vmem:[%s2 + $0x1f0] sm:$0xf]
      %v3192 = vld [vmem:[%s2 + $0x1f4] sm:$0xf]
      %v3193 = vld [vmem:[%s2 + $0x1f8] sm:$0xf]
      %v3194 = vld [vmem:[%s2 + $0x1fc] sm:$0xf]
      %v3195 = vld [vmem:[%s2 + $0x200] sm:$0xf]
      %v3196 = vld [vmem:[%s2 + $0x204] sm:$0xf]
      %v3197 = vld [vmem:[%s2 + $0x208] sm:$0xf]
      %v3198 = vld [vmem:[%s2 + $0x20c] sm:$0xf]
      %v3199 = vld [vmem:[%s2 + $0x210] sm:$0xf]
      %v3200 = vld [vmem:[%s2 + $0x214] sm:$0xf]
      %v3201 = vld [vmem:[%s2 + $0x218] sm:$0xf]
      %v3202 = vld [vmem:[%s2 + $0x21c] sm:$0xf]
      %v3203 = vld [vmem:[%s2 + $0x220] sm:$0xf]
      %v3204 = vld [vmem:[%s2 + $0x224] sm:$0xf]
      %v3205 = vld [vmem:[%s2 + $0x228] sm:$0xf]
      %v3206 = vld [vmem:[%s2 + $0x22c] sm:$0xf]
      %v3207 = vld [vmem:[%s2 + $0x230] sm:$0xf]
      %v3208 = vld [vmem:[%s2 + $0x234] sm:$0xf]
      %v3209 = vld [vmem:[%s2 + $0x238] sm:$0xf]
      %v3210 = vld [vmem:[%s2 + $0x23c] sm:$0xf]
      %v3211 = vld [vmem:[%s3 + $0x1] sm:$0x1]
      %v3212 = vlaneseq
      %v3213 = vshrl.u32 %v3212, 7
      %v3214 = vsub.s32 0, %v3213
      %v3215 = vrot.slane %v3211, %v3214
      %v3360 = vunpack.c.l.b16 %v3067
      %v3361 = vunpack.c.l.b16 %v3068
      %v3362 = vunpack.c.l.b16 %v3069
      %v3363 = vunpack.c.l.b16 %v3070
      %v3364 = vunpack.c.l.b16 %v3071
      %v3365 = vunpack.c.l.b16 %v3072
      %v3366 = vunpack.c.l.b16 %v3073
      %v3367 = vunpack.c.l.b16 %v3074
      %v3368 = vunpack.c.l.b16 %v3075
      %v3369 = vunpack.c.l.b16 %v3076
      %v3370 = vunpack.c.l.b16 %v3077
      %v3371 = vunpack.c.l.b16 %v3078
      %v3372 = vunpack.c.l.b16 %v3079
      %v3373 = vunpack.c.l.b16 %v3080
      %v3374 = vunpack.c.l.b16 %v3081
      %v3375 = vunpack.c.l.b16 %v3082
      %v3376 = vunpack.c.l.b16 %v3083
      %v3377 = vunpack.c.l.b16 %v3084
      %v3378 = vunpack.c.l.b16 %v3085
      %v3379 = vunpack.c.l.b16 %v3086
      %v3380 = vunpack.c.l.b16 %v3087
      %v3381 = vunpack.c.l.b16 %v3088
      %v3382 = vunpack.c.l.b16 %v3089
      %v3383 = vunpack.c.l.b16 %v3090
      %v3384 = vunpack.c.l.b16 %v3091
      %v3385 = vunpack.c.l.b16 %v3092
      %v3386 = vunpack.c.l.b16 %v3093
      %v3387 = vunpack.c.l.b16 %v3094
      %v3388 = vunpack.c.l.b16 %v3095
      %v3389 = vunpack.c.l.b16 %v3096
      %v3390 = vunpack.c.l.b16 %v3097
      %v3391 = vunpack.c.l.b16 %v3098
      %v3392 = vunpack.c.l.b16 %v3099
      %v3393 = vunpack.c.l.b16 %v3100
      %v3394 = vunpack.c.l.b16 %v3101
      %v3395 = vunpack.c.l.b16 %v3102
      %v3396 = vunpack.c.l.b16 %v3103
      %v3397 = vunpack.c.l.b16 %v3104
      %v3398 = vunpack.c.l.b16 %v3105
      %v3399 = vunpack.c.l.b16 %v3106
      %v3400 = vunpack.c.l.b16 %v3107
      %v3401 = vunpack.c.l.b16 %v3108
      %v3402 = vunpack.c.l.b16 %v3109
      %v3403 = vunpack.c.l.b16 %v3110
      %v3404 = vunpack.c.l.b16 %v3111
      %v3405 = vunpack.c.l.b16 %v3112
      %v3406 = vunpack.c.l.b16 %v3113
      %v3407 = vunpack.c.l.b16 %v3114
      %v3408 = vunpack.c.l.b16 %v3115
      %v3409 = vunpack.c.l.b16 %v3116
      %v3410 = vunpack.c.l.b16 %v3117
      %v3411 = vunpack.c.l.b16 %v3118
      %v3412 = vunpack.c.l.b16 %v3119
      %v3413 = vunpack.c.l.b16 %v3120
      %v3414 = vunpack.c.l.b16 %v3121
      %v3415 = vunpack.c.l.b16 %v3122
      %v3416 = vunpack.c.l.b16 %v3123
      %v3417 = vunpack.c.l.b16 %v3124
      %v3418 = vunpack.c.l.b16 %v3125
      %v3419 = vunpack.c.l.b16 %v3126
      %v3420 = vunpack.c.l.b16 %v3127
      %v3421 = vunpack.c.l.b16 %v3128
      %v3422 = vunpack.c.l.b16 %v3129
      %v3423 = vunpack.c.l.b16 %v3130
      %v3424 = vunpack.c.l.b16 %v3131
      %v3425 = vunpack.c.l.b16 %v3132
      %v3426 = vunpack.c.l.b16 %v3133
      %v3427 = vunpack.c.l.b16 %v3134
      %v3428 = vunpack.c.l.b16 %v3135
      %v3429 = vunpack.c.l.b16 %v3136
      %v3430 = vunpack.c.l.b16 %v3137
      %v3431 = vunpack.c.l.b16 %v3138
      %v3432 = vunpack.c.l.b16 %v3139
      %v3433 = vunpack.c.l.b16 %v3140
      %v3434 = vunpack.c.l.b16 %v3141
      %v3435 = vunpack.c.l.b16 %v3142
      %v3436 = vunpack.c.l.b16 %v3143
      %v3437 = vunpack.c.l.b16 %v3144
      %v3438 = vunpack.c.l.b16 %v3145
      %v3439 = vunpack.c.l.b16 %v3146
      %v3440 = vunpack.c.l.b16 %v3147
      %v3441 = vunpack.c.l.b16 %v3148
      %v3442 = vunpack.c.l.b16 %v3149
      %v3443 = vunpack.c.l.b16 %v3150
      %v3444 = vunpack.c.l.b16 %v3151
      %v3445 = vunpack.c.l.b16 %v3152
      %v3446 = vunpack.c.l.b16 %v3153
      %v3447 = vunpack.c.l.b16 %v3154
      %v3448 = vunpack.c.l.b16 %v3155
      %v3449 = vunpack.c.l.b16 %v3156
      %v3450 = vunpack.c.l.b16 %v3157
      %v3451 = vunpack.c.l.b16 %v3158
      %v3452 = vunpack.c.l.b16 %v3159
      %v3453 = vunpack.c.l.b16 %v3160
      %v3454 = vunpack.c.l.b16 %v3161
      %v3455 = vunpack.c.l.b16 %v3162
      %v3456 = vunpack.c.l.b16 %v3163
      %v3457 = vunpack.c.l.b16 %v3164
      %v3458 = vunpack.c.l.b16 %v3165
      %v3459 = vunpack.c.l.b16 %v3166
      %v3460 = vunpack.c.l.b16 %v3167
      %v3461 = vunpack.c.l.b16 %v3168
      %v3462 = vunpack.c.l.b16 %v3169
      %v3463 = vunpack.c.l.b16 %v3170
      %v3464 = vunpack.c.l.b16 %v3171
      %v3465 = vunpack.c.l.b16 %v3172
      %v3466 = vunpack.c.l.b16 %v3173
      %v3467 = vunpack.c.l.b16 %v3174
      %v3468 = vunpack.c.l.b16 %v3175
      %v3469 = vunpack.c.l.b16 %v3176
      %v3470 = vunpack.c.l.b16 %v3177
      %v3471 = vunpack.c.l.b16 %v3178
      %v3472 = vunpack.c.l.b16 %v3179
      %v3473 = vunpack.c.l.b16 %v3180
      %v3474 = vunpack.c.l.b16 %v3181
      %v3475 = vunpack.c.l.b16 %v3182
      %v3476 = vunpack.c.l.b16 %v3183
      %v3477 = vunpack.c.l.b16 %v3184
      %v3478 = vunpack.c.l.b16 %v3185
      %v3479 = vunpack.c.l.b16 %v3186
      %v3480 = vunpack.c.l.b16 %v3187
      %v3481 = vunpack.c.l.b16 %v3188
      %v3482 = vunpack.c.l.b16 %v3189
      %v3483 = vunpack.c.l.b16 %v3190
      %v3484 = vunpack.c.l.b16 %v3191
      %v3485 = vunpack.c.l.b16 %v3192
      %v3486 = vunpack.c.l.b16 %v3193
      %v3487 = vunpack.c.l.b16 %v3194
      %v3488 = vunpack.c.l.b16 %v3195
      %v3489 = vunpack.c.l.b16 %v3196
      %v3490 = vunpack.c.l.b16 %v3197
      %v3491 = vunpack.c.l.b16 %v3198
      %v3492 = vunpack.c.l.b16 %v3199
      %v3493 = vunpack.c.l.b16 %v3200
      %v3494 = vunpack.c.l.b16 %v3201
      %v3495 = vunpack.c.l.b16 %v3202
      %v3496 = vunpack.c.l.b16 %v3203
      %v3497 = vunpack.c.l.b16 %v3204
      %v3498 = vunpack.c.l.b16 %v3205
      %v3499 = vunpack.c.l.b16 %v3206
      %v3500 = vunpack.c.l.b16 %v3207
      %v3501 = vunpack.c.l.b16 %v3208
      %v3502 = vunpack.c.l.b16 %v3209
      %v3503 = vunpack.c.l.b16 %v3210
      %v3504 = vpack.c.b16 %v3361, %v3360
      %v3505 = vpack.c.b16 %v3363, %v3362
      %v3506 = vpack.c.b16 %v3365, %v3364
      %v3507 = vpack.c.b16 %v3367, %v3366
      %v3508 = vpack.c.b16 %v3369, %v3368
      %v3509 = vpack.c.b16 %v3371, %v3370
      %v3510 = vpack.c.b16 %v3373, %v3372
      %v3511 = vpack.c.b16 %v3375, %v3374
      %v3512 = vpack.c.b16 %v3377, %v3376
      %v3513 = vpack.c.b16 %v3379, %v3378
      %v3514 = vpack.c.b16 %v3381, %v3380
      %v3515 = vpack.c.b16 %v3383, %v3382
      %v3516 = vpack.c.b16 %v3385, %v3384
      %v3517 = vpack.c.b16 %v3387, %v3386
      %v3518 = vpack.c.b16 %v3389, %v3388
      %v3519 = vpack.c.b16 %v3391, %v3390
      %v3520 = vpack.c.b16 %v3393, %v3392
      %v3521 = vpack.c.b16 %v3395, %v3394
      %v3522 = vpack.c.b16 %v3397, %v3396
      %v3523 = vpack.c.b16 %v3399, %v3398
      %v3524 = vpack.c.b16 %v3401, %v3400
      %v3525 = vpack.c.b16 %v3403, %v3402
      %v3526 = vpack.c.b16 %v3405, %v3404
      %v3527 = vpack.c.b16 %v3407, %v3406
      %v3528 = vpack.c.b16 %v3409, %v3408
      %v3529 = vpack.c.b16 %v3411, %v3410
      %v3530 = vpack.c.b16 %v3413, %v3412
      %v3531 = vpack.c.b16 %v3415, %v3414
      %v3532 = vpack.c.b16 %v3417, %v3416
      %v3533 = vpack.c.b16 %v3419, %v3418
      %v3534 = vpack.c.b16 %v3421, %v3420
      %v3535 = vpack.c.b16 %v3423, %v3422
      %v3536 = vpack.c.b16 %v3425, %v3424
      %v3537 = vpack.c.b16 %v3427, %v3426
      %v3538 = vpack.c.b16 %v3429, %v3428
      %v3539 = vpack.c.b16 %v3431, %v3430
      %v3540 = vpack.c.b16 %v3433, %v3432
      %v3541 = vpack.c.b16 %v3435, %v3434
      %v3542 = vpack.c.b16 %v3437, %v3436
      %v3543 = vpack.c.b16 %v3439, %v3438
      %v3544 = vpack.c.b16 %v3441, %v3440
      %v3545 = vpack.c.b16 %v3443, %v3442
      %v3546 = vpack.c.b16 %v3445, %v3444
      %v3547 = vpack.c.b16 %v3447, %v3446
      %v3548 = vpack.c.b16 %v3449, %v3448
      %v3549 = vpack.c.b16 %v3451, %v3450
      %v3550 = vpack.c.b16 %v3453, %v3452
      %v3551 = vpack.c.b16 %v3455, %v3454
      %v3552 = vpack.c.b16 %v3457, %v3456
      %v3553 = vpack.c.b16 %v3459, %v3458
      %v3554 = vpack.c.b16 %v3461, %v3460
      %v3555 = vpack.c.b16 %v3463, %v3462
      %v3556 = vpack.c.b16 %v3465, %v3464
      %v3557 = vpack.c.b16 %v3467, %v3466
      %v3558 = vpack.c.b16 %v3469, %v3468
      %v3559 = vpack.c.b16 %v3471, %v3470
      %v3560 = vpack.c.b16 %v3473, %v3472
      %v3561 = vpack.c.b16 %v3475, %v3474
      %v3562 = vpack.c.b16 %v3477, %v3476
      %v3563 = vpack.c.b16 %v3479, %v3478
      %v3564 = vpack.c.b16 %v3481, %v3480
      %v3565 = vpack.c.b16 %v3483, %v3482
      %v3566 = vpack.c.b16 %v3485, %v3484
      %v3567 = vpack.c.b16 %v3487, %v3486
      %v3568 = vpack.c.b16 %v3489, %v3488
      %v3569 = vpack.c.b16 %v3491, %v3490
      %v3570 = vpack.c.b16 %v3493, %v3492
      %v3571 = vpack.c.b16 %v3495, %v3494
      %v3572 = vpack.c.b16 %v3497, %v3496
      %v3573 = vpack.c.b16 %v3499, %v3498
      %v3574 = vpack.c.b16 %v3501, %v3500
      %v3575 = vpack.c.b16 %v3503, %v3502
      %3648 = vmatprep.subr.bf16.mxu0 0
      %3649 = vmatpush1.bf16.msra.mxu0 %v3511
      %3650 = vmatprep.subr.bf16.mxu0 0
      %3651 = vmatpush1.bf16.msra.mxu0 %v3510
      %3652 = vmatprep.subr.bf16.mxu0 0
      %3653 = vmatpush1.bf16.msra.mxu0 %v3509
      %3654 = vmatprep.subr.bf16.mxu0 0
      %3655 = vmatpush1.bf16.msra.mxu0 %v3508
      %3656 = vmatprep.subr.bf16.mxu0 0
      %3657 = vmatpush1.bf16.msra.mxu0 %v3507
      %3658 = vmatprep.subr.bf16.mxu0 0
      %3659 = vmatpush1.bf16.msra.mxu0 %v3506
      %3660 = vmatprep.subr.bf16.mxu0 0
      %3661 = vmatpush1.bf16.msra.mxu0 %v3505
      %3662 = vmatprep.subr.bf16.mxu0 0
      %3663 = vmatpush1.bf16.msra.mxu0 %v3504
      %3664 = vmatprep.subr.bf16.mxu0 0
      %3665 = vmatpush2.bf16.msra.mxu0 %v3519
      %3666 = vmatprep.subr.bf16.mxu0 0
      %3667 = vmatpush2.bf16.msra.mxu0 %v3518
      %3668 = vmatprep.subr.bf16.mxu0 0
      %3669 = vmatpush2.bf16.msra.mxu0 %v3517
      %3670 = vmatprep.subr.bf16.mxu0 0
      %3671 = vmatpush2.bf16.msra.mxu0 %v3516
      %3672 = vmatprep.subr.bf16.mxu0 0
      %3673 = vmatpush2.bf16.msra.mxu0 %v3515
      %3674 = vmatprep.subr.bf16.mxu0 0
      %3675 = vmatpush2.bf16.msra.mxu0 %v3514
      %3676 = vmatprep.subr.bf16.mxu0 0
      %3677 = vmatpush2.bf16.msra.mxu0 %v3513
      %3678 = vmatprep.subr.bf16.mxu0 0
      %3679 = vmatpush2.bf16.msra.mxu0 %v3512
      %3680 = vmatprep.mubr.bf16.mxu0 %v2828
      %3681 = vmatmul.mubr.bf16.gmra.mxu0 %v2812
      %v3682 = vpop.f32.mrf.mxu0
      %v3683 = vadd.f32 %v3215, %v3682
      %v3684 = vpop.f32.mrf.mxu0
      %v3685 = vpop.f32.mrf.mxu0
      %v3686 = vadd.f32 %v3215, %v3685
      %v3687 = vpop.f32.mrf.mxu0
      %3688 = vmatprep.mubr.bf16.mxu0 %v2829
      %3689 = vmatmul.mubr.bf16.gmra.mxu0 %v2813
      %v3690 = vpop.f32.mrf.mxu0
      %v3691 = vadd.f32 %v3215, %v3690
      %v3692 = vpop.f32.mrf.mxu0
      %v3693 = vpop.f32.mrf.mxu0
      %v3694 = vadd.f32 %v3215, %v3693
      %v3695 = vpop.f32.mrf.mxu0
      %3696 = vmatprep.mubr.bf16.mxu0 %v2830
      %3697 = vmatmul.mubr.bf16.gmra.mxu0 %v2814
      %v3698 = vpop.f32.mrf.mxu0
      %v3699 = vadd.f32 %v3215, %v3698
      %v3700 = vpop.f32.mrf.mxu0
      %v3701 = vpop.f32.mrf.mxu0
      %v3702 = vadd.f32 %v3215, %v3701
      %v3703 = vpop.f32.mrf.mxu0
      %3704 = vmatprep.mubr.bf16.mxu0 %v2831
      %3705 = vmatmul.mubr.bf16.gmra.mxu0 %v2815
      %v3706 = vpop.f32.mrf.mxu0
      %v3707 = vadd.f32 %v3215, %v3706
      %v3708 = vpop.f32.mrf.mxu0
      %v3709 = vpop.f32.mrf.mxu0
      %v3710 = vadd.f32 %v3215, %v3709
      %v3711 = vpop.f32.mrf.mxu0
      %3712 = vmatprep.mubr.bf16.mxu0 %v2832
      %3713 = vmatmul.mubr.bf16.gmra.mxu0 %v2816
      %v3714 = vpop.f32.mrf.mxu0
      %v3715 = vadd.f32 %v3215, %v3714
      %v3716 = vpop.f32.mrf.mxu0
      %v3717 = vpop.f32.mrf.mxu0
      %v3718 = vadd.f32 %v3215, %v3717
      %v3719 = vpop.f32.mrf.mxu0
      %3720 = vmatprep.mubr.bf16.mxu0 %v2833
      %3721 = vmatmul.mubr.bf16.gmra.mxu0 %v2817
      %v3722 = vpop.f32.mrf.mxu0
      %v3723 = vadd.f32 %v3215, %v3722
      %v3724 = vpop.f32.mrf.mxu0
      %v3725 = vpop.f32.mrf.mxu0
      %v3726 = vadd.f32 %v3215, %v3725
      %v3727 = vpop.f32.mrf.mxu0
      %3728 = vmatprep.mubr.bf16.mxu0 %v2834
      %3729 = vmatmul.mubr.bf16.gmra.mxu0 %v2818
      %v3730 = vpop.f32.mrf.mxu0
      %v3731 = vadd.f32 %v3215, %v3730
      %v3732 = vpop.f32.mrf.mxu0
      %v3733 = vpop.f32.mrf.mxu0
      %v3734 = vadd.f32 %v3215, %v3733
      %v3735 = vpop.f32.mrf.mxu0
      %3736 = vmatprep.mubr.bf16.mxu0 %v2835
      %3737 = vmatmul.mubr.bf16.gmra.mxu0 %v2819
      %v3738 = vpop.f32.mrf.mxu0
      %v3739 = vadd.f32 %v3215, %v3738
      %v3740 = vpop.f32.mrf.mxu0
      %v3741 = vpop.f32.mrf.mxu0
      %v3742 = vadd.f32 %v3215, %v3741
      %v3743 = vpop.f32.mrf.mxu0
      %3744 = vmatprep.mubr.bf16.mxu0 %v2836
      %3745 = vmatmul.mubr.bf16.gmra.mxu0 %v2820
      %v3746 = vpop.f32.mrf.mxu0
      %v3747 = vadd.f32 %v3215, %v3746
      %v3748 = vpop.f32.mrf.mxu0
      %v3749 = vpop.f32.mrf.mxu0
      %v3750 = vadd.f32 %v3215, %v3749
      %v3751 = vpop.f32.mrf.mxu0
      %3752 = vmatprep.mubr.bf16.mxu0 %v2837
      %3753 = vmatmul.mubr.bf16.gmra.mxu0 %v2821
      %v3754 = vpop.f32.mrf.mxu0
      %v3755 = vadd.f32 %v3215, %v3754
      %v3756 = vpop.f32.mrf.mxu0
      %v3757 = vpop.f32.mrf.mxu0
      %v3758 = vadd.f32 %v3215, %v3757
      %v3759 = vpop.f32.mrf.mxu0
      %3760 = vmatprep.mubr.bf16.mxu0 %v2838
      %3761 = vmatmul.mubr.bf16.gmra.mxu0 %v2822
      %v3762 = vpop.f32.mrf.mxu0
      %v3763 = vadd.f32 %v3215, %v3762
      %v3764 = vpop.f32.mrf.mxu0
      %v3765 = vpop.f32.mrf.mxu0
      %v3766 = vadd.f32 %v3215, %v3765
      %v3767 = vpop.f32.mrf.mxu0
      %3768 = vmatprep.mubr.bf16.mxu0 %v2839
      %3769 = vmatmul.mubr.bf16.gmra.mxu0 %v2823
      %v3770 = vpop.f32.mrf.mxu0
      %v3771 = vadd.f32 %v3215, %v3770
      %v3772 = vpop.f32.mrf.mxu0
      %v3773 = vpop.f32.mrf.mxu0
      %v3774 = vadd.f32 %v3215, %v3773
      %v3775 = vpop.f32.mrf.mxu0
      %3776 = vmatprep.mubr.bf16.mxu0 %v2840
      %3777 = vmatmul.mubr.bf16.gmra.mxu0 %v2824
      %v3778 = vpop.f32.mrf.mxu0
      %v3779 = vadd.f32 %v3215, %v3778
      %v3780 = vpop.f32.mrf.mxu0
      %v3781 = vpop.f32.mrf.mxu0
      %v3782 = vadd.f32 %v3215, %v3781
      %v3783 = vpop.f32.mrf.mxu0
      %3784 = vmatprep.mubr.bf16.mxu0 %v2841
      %3785 = vmatmul.mubr.bf16.gmra.mxu0 %v2825
      %v3786 = vpop.f32.mrf.mxu0
      %v3787 = vadd.f32 %v3215, %v3786
      %v3788 = vpop.f32.mrf.mxu0
      %v3789 = vpop.f32.mrf.mxu0
      %v3790 = vadd.f32 %v3215, %v3789
      %v3791 = vpop.f32.mrf.mxu0
      %3792 = vmatprep.mubr.bf16.mxu0 %v2842
      %3793 = vmatmul.mubr.bf16.gmra.mxu0 %v2826
      %v3794 = vpop.f32.mrf.mxu0
      %v3795 = vadd.f32 %v3215, %v3794
      %v3796 = vpop.f32.mrf.mxu0
      %v3797 = vpop.f32.mrf.mxu0
      %v3798 = vadd.f32 %v3215, %v3797
      %v3799 = vpop.f32.mrf.mxu0
      %3800 = vmatprep.mubr.bf16.mxu0 %v2843
      %3801 = vmatmul.mubr.bf16.gmra.mxu0 %v2827
      %v3802 = vpop.f32.mrf.mxu0
      %v3803 = vadd.f32 %v3215, %v3802
      %v3804 = vpop.f32.mrf.mxu0
      %v3805 = vpop.f32.mrf.mxu0
      %v3806 = vadd.f32 %v3215, %v3805
      %v3807 = vpop.f32.mrf.mxu0
      %3808 = vdwg.mxu0
      %3809 = vmatprep.subr.bf16.mxu0 0
      %3810 = vmatpush1.bf16.msra.mxu0 %v3527
      %3811 = vmatprep.subr.bf16.mxu0 0
      %3812 = vmatpush1.bf16.msra.mxu0 %v3526
      %3813 = vmatprep.subr.bf16.mxu0 0
      %3814 = vmatpush1.bf16.msra.mxu0 %v3525
      %3815 = vmatprep.subr.bf16.mxu0 0
      %3816 = vmatpush1.bf16.msra.mxu0 %v3524
      %3817 = vmatprep.subr.bf16.mxu0 0
      %3818 = vmatpush1.bf16.msra.mxu0 %v3523
      %3819 = vmatprep.subr.bf16.mxu0 0
      %3820 = vmatpush1.bf16.msra.mxu0 %v3522
      %3821 = vmatprep.subr.bf16.mxu0 0
      %3822 = vmatpush1.bf16.msra.mxu0 %v3521
      %3823 = vmatprep.subr.bf16.mxu0 0
      %3824 = vmatpush1.bf16.msra.mxu0 %v3520
      %3825 = vmatprep.subr.bf16.mxu0 0
      %3826 = vmatpush2.bf16.msra.mxu0 %v3535
      %3827 = vmatprep.subr.bf16.mxu0 0
      %3828 = vmatpush2.bf16.msra.mxu0 %v3534
      %3829 = vmatprep.subr.bf16.mxu0 0
      %3830 = vmatpush2.bf16.msra.mxu0 %v3533
      %3831 = vmatprep.subr.bf16.mxu0 0
      %3832 = vmatpush2.bf16.msra.mxu0 %v3532
      %3833 = vmatprep.subr.bf16.mxu0 0
      %3834 = vmatpush2.bf16.msra.mxu0 %v3531
      %3835 = vmatprep.subr.bf16.mxu0 0
      %3836 = vmatpush2.bf16.msra.mxu0 %v3530
      %3837 = vmatprep.subr.bf16.mxu0 0
      %3838 = vmatpush2.bf16.msra.mxu0 %v3529
      %3839 = vmatprep.subr.bf16.mxu0 0
      %3840 = vmatpush2.bf16.msra.mxu0 %v3528
      %3841 = vmatprep.mubr.bf16.mxu0 %v2934
      %3842 = vmatmul.mubr.bf16.gmra.mxu0 %v2844
      %v3843 = vpop.f32.mrf.mxu0
      %v3844 = vadd.f32 %v3683, %v3843
      %v3845 = vpop.f32.mrf.mxu0
      %v3846 = vpop.f32.mrf.mxu0
      %v3847 = vadd.f32 %v3686, %v3846
      %v3848 = vpop.f32.mrf.mxu0
      %3849 = vmatprep.mubr.bf16.mxu0 %v2935
      %3850 = vmatmul.mubr.bf16.gmra.mxu0 %v2845
      %v3851 = vpop.f32.mrf.mxu0
      %v3852 = vadd.f32 %v3691, %v3851
      %v3853 = vpop.f32.mrf.mxu0
      %v3854 = vpop.f32.mrf.mxu0
      %v3855 = vadd.f32 %v3694, %v3854
      %v3856 = vpop.f32.mrf.mxu0
      %3857 = vmatprep.mubr.bf16.mxu0 %v2936
      %3858 = vmatmul.mubr.bf16.gmra.mxu0 %v2846
      %v3859 = vpop.f32.mrf.mxu0
      %v3860 = vadd.f32 %v3699, %v3859
      %v3861 = vpop.f32.mrf.mxu0
      %v3862 = vpop.f32.mrf.mxu0
      %v3863 = vadd.f32 %v3702, %v3862
      %v3864 = vpop.f32.mrf.mxu0
      %3865 = vmatprep.mubr.bf16.mxu0 %v2937
      %3866 = vmatmul.mubr.bf16.gmra.mxu0 %v2847
      %v3867 = vpop.f32.mrf.mxu0
      %v3868 = vadd.f32 %v3707, %v3867
      %v3869 = vpop.f32.mrf.mxu0
      %v3870 = vpop.f32.mrf.mxu0
      %v3871 = vadd.f32 %v3710, %v3870
      %v3872 = vpop.f32.mrf.mxu0
      %3873 = vmatprep.mubr.bf16.mxu0 %v2938
      %3874 = vmatmul.mubr.bf16.gmra.mxu0 %v2848
      %v3875 = vpop.f32.mrf.mxu0
      %v3876 = vadd.f32 %v3715, %v3875
      %v3877 = vpop.f32.mrf.mxu0
      %v3878 = vpop.f32.mrf.mxu0
      %v3879 = vadd.f32 %v3718, %v3878
      %v3880 = vpop.f32.mrf.mxu0
      %3881 = vmatprep.mubr.bf16.mxu0 %v2939
      %3882 = vmatmul.mubr.bf16.gmra.mxu0 %v2849
      %v3883 = vpop.f32.mrf.mxu0
      %v3884 = vadd.f32 %v3723, %v3883
      %v3885 = vpop.f32.mrf.mxu0
      %v3886 = vpop.f32.mrf.mxu0
      %v3887 = vadd.f32 %v3726, %v3886
      %v3888 = vpop.f32.mrf.mxu0
      %3889 = vmatprep.mubr.bf16.mxu0 %v2940
      %3890 = vmatmul.mubr.bf16.gmra.mxu0 %v2850
      %v3891 = vpop.f32.mrf.mxu0
      %v3892 = vadd.f32 %v3731, %v3891
      %v3893 = vpop.f32.mrf.mxu0
      %v3894 = vpop.f32.mrf.mxu0
      %v3895 = vadd.f32 %v3734, %v3894
      %v3896 = vpop.f32.mrf.mxu0
      %3897 = vmatprep.mubr.bf16.mxu0 %v2941
      %3898 = vmatmul.mubr.bf16.gmra.mxu0 %v2851
      %v3899 = vpop.f32.mrf.mxu0
      %v3900 = vadd.f32 %v3739, %v3899
      %v3901 = vpop.f32.mrf.mxu0
      %v3902 = vpop.f32.mrf.mxu0
      %v3903 = vadd.f32 %v3742, %v3902
      %v3904 = vpop.f32.mrf.mxu0
      %3905 = vmatprep.mubr.bf16.mxu0 %v2942
      %3906 = vmatmul.mubr.bf16.gmra.mxu0 %v2852
      %v3907 = vpop.f32.mrf.mxu0
      %v3908 = vadd.f32 %v3747, %v3907
      %v3909 = vpop.f32.mrf.mxu0
      %v3910 = vpop.f32.mrf.mxu0
      %v3911 = vadd.f32 %v3750, %v3910
      %v3912 = vpop.f32.mrf.mxu0
      %3913 = vmatprep.mubr.bf16.mxu0 %v2943
      %3914 = vmatmul.mubr.bf16.gmra.mxu0 %v2853
      %v3915 = vpop.f32.mrf.mxu0
      %v3916 = vadd.f32 %v3755, %v3915
      %v3917 = vpop.f32.mrf.mxu0
      %v3918 = vpop.f32.mrf.mxu0
      %v3919 = vadd.f32 %v3758, %v3918
      %v3920 = vpop.f32.mrf.mxu0
      %3921 = vmatprep.mubr.bf16.mxu0 %v2944
      %3922 = vmatmul.mubr.bf16.gmra.mxu0 %v2854
      %v3923 = vpop.f32.mrf.mxu0
      %v3924 = vadd.f32 %v3763, %v3923
      %v3925 = vpop.f32.mrf.mxu0
      %v3926 = vpop.f32.mrf.mxu0
      %v3927 = vadd.f32 %v3766, %v3926
      %v3928 = vpop.f32.mrf.mxu0
      %3929 = vmatprep.mubr.bf16.mxu0 %v2945
      %3930 = vmatmul.mubr.bf16.gmra.mxu0 %v2855
      %v3931 = vpop.f32.mrf.mxu0
      %v3932 = vadd.f32 %v3771, %v3931
      %v3933 = vpop.f32.mrf.mxu0
      %v3934 = vpop.f32.mrf.mxu0
      %v3935 = vadd.f32 %v3774, %v3934
      %v3936 = vpop.f32.mrf.mxu0
      %3937 = vmatprep.mubr.bf16.mxu0 %v2946
      %3938 = vmatmul.mubr.bf16.gmra.mxu0 %v2856
      %v3939 = vpop.f32.mrf.mxu0
      %v3940 = vadd.f32 %v3779, %v3939
      %v3941 = vpop.f32.mrf.mxu0
      %v3942 = vpop.f32.mrf.mxu0
      %v3943 = vadd.f32 %v3782, %v3942
      %v3944 = vpop.f32.mrf.mxu0
      %3945 = vmatprep.mubr.bf16.mxu0 %v2947
      %3946 = vmatmul.mubr.bf16.gmra.mxu0 %v2857
      %v3947 = vpop.f32.mrf.mxu0
      %v3948 = vadd.f32 %v3787, %v3947
      %v3949 = vpop.f32.mrf.mxu0
      %v3950 = vpop.f32.mrf.mxu0
      %v3951 = vadd.f32 %v3790, %v3950
      %v3952 = vpop.f32.mrf.mxu0
      %3953 = vmatprep.mubr.bf16.mxu0 %v2948
      %3954 = vmatmul.mubr.bf16.gmra.mxu0 %v2858
      %v3955 = vpop.f32.mrf.mxu0
      %v3956 = vadd.f32 %v3795, %v3955
      %v3957 = vpop.f32.mrf.mxu0
      %v3958 = vpop.f32.mrf.mxu0
      %v3959 = vadd.f32 %v3798, %v3958
      %v3960 = vpop.f32.mrf.mxu0
      %3961 = vmatprep.mubr.bf16.mxu0 %v2949
      %3962 = vmatmul.mubr.bf16.gmra.mxu0 %v2859
      %v3963 = vpop.f32.mrf.mxu0
      %v3964 = vadd.f32 %v3803, %v3963
      %v3965 = vpop.f32.mrf.mxu0
      %v3966 = vpop.f32.mrf.mxu0
      %v3967 = vadd.f32 %v3806, %v3966
      %v3968 = vpop.f32.mrf.mxu0
      %3969 = vdwg.mxu0
      %3970 = vmatprep.subr.bf16.mxu0 0
      %3971 = vmatpush1.bf16.msra.mxu0 %v3543
      %3972 = vmatprep.subr.bf16.mxu0 0
      %3973 = vmatpush1.bf16.msra.mxu0 %v3542
      %3974 = vmatprep.subr.bf16.mxu0 0
      %3975 = vmatpush1.bf16.msra.mxu0 %v3541
      %3976 = vmatprep.subr.bf16.mxu0 0
      %3977 = vmatpush1.bf16.msra.mxu0 %v3540
      %3978 = vmatprep.subr.bf16.mxu0 0
      %3979 = vmatpush1.bf16.msra.mxu0 %v3539
      %3980 = vmatprep.subr.bf16.mxu0 0
      %3981 = vmatpush1.bf16.msra.mxu0 %v3538
      %3982 = vmatprep.subr.bf16.mxu0 0
      %3983 = vmatpush1.bf16.msra.mxu0 %v3537
      %3984 = vmatprep.subr.bf16.mxu0 0
      %3985 = vmatpush1.bf16.msra.mxu0 %v3536
      %3986 = vmatprep.subr.bf16.mxu0 0
      %3987 = vmatpush2.bf16.msra.mxu0 %v3551
      %3988 = vmatprep.subr.bf16.mxu0 0
      %3989 = vmatpush2.bf16.msra.mxu0 %v3550
      %3990 = vmatprep.subr.bf16.mxu0 0
      %3991 = vmatpush2.bf16.msra.mxu0 %v3549
      %3992 = vmatprep.subr.bf16.mxu0 0
      %3993 = vmatpush2.bf16.msra.mxu0 %v3548
      %3994 = vmatprep.subr.bf16.mxu0 0
      %3995 = vmatpush2.bf16.msra.mxu0 %v3547
      %3996 = vmatprep.subr.bf16.mxu0 0
      %3997 = vmatpush2.bf16.msra.mxu0 %v3546
      %3998 = vmatprep.subr.bf16.mxu0 0
      %3999 = vmatpush2.bf16.msra.mxu0 %v3545
      %4000 = vmatprep.subr.bf16.mxu0 0
      %4001 = vmatpush2.bf16.msra.mxu0 %v3544
      %4002 = vmatprep.mubr.bf16.mxu0 %v2951
      %4003 = vmatmul.mubr.bf16.gmra.mxu0 %v2829
      %v4004 = vpop.f32.mrf.mxu0
      %v4005 = vadd.f32 %v3844, %v4004
      %v4006 = vpop.f32.mrf.mxu0
      %v4007 = vpop.f32.mrf.mxu0
      %v4008 = vadd.f32 %v3847, %v4007
      %v4009 = vpop.f32.mrf.mxu0
      %4010 = vmatprep.mubr.bf16.mxu0 %v2952
      %4011 = vmatmul.mubr.bf16.gmra.mxu0 %v2830
      %v4012 = vpop.f32.mrf.mxu0
      %v4013 = vadd.f32 %v3852, %v4012
      %v4014 = vpop.f32.mrf.mxu0
      %v4015 = vpop.f32.mrf.mxu0
      %v4016 = vadd.f32 %v3855, %v4015
      %v4017 = vpop.f32.mrf.mxu0
      %4018 = vmatprep.mubr.bf16.mxu0 %v2953
      %4019 = vmatmul.mubr.bf16.gmra.mxu0 %v2831
      %v4020 = vpop.f32.mrf.mxu0
      %v4021 = vadd.f32 %v3860, %v4020
      %v4022 = vpop.f32.mrf.mxu0
      %v4023 = vpop.f32.mrf.mxu0
      %v4024 = vadd.f32 %v3863, %v4023
      %v4025 = vpop.f32.mrf.mxu0
      %4026 = vmatprep.mubr.bf16.mxu0 %v2954
      %4027 = vmatmul.mubr.bf16.gmra.mxu0 %v2832
      %v4028 = vpop.f32.mrf.mxu0
      %v4029 = vadd.f32 %v3868, %v4028
      %v4030 = vpop.f32.mrf.mxu0
      %v4031 = vpop.f32.mrf.mxu0
      %v4032 = vadd.f32 %v3871, %v4031
      %v4033 = vpop.f32.mrf.mxu0
      %4034 = vmatprep.mubr.bf16.mxu0 %v2955
      %4035 = vmatmul.mubr.bf16.gmra.mxu0 %v2833
      %v4036 = vpop.f32.mrf.mxu0
      %v4037 = vadd.f32 %v3876, %v4036
      %v4038 = vpop.f32.mrf.mxu0
      %v4039 = vpop.f32.mrf.mxu0
      %v4040 = vadd.f32 %v3879, %v4039
      %v4041 = vpop.f32.mrf.mxu0
      %4042 = vmatprep.mubr.bf16.mxu0 %v2956
      %4043 = vmatmul.mubr.bf16.gmra.mxu0 %v2834
      %v4044 = vpop.f32.mrf.mxu0
      %v4045 = vadd.f32 %v3884, %v4044
      %v4046 = vpop.f32.mrf.mxu0
      %v4047 = vpop.f32.mrf.mxu0
      %v4048 = vadd.f32 %v3887, %v4047
      %v4049 = vpop.f32.mrf.mxu0
      %4050 = vmatprep.mubr.bf16.mxu0 %v2957
      %4051 = vmatmul.mubr.bf16.gmra.mxu0 %v2835
      %v4052 = vpop.f32.mrf.mxu0
      %v4053 = vadd.f32 %v3892, %v4052
      %v4054 = vpop.f32.mrf.mxu0
      %v4055 = vpop.f32.mrf.mxu0
      %v4056 = vadd.f32 %v3895, %v4055
      %v4057 = vpop.f32.mrf.mxu0
      %4058 = vmatprep.mubr.bf16.mxu0 %v2958
      %4059 = vmatmul.mubr.bf16.gmra.mxu0 %v2836
      %v4060 = vpop.f32.mrf.mxu0
      %v4061 = vadd.f32 %v3900, %v4060
      %v4062 = vpop.f32.mrf.mxu0
      %v4063 = vpop.f32.mrf.mxu0
      %v4064 = vadd.f32 %v3903, %v4063
      %v4065 = vpop.f32.mrf.mxu0
      %4066 = vmatprep.mubr.bf16.mxu0 %v2959
      %4067 = vmatmul.mubr.bf16.gmra.mxu0 %v2837
      %v4068 = vpop.f32.mrf.mxu0
      %v4069 = vadd.f32 %v3908, %v4068
      %v4070 = vpop.f32.mrf.mxu0
      %v4071 = vpop.f32.mrf.mxu0
      %v4072 = vadd.f32 %v3911, %v4071
      %v4073 = vpop.f32.mrf.mxu0
      %4074 = vmatprep.mubr.bf16.mxu0 %v2960
      %4075 = vmatmul.mubr.bf16.gmra.mxu0 %v2838
      %v4076 = vpop.f32.mrf.mxu0
      %v4077 = vadd.f32 %v3916, %v4076
      %v4078 = vpop.f32.mrf.mxu0
      %v4079 = vpop.f32.mrf.mxu0
      %v4080 = vadd.f32 %v3919, %v4079
      %v4081 = vpop.f32.mrf.mxu0
      %4082 = vmatprep.mubr.bf16.mxu0 %v2961
      %4083 = vmatmul.mubr.bf16.gmra.mxu0 %v2839
      %v4084 = vpop.f32.mrf.mxu0
      %v4085 = vadd.f32 %v3924, %v4084
      %v4086 = vpop.f32.mrf.mxu0
      %v4087 = vpop.f32.mrf.mxu0
      %v4088 = vadd.f32 %v3927, %v4087
      %v4089 = vpop.f32.mrf.mxu0
      %4090 = vmatprep.mubr.bf16.mxu0 %v2962
      %4091 = vmatmul.mubr.bf16.gmra.mxu0 %v2840
      %v4092 = vpop.f32.mrf.mxu0
      %v4093 = vadd.f32 %v3932, %v4092
      %v4094 = vpop.f32.mrf.mxu0
      %v4095 = vpop.f32.mrf.mxu0
      %v4096 = vadd.f32 %v3935, %v4095
      %v4097 = vpop.f32.mrf.mxu0
      %4098 = vmatprep.mubr.bf16.mxu0 %v2963
      %4099 = vmatmul.mubr.bf16.gmra.mxu0 %v2841
      %v4100 = vpop.f32.mrf.mxu0
      %v4101 = vadd.f32 %v3940, %v4100
      %v4102 = vpop.f32.mrf.mxu0
      %v4103 = vpop.f32.mrf.mxu0
      %v4104 = vadd.f32 %v3943, %v4103
      %v4105 = vpop.f32.mrf.mxu0
      %4106 = vmatprep.mubr.bf16.mxu0 %v2964
      %4107 = vmatmul.mubr.bf16.gmra.mxu0 %v2842
      %v4108 = vpop.f32.mrf.mxu0
      %v4109 = vadd.f32 %v3948, %v4108
      %v4110 = vpop.f32.mrf.mxu0
      %v4111 = vpop.f32.mrf.mxu0
      %v4112 = vadd.f32 %v3951, %v4111
      %v4113 = vpop.f32.mrf.mxu0
      %4114 = vmatprep.mubr.bf16.mxu0 %v2965
      %4115 = vmatmul.mubr.bf16.gmra.mxu0 %v2843
      %v4116 = vpop.f32.mrf.mxu0
      %v4117 = vadd.f32 %v3956, %v4116
      %v4118 = vpop.f32.mrf.mxu0
      %v4119 = vpop.f32.mrf.mxu0
      %v4120 = vadd.f32 %v3959, %v4119
      %v4121 = vpop.f32.mrf.mxu0
      %4122 = vmatprep.mubr.bf16.mxu0 %v2966
      %4123 = vmatmul.mubr.bf16.gmra.mxu0 %v2950
      %v4124 = vpop.f32.mrf.mxu0
      %v4125 = vadd.f32 %v3964, %v4124
      %v4126 = vpop.f32.mrf.mxu0
      %v4127 = vpop.f32.mrf.mxu0
      %v4128 = vadd.f32 %v3967, %v4127
      %v4129 = vpop.f32.mrf.mxu0
      %4130 = vdwg.mxu0
      %4131 = vmatprep.subr.bf16.mxu0 0
      %4132 = vmatpush1.bf16.msra.mxu0 %v3559
      %4133 = vmatprep.subr.bf16.mxu0 0
      %4134 = vmatpush1.bf16.msra.mxu0 %v3558
      %4135 = vmatprep.subr.bf16.mxu0 0
      %4136 = vmatpush1.bf16.msra.mxu0 %v3557
      %4137 = vmatprep.subr.bf16.mxu0 0
      %4138 = vmatpush1.bf16.msra.mxu0 %v3556
      %4139 = vmatprep.subr.bf16.mxu0 0
      %4140 = vmatpush1.bf16.msra.mxu0 %v3555
      %4141 = vmatprep.subr.bf16.mxu0 0
      %4142 = vmatpush1.bf16.msra.mxu0 %v3554
      %4143 = vmatprep.subr.bf16.mxu0 0
      %4144 = vmatpush1.bf16.msra.mxu0 %v3553
      %4145 = vmatprep.subr.bf16.mxu0 0
      %4146 = vmatpush1.bf16.msra.mxu0 %v3552
      %4147 = vmatprep.subr.bf16.mxu0 0
      %4148 = vmatpush2.bf16.msra.mxu0 %v3567
      %4149 = vmatprep.subr.bf16.mxu0 0
      %4150 = vmatpush2.bf16.msra.mxu0 %v3566
      %4151 = vmatprep.subr.bf16.mxu0 0
      %4152 = vmatpush2.bf16.msra.mxu0 %v3565
      %4153 = vmatprep.subr.bf16.mxu0 0
      %4154 = vmatpush2.bf16.msra.mxu0 %v3564
      %4155 = vmatprep.subr.bf16.mxu0 0
      %4156 = vmatpush2.bf16.msra.mxu0 %v3563
      %4157 = vmatprep.subr.bf16.mxu0 0
      %4158 = vmatpush2.bf16.msra.mxu0 %v3562
      %4159 = vmatprep.subr.bf16.mxu0 0
      %4160 = vmatpush2.bf16.msra.mxu0 %v3561
      %4161 = vmatprep.subr.bf16.mxu0 0
      %4162 = vmatpush2.bf16.msra.mxu0 %v3560
      %4163 = vmatprep.mubr.bf16.mxu0 %v2830
      %4164 = vmatmul.mubr.bf16.gmra.mxu0 %v3035
      %v4165 = vpop.f32.mrf.mxu0
      %v4166 = vadd.f32 %v4005, %v4165
      %v4167 = vpop.f32.mrf.mxu0
      %v4168 = vpop.f32.mrf.mxu0
      %v4169 = vadd.f32 %v4008, %v4168
      %v4170 = vpop.f32.mrf.mxu0
      %4171 = vmatprep.mubr.bf16.mxu0 %v2831
      %4172 = vmatmul.mubr.bf16.gmra.mxu0 %v3036
      %v4173 = vpop.f32.mrf.mxu0
      %v4174 = vadd.f32 %v4013, %v4173
      %v4175 = vpop.f32.mrf.mxu0
      %v4176 = vpop.f32.mrf.mxu0
      %v4177 = vadd.f32 %v4016, %v4176
      %v4178 = vpop.f32.mrf.mxu0
      %4179 = vmatprep.mubr.bf16.mxu0 %v2832
      %4180 = vmatmul.mubr.bf16.gmra.mxu0 %v3037
      %v4181 = vpop.f32.mrf.mxu0
      %v4182 = vadd.f32 %v4021, %v4181
      %v4183 = vpop.f32.mrf.mxu0
      %v4184 = vpop.f32.mrf.mxu0
      %v4185 = vadd.f32 %v4024, %v4184
      %v4186 = vpop.f32.mrf.mxu0
      %4187 = vmatprep.mubr.bf16.mxu0 %v2833
      %4188 = vmatmul.mubr.bf16.gmra.mxu0 %v3038
      %v4189 = vpop.f32.mrf.mxu0
      %v4190 = vadd.f32 %v4029, %v4189
      %v4191 = vpop.f32.mrf.mxu0
      %v4192 = vpop.f32.mrf.mxu0
      %v4193 = vadd.f32 %v4032, %v4192
      %v4194 = vpop.f32.mrf.mxu0
      %4195 = vmatprep.mubr.bf16.mxu0 %v2834
      %4196 = vmatmul.mubr.bf16.gmra.mxu0 %v3039
      %v4197 = vpop.f32.mrf.mxu0
      %v4198 = vadd.f32 %v4037, %v4197
      %v4199 = vpop.f32.mrf.mxu0
      %v4200 = vpop.f32.mrf.mxu0
      %v4201 = vadd.f32 %v4040, %v4200
      %v4202 = vpop.f32.mrf.mxu0
      %4203 = vmatprep.mubr.bf16.mxu0 %v2835
      %4204 = vmatmul.mubr.bf16.gmra.mxu0 %v3040
      %v4205 = vpop.f32.mrf.mxu0
      %v4206 = vadd.f32 %v4045, %v4205
      %v4207 = vpop.f32.mrf.mxu0
      %v4208 = vpop.f32.mrf.mxu0
      %v4209 = vadd.f32 %v4048, %v4208
      %v4210 = vpop.f32.mrf.mxu0
      %4211 = vmatprep.mubr.bf16.mxu0 %v2836
      %4212 = vmatmul.mubr.bf16.gmra.mxu0 %v3041
      %v4213 = vpop.f32.mrf.mxu0
      %v4214 = vadd.f32 %v4053, %v4213
      %v4215 = vpop.f32.mrf.mxu0
      %v4216 = vpop.f32.mrf.mxu0
      %v4217 = vadd.f32 %v4056, %v4216
      %v4218 = vpop.f32.mrf.mxu0
      %4219 = vmatprep.mubr.bf16.mxu0 %v2837
      %4220 = vmatmul.mubr.bf16.gmra.mxu0 %v3042
      %v4221 = vpop.f32.mrf.mxu0
      %v4222 = vadd.f32 %v4061, %v4221
      %v4223 = vpop.f32.mrf.mxu0
      %v4224 = vpop.f32.mrf.mxu0
      %v4225 = vadd.f32 %v4064, %v4224
      %v4226 = vpop.f32.mrf.mxu0
      %4227 = vmatprep.mubr.bf16.mxu0 %v2838
      %4228 = vmatmul.mubr.bf16.gmra.mxu0 %v3043
      %v4229 = vpop.f32.mrf.mxu0
      %v4230 = vadd.f32 %v4069, %v4229
      %v4231 = vpop.f32.mrf.mxu0
      %v4232 = vpop.f32.mrf.mxu0
      %v4233 = vadd.f32 %v4072, %v4232
      %v4234 = vpop.f32.mrf.mxu0
      %4235 = vmatprep.mubr.bf16.mxu0 %v2839
      %4236 = vmatmul.mubr.bf16.gmra.mxu0 %v3044
      %v4237 = vpop.f32.mrf.mxu0
      %v4238 = vadd.f32 %v4077, %v4237
      %v4239 = vpop.f32.mrf.mxu0
      %v4240 = vpop.f32.mrf.mxu0
      %v4241 = vadd.f32 %v4080, %v4240
      %v4242 = vpop.f32.mrf.mxu0
      %4243 = vmatprep.mubr.bf16.mxu0 %v2840
      %4244 = vmatmul.mubr.bf16.gmra.mxu0 %v3045
      %v4245 = vpop.f32.mrf.mxu0
      %v4246 = vadd.f32 %v4085, %v4245
      %v4247 = vpop.f32.mrf.mxu0
      %v4248 = vpop.f32.mrf.mxu0
      %v4249 = vadd.f32 %v4088, %v4248
      %v4250 = vpop.f32.mrf.mxu0
      %4251 = vmatprep.mubr.bf16.mxu0 %v2841
      %4252 = vmatmul.mubr.bf16.gmra.mxu0 %v3046
      %v4253 = vpop.f32.mrf.mxu0
      %v4254 = vadd.f32 %v4093, %v4253
      %v4255 = vpop.f32.mrf.mxu0
      %v4256 = vpop.f32.mrf.mxu0
      %v4257 = vadd.f32 %v4096, %v4256
      %v4258 = vpop.f32.mrf.mxu0
      %4259 = vmatprep.mubr.bf16.mxu0 %v2842
      %4260 = vmatmul.mubr.bf16.gmra.mxu0 %v3047
      %v4261 = vpop.f32.mrf.mxu0
      %v4262 = vadd.f32 %v4101, %v4261
      %v4263 = vpop.f32.mrf.mxu0
      %v4264 = vpop.f32.mrf.mxu0
      %v4265 = vadd.f32 %v4104, %v4264
      %v4266 = vpop.f32.mrf.mxu0
      %4267 = vmatprep.mubr.bf16.mxu0 %v2843
      %4268 = vmatmul.mubr.bf16.gmra.mxu0 %v3048
      %v4269 = vpop.f32.mrf.mxu0
      %v4270 = vadd.f32 %v4109, %v4269
      %v4271 = vpop.f32.mrf.mxu0
      %v4272 = vpop.f32.mrf.mxu0
      %v4273 = vadd.f32 %v4112, %v4272
      %v4274 = vpop.f32.mrf.mxu0
      %4275 = vmatprep.mubr.bf16.mxu0 %v2950
      %4276 = vmatmul.mubr.bf16.gmra.mxu0 %v3049
      %v4277 = vpop.f32.mrf.mxu0
      %v4278 = vadd.f32 %v4117, %v4277
      %v4279 = vpop.f32.mrf.mxu0
      %v4280 = vpop.f32.mrf.mxu0
      %v4281 = vadd.f32 %v4120, %v4280
      %v4282 = vpop.f32.mrf.mxu0
      %4283 = vmatprep.mubr.bf16.mxu0 %v2828
      %4284 = vmatmul.mubr.bf16.gmra.mxu0 %v3050
      %v4285 = vpop.f32.mrf.mxu0
      %v4286 = vadd.f32 %v4125, %v4285
      %v4287 = vpop.f32.mrf.mxu0
      %v4288 = vpop.f32.mrf.mxu0
      %v4289 = vadd.f32 %v4128, %v4288
      %v4290 = vpop.f32.mrf.mxu0
      %4291 = vdwg.mxu0
      %4292 = vmatprep.subr.bf16.mxu0 0
      %4293 = vmatpush1.bf16.msra.mxu0 %v3575
      %4294 = vmatprep.subr.bf16.mxu0 0
      %4295 = vmatpush1.bf16.msra.mxu0 %v3574
      %4296 = vmatprep.subr.bf16.mxu0 0
      %4297 = vmatpush1.bf16.msra.mxu0 %v3573
      %4298 = vmatprep.subr.bf16.mxu0 0
      %4299 = vmatpush1.bf16.msra.mxu0 %v3572
      %4300 = vmatprep.subr.bf16.mxu0 0
      %4301 = vmatpush1.bf16.msra.mxu0 %v3571
      %4302 = vmatprep.subr.bf16.mxu0 0
      %4303 = vmatpush1.bf16.msra.mxu0 %v3570
      %4304 = vmatprep.subr.bf16.mxu0 0
      %4305 = vmatpush1.bf16.msra.mxu0 %v3569
      %4306 = vmatprep.subr.bf16.mxu0 0
      %4307 = vmatpush1.bf16.msra.mxu0 %v3568
      %4308 = vmatprep.subr.bf16.mxu0 0
      %4309 = vmatpush2.bf16.msra.mxu0 0
      %4310 = vmatprep.subr.bf16.mxu0 0
      %4311 = vmatpush2.bf16.msra.mxu0 0
      %4312 = vmatprep.subr.bf16.mxu0 0
      %4313 = vmatpush2.bf16.msra.mxu0 0
      %4314 = vmatprep.subr.bf16.mxu0 0
      %4315 = vmatpush2.bf16.msra.mxu0 0
      %4316 = vmatprep.subr.bf16.mxu0 0
      %4317 = vmatpush2.bf16.msra.mxu0 0
      %4318 = vmatprep.subr.bf16.mxu0 0
      %4319 = vmatpush2.bf16.msra.mxu0 0
      %4320 = vmatprep.subr.bf16.mxu0 0
      %4321 = vmatpush2.bf16.msra.mxu0 0
      %4322 = vmatprep.subr.bf16.mxu0 0
      %4323 = vmatpush2.bf16.msra.mxu0 0
      %4324 = vmatprep.mubr.bf16.mxu0 0
      %4325 = vmatmul.mubr.bf16.gmra.mxu0 %v3051
      %v4326 = vpop.f32.mrf.mxu0
      %v4327 = vadd.f32 %v4166, %v4326
      %v4328 = vpop.f32.mrf.mxu0
      %v4329 = vpop.f32.mrf.mxu0
      %v4330 = vadd.f32 %v4169, %v4329
      %v4331 = vpop.f32.mrf.mxu0
      %4332 = vmatprep.mubr.bf16.mxu0 0
      %4333 = vmatmul.mubr.bf16.gmra.mxu0 %v3052
      %v4334 = vpop.f32.mrf.mxu0
      %v4335 = vadd.f32 %v4174, %v4334
      %v4336 = vpop.f32.mrf.mxu0
      %v4337 = vpop.f32.mrf.mxu0
      %v4338 = vadd.f32 %v4177, %v4337
      %v4339 = vpop.f32.mrf.mxu0
      %4340 = vmatprep.mubr.bf16.mxu0 0
      %4341 = vmatmul.mubr.bf16.gmra.mxu0 %v3053
      %v4342 = vpop.f32.mrf.mxu0
      %v4343 = vadd.f32 %v4182, %v4342
      %v4344 = vpop.f32.mrf.mxu0
      %v4345 = vpop.f32.mrf.mxu0
      %v4346 = vadd.f32 %v4185, %v4345
      %v4347 = vpop.f32.mrf.mxu0
      %4348 = vmatprep.mubr.bf16.mxu0 0
      %4349 = vmatmul.mubr.bf16.gmra.mxu0 %v3054
      %v4350 = vpop.f32.mrf.mxu0
      %v4351 = vadd.f32 %v4190, %v4350
      %v4352 = vpop.f32.mrf.mxu0
      %v4353 = vpop.f32.mrf.mxu0
      %v4354 = vadd.f32 %v4193, %v4353
      %v4355 = vpop.f32.mrf.mxu0
      %4356 = vmatprep.mubr.bf16.mxu0 0
      %4357 = vmatmul.mubr.bf16.gmra.mxu0 %v3055
      %v4358 = vpop.f32.mrf.mxu0
      %v4359 = vadd.f32 %v4198, %v4358
      %v4360 = vpop.f32.mrf.mxu0
      %v4361 = vpop.f32.mrf.mxu0
      %v4362 = vadd.f32 %v4201, %v4361
      %v4363 = vpop.f32.mrf.mxu0
      %4364 = vmatprep.mubr.bf16.mxu0 0
      %4365 = vmatmul.mubr.bf16.gmra.mxu0 %v3056
      %v4366 = vpop.f32.mrf.mxu0
      %v4367 = vadd.f32 %v4206, %v4366
      %v4368 = vpop.f32.mrf.mxu0
      %v4369 = vpop.f32.mrf.mxu0
      %v4370 = vadd.f32 %v4209, %v4369
      %v4371 = vpop.f32.mrf.mxu0
      %4372 = vmatprep.mubr.bf16.mxu0 0
      %4373 = vmatmul.mubr.bf16.gmra.mxu0 %v3057
      %v4374 = vpop.f32.mrf.mxu0
      %v4375 = vadd.f32 %v4214, %v4374
      %v4376 = vpop.f32.mrf.mxu0
      %v4377 = vpop.f32.mrf.mxu0
      %v4378 = vadd.f32 %v4217, %v4377
      %v4379 = vpop.f32.mrf.mxu0
      %4380 = vmatprep.mubr.bf16.mxu0 0
      %4381 = vmatmul.mubr.bf16.gmra.mxu0 %v3058
      %v4382 = vpop.f32.mrf.mxu0
      %v4383 = vadd.f32 %v4222, %v4382
      %v4384 = vpop.f32.mrf.mxu0
      %v4385 = vpop.f32.mrf.mxu0
      %v4386 = vadd.f32 %v4225, %v4385
      %v4387 = vpop.f32.mrf.mxu0
      %4388 = vmatprep.mubr.bf16.mxu0 0
      %4389 = vmatmul.mubr.bf16.gmra.mxu0 %v3059
      %v4390 = vpop.f32.mrf.mxu0
      %v4391 = vadd.f32 %v4230, %v4390
      %v4392 = vpop.f32.mrf.mxu0
      %v4393 = vpop.f32.mrf.mxu0
      %v4394 = vadd.f32 %v4233, %v4393
      %v4395 = vpop.f32.mrf.mxu0
      %4396 = vmatprep.mubr.bf16.mxu0 0
      %4397 = vmatmul.mubr.bf16.gmra.mxu0 %v3060
      %v4398 = vpop.f32.mrf.mxu0
      %v4399 = vadd.f32 %v4238, %v4398
      %v4400 = vpop.f32.mrf.mxu0
      %v4401 = vpop.f32.mrf.mxu0
      %v4402 = vadd.f32 %v4241, %v4401
      %v4403 = vpop.f32.mrf.mxu0
      %4404 = vmatprep.mubr.bf16.mxu0 0
      %4405 = vmatmul.mubr.bf16.gmra.mxu0 %v3061
      %v4406 = vpop.f32.mrf.mxu0
      %v4407 = vadd.f32 %v4246, %v4406
      %v4408 = vpop.f32.mrf.mxu0
      %v4409 = vpop.f32.mrf.mxu0
      %v4410 = vadd.f32 %v4249, %v4409
      %v4411 = vpop.f32.mrf.mxu0
      %4412 = vmatprep.mubr.bf16.mxu0 0
      %4413 = vmatmul.mubr.bf16.gmra.mxu0 %v3062
      %v4414 = vpop.f32.mrf.mxu0
      %v4415 = vadd.f32 %v4254, %v4414
      %v4416 = vpop.f32.mrf.mxu0
      %v4417 = vpop.f32.mrf.mxu0
      %v4418 = vadd.f32 %v4257, %v4417
      %v4419 = vpop.f32.mrf.mxu0
      %4420 = vmatprep.mubr.bf16.mxu0 0
      %4421 = vmatmul.mubr.bf16.gmra.mxu0 %v3063
      %v4422 = vpop.f32.mrf.mxu0
      %v4423 = vadd.f32 %v4262, %v4422
      %v4424 = vpop.f32.mrf.mxu0
      %v4425 = vpop.f32.mrf.mxu0
      %v4426 = vadd.f32 %v4265, %v4425
      %v4427 = vpop.f32.mrf.mxu0
      %4428 = vmatprep.mubr.bf16.mxu0 0
      %4429 = vmatmul.mubr.bf16.gmra.mxu0 %v3064
      %v4430 = vpop.f32.mrf.mxu0
      %v4431 = vadd.f32 %v4270, %v4430
      %v4432 = vpop.f32.mrf.mxu0
      %v4433 = vpop.f32.mrf.mxu0
      %v4434 = vadd.f32 %v4273, %v4433
      %v4435 = vpop.f32.mrf.mxu0
      %4436 = vmatprep.mubr.bf16.mxu0 0
      %4437 = vmatmul.mubr.bf16.gmra.mxu0 %v3065
      %v4438 = vpop.f32.mrf.mxu0
      %v4439 = vadd.f32 %v4278, %v4438
      %v4440 = vpop.f32.mrf.mxu0
      %v4441 = vpop.f32.mrf.mxu0
      %v4442 = vadd.f32 %v4281, %v4441
      %v4443 = vpop.f32.mrf.mxu0
      %4444 = vmatprep.mubr.bf16.mxu0 0
      %4445 = vmatmul.mubr.bf16.gmra.mxu0 %v3066
      %v4446 = vpop.f32.mrf.mxu0
      %v4447 = vadd.f32 %v4286, %v4446
      %v4448 = vpop.f32.mrf.mxu0
      %v4449 = vpop.f32.mrf.mxu0
      %v4450 = vadd.f32 %v4289, %v4449
      %v4451 = vpop.f32.mrf.mxu0
      %4452 = vdwg.mxu0
      %v4453 = vadd.f32 %v4327, %v718
      %v4454 = vadd.f32 %v4330, %v719
      %v4455 = vadd.f32 %v4335, %v720
      %v4456 = vadd.f32 %v4338, %v721
      %v4457 = vadd.f32 %v4343, %v722
      %v4458 = vadd.f32 %v4346, %v723
      %v4459 = vadd.f32 %v4351, %v724
      %v4460 = vadd.f32 %v4354, %v725
      %v4461 = vadd.f32 %v4359, %v726
      %v4462 = vadd.f32 %v4362, %v727
      %v4463 = vadd.f32 %v4367, %v728
      %v4464 = vadd.f32 %v4370, %v729
      %v4465 = vadd.f32 %v4375, %v730
      %v4466 = vadd.f32 %v4378, %v731
      %v4467 = vadd.f32 %v4383, %v732
      %v4468 = vadd.f32 %v4386, %v733
      %v4469 = vadd.f32 %v4391, %v734
      %v4470 = vadd.f32 %v4394, %v735
      %v4471 = vadd.f32 %v4399, %v736
      %v4472 = vadd.f32 %v4402, %v737
      %v4473 = vadd.f32 %v4407, %v738
      %v4474 = vadd.f32 %v4410, %v739
      %v4475 = vadd.f32 %v4415, %v740
      %v4476 = vadd.f32 %v4418, %v741
      %v4477 = vadd.f32 %v4423, %v742
      %v4478 = vadd.f32 %v4426, %v743
      %v4479 = vadd.f32 %v4431, %v744
      %v4480 = vadd.f32 %v4434, %v745
      %v4481 = vadd.f32 %v4439, %v746
      %v4482 = vadd.f32 %v4442, %v747
      %v4483 = vadd.f32 %v4447, %v748
      %v4484 = vadd.f32 %v4450, %v749
      %v4485 = vmax.f32 %v4453, 0.0
      %v4486 = vmax.f32 %v4454, 0.0
      %v4487 = vmax.f32 %v4455, 0.0
      %v4488 = vmax.f32 %v4456, 0.0
      %v4489 = vmax.f32 %v4457, 0.0
      %v4490 = vmax.f32 %v4458, 0.0
      %v4491 = vmax.f32 %v4459, 0.0
      %v4492 = vmax.f32 %v4460, 0.0
      %v4493 = vmax.f32 %v4461, 0.0
      %v4494 = vmax.f32 %v4462, 0.0
      %v4495 = vmax.f32 %v4463, 0.0
      %v4496 = vmax.f32 %v4464, 0.0
      %v4497 = vmax.f32 %v4465, 0.0
      %v4498 = vmax.f32 %v4466, 0.0
      %v4499 = vmax.f32 %v4467, 0.0
      %v4500 = vmax.f32 %v4468, 0.0
      %v4501 = vmax.f32 %v4469, 0.0
      %v4502 = vmax.f32 %v4470, 0.0
      %v4503 = vmax.f32 %v4471, 0.0
      %v4504 = vmax.f32 %v4472, 0.0
      %v4505 = vmax.f32 %v4473, 0.0
      %v4506 = vmax.f32 %v4474, 0.0
      %v4507 = vmax.f32 %v4475, 0.0
      %v4508 = vmax.f32 %v4476, 0.0
      %v4509 = vmax.f32 %v4477, 0.0
      %v4510 = vmax.f32 %v4478, 0.0
      %v4511 = vmax.f32 %v4479, 0.0
      %v4512 = vmax.f32 %v4480, 0.0
      %v4513 = vmax.f32 %v4481, 0.0
      %v4514 = vmax.f32 %v4482, 0.0
      %v4515 = vmax.f32 %v4483, 0.0
      %v4516 = vmax.f32 %v4484, 0.0
      %4517 = vst [vmem:[%s197] sm:$0xff] %v4485
      %4518 = vst [vmem:[%s197 + $0x8] sm:$0xff] %v4486
      %4519 = vst [vmem:[%s197 + $0x10] sm:$0xff] %v4487
      %4520 = vst [vmem:[%s197 + $0x18] sm:$0xff] %v4488
      %4521 = vst [vmem:[%s197 + $0x20] sm:$0xff] %v4489
      %4522 = vst [vmem:[%s197 + $0x28] sm:$0xff] %v4490
      %4523 = vst [vmem:[%s197 + $0x30] sm:$0xff] %v4491
      %4524 = vst [vmem:[%s197 + $0x38] sm:$0xff] %v4492
      %4525 = vst [vmem:[%s197 + $0x40] sm:$0xff] %v4493
      %4526 = vst [vmem:[%s197 + $0x48] sm:$0xff] %v4494
      %4527 = vst [vmem:[%s197 + $0x50] sm:$0xff] %v4495
      %4528 = vst [vmem:[%s197 + $0x58] sm:$0xff] %v4496
      %4529 = vst [vmem:[%s197 + $0x60] sm:$0xff] %v4497
      %4530 = vst [vmem:[%s197 + $0x68] sm:$0xff] %v4498
      %4531 = vst [vmem:[%s197 + $0x70] sm:$0xff] %v4499
      %4532 = vst [vmem:[%s197 + $0x78] sm:$0xff] %v4500
      %4533 = vst [vmem:[%s197 + $0x80] sm:$0xff] %v4501
      %4534 = vst [vmem:[%s197 + $0x88] sm:$0xff] %v4502
      %4535 = vst [vmem:[%s197 + $0x90] sm:$0xff] %v4503
      %4536 = vst [vmem:[%s197 + $0x98] sm:$0xff] %v4504
      %4537 = vst [vmem:[%s197 + $0xa0] sm:$0xff] %v4505
      %4538 = vst [vmem:[%s197 + $0xa8] sm:$0xff] %v4506
      %4539 = vst [vmem:[%s197 + $0xb0] sm:$0xff] %v4507
      %4540 = vst [vmem:[%s197 + $0xb8] sm:$0xff] %v4508
      %4541 = vst [vmem:[%s197 + $0xc0] sm:$0xff] %v4509
      %4542 = vst [vmem:[%s197 + $0xc8] sm:$0xff] %v4510
      %4543 = vst [vmem:[%s197 + $0xd0] sm:$0xff] %v4511
      %4544 = vst [vmem:[%s197 + $0xd8] sm:$0xff] %v4512
      %4545 = vst [vmem:[%s197 + $0xe0] sm:$0xff] %v4513
      %4546 = vst [vmem:[%s197 + $0xe8] sm:$0xff] %v4514
      %4547 = vst [vmem:[%s197 + $0xf0] sm:$0xff] %v4515
      %4548 = vst [vmem:[%s197 + $0xf8] sm:$0xff] %v4516
      %p4549 = scmp.lt.s32.totalorder %s15, 1
      %s4550 = scalar_select %p4549, %s15, 1
      %s4551 = smul.addr %s4550, 32
      %s4552 = smul.addr %s4551, 8
      %s4553 = scalar_lea.vmem %s4, %s4552
      // Predicated region
      $region37: #{basic_block_forward.1} parent=35 // pred_check
        %p4554 = pneg %p122
      $region38: #{basic_block_forward.1} parent=35 // pred_check_branch
        %4556 = sbr.rel (%p4554) target = $region40
      $region39: #{basic_block_forward.1} parent=35 // pred_region
        _
      $region40: #{basic_block_forward.1} parent=35 // pred_fallthru
        _
    $region36: #{basic_block_forward.1} parent=5 // pred_fallthru
      _
    %p4557 = scmp.le.s32.totalorder 2, %s10
    // Predicated region
    $region41: #{basic_block_forward.1} parent=5 // pred_check
      %p4558 = pneg %p4557
    $region42: #{basic_block_forward.1} parent=5 // pred_check_branch
      %4560 = sbr.rel (%p4558) target = $region44
    $region43: #{basic_block_forward.1} parent=5 // pred_region
      %s4561 = ssub.s32 %s10, 2
      // Predicated region
      $region45: #{basic_block_forward.1} parent=43 // pred_check
        %p4562 = pneg %p128
      $region46: #{basic_block_forward.1} parent=43 // pred_check_branch
        %4564 = sbr.rel (%p4562) target = $region48
      $region47: #{basic_block_forward.1} parent=43 // pred_region
        %p4565 = scmp.lt.s32.totalorder %s16, 1
        %s4566 = scalar_select %p4565, %s16, 1
        %s4567 = smul.addr %s4566, 32
        %s4568 = smul.addr %s4567, 8
        %s4569 = scalar_lea.vmem %s4, %s4568
      $region48: #{basic_block_forward.1} parent=43 // pred_fallthru
        _
    $region44: #{basic_block_forward.1} parent=5 // pred_fallthru
      _
  $region6: #{basic_block_forward.1} parent=0 // loop_footer
    %s14 = sadd.s32 1, %s10
  $region7: #{basic_block_forward.1} parent=0 // loop_footer_branch
    %9 = sbr.rel target = $region3
  $region8: #{basic_block_forward.1} parent=0 // loop_exit
    _

</llo_original>
